<compile_context>
chip_gen: v7x
topology: tpu7x:2x2x1
jax: 0.10.0
libtpu: 0.0.40
codegen_flags: <defaults>
</compile_context>

<pallas_src>
import functools
import math

import jax
import jax.numpy as jnp
from jax import lax
from jax.experimental import pallas as pl
from jax.experimental.pallas import tpu as pltpu

# GPyTorch defaults: raw_lengthscale / raw_outputscale init to 0 and pass
# through a softplus Positive() constraint  ->  softplus(0) = ln(2).
_LS_PSI = math.log(2.0)
_OS_PSI = math.log(2.0)
_LS_RHO = math.log(2.0)
_OS_RHO = math.log(2.0)
_C_PSI = -0.5 / (_LS_PSI * _LS_PSI)   # exp(c * (x - t)^2)
_C_RHO = -0.5 / (_LS_RHO * _LS_RHO)
_EPS = 1e-8

# Packed-weight layout: (row_start, cout, cin) for Conv1d(cin->cout, k=5).
# Row starts are multiples of 16 so bf16 sublane tiles stay aligned.
_CNN_LAYERS = ((0, 16, 3), (16, 32, 16), (48, 16, 32), (64, 2, 16))
_W_ROWS = 80     # 66 used rows padded up (multiple of 16 for bf16 tiling)
_W_COLS = 160    # max 5*cin


def _round_up(x, m):
    return ((x + m - 1) // m) * m


# ----------------------------------------------------------------------------
# Fused kernel: set encoder -> 4-layer CNN -> psi_rho decoder, B_BLK batches
# per grid step laid out as one (channels, B_BLK * T_pad) lane slab.
# ----------------------------------------------------------------------------
def _fused_kernel(t_ref, mask_ref, xc_ref, phi_ref, xt_ref, w_ref, b_ref,
                  out_ref, *, t_pad, b_blk):
    T = t_pad
    L = b_blk * T
    bf16 = jnp.bfloat16

    t_row = t_ref[...]           # (1, T)  latent grid (zero tail)
    mask = mask_ref[...]         # (1, L)  1 on real columns, 0 on padded tail

    # ---- set encoder (per batch element): rep_b = [t ; h0 ; h1/(h0+eps)] ----
    # phi already carries the psi outputscale (folded on host).
    reps = []
    for b in range(b_blk):
        d = xc_ref[b] - t_row                                    # (Nc, T)
        k_psi = jnp.exp(_C_PSI * d * d)                          # (Nc, T)
        h = jnp.dot(phi_ref[b].astype(bf16), k_psi.astype(bf16),
                    preferred_element_type=jnp.float32)          # (2, T)
        h0 = h[0:1, :]
        h1 = h[1:2, :] / (h0 + _EPS)
        reps.append(jnp.concatenate([t_row, h0, h1], axis=0))    # (3, T)
    rep = jnp.concatenate(reps, axis=-1) * mask                  # (3, L)

    # ---- CNN: 4 x Conv1d(k=5, stride=1, pad=2), one im2col matmul each -----
    # Taps come from circular pltpu.roll (XLU slot) instead of lane-misaligned
    # slices of a padded scratch. The per-layer tail mask keeps >= 2 zero
    # columns at the end of every batch slab, so the circular wrap (within and
    # across batch slabs) behaves exactly like the reference's zero padding.
    def conv(x, row0, cout):
        cin = x.shape[0]
        cols = jnp.concatenate(
            [x if tap == 2 else pltpu.roll(x, (2 - tap) % L, axis=1)
             for tap in range(5)], axis=0).astype(bf16)          # (5*cin, L)
        w = w_ref[row0:row0 + cout, 0:5 * cin]                   # (cout,5*cin) bf16
        bias = b_ref[row0:row0 + cout, :]                        # (cout, 1)    f32
        return jnp.dot(w, cols, preferred_element_type=jnp.float32) + bias

    (r1, c1, _), (r2, c2, _), (r3, c3, _), (r4, c4, _) = _CNN_LAYERS
    a = jnp.maximum(conv(rep, r1, c1), 0.0) * mask               # (16, L)
    a = jnp.maximum(conv(a, r2, c2), 0.0) * mask                 # (32, L)
    a = jnp.maximum(conv(a, r3, c3), 0.0) * mask                 # (16, L)
    f = conv(a, r4, c4)                                          # (2, L)

    # ---- decoder: [mu ; sigma] = psi_rho(xt, t) @ [f_mu ; softplus(f_sig)] --
    f_mu = f[0:1, :]
    f_sg = f[1:2, :]
    sp = jnp.maximum(f_sg, 0.0) + jnp.log1p(jnp.exp(-jnp.abs(f_sg)))
    # Fold the rho outputscale into the tiny (2, L) operand, not (Nt, T) kr.
    g = (jnp.concatenate([f_mu, sp], axis=0) * (mask * _OS_RHO)).astype(bf16)

    for b in range(b_blk):
        dr = xt_ref[b] - t_row                                   # (Nt_pad, T)
        kr = jnp.exp(_C_RHO * dr * dr).astype(bf16)              # (Nt_pad, T)
        g_b = g[:, b * T:(b + 1) * T]                            # (2, T)
        out_ref[b] = lax.dot_general(                            # (2, Nt_pad)
            g_b, kr, dimension_numbers=(((1,), (1,)), ((), ())),
            preferred_element_type=jnp.float32)


# ----------------------------------------------------------------------------
# Parameters: xavier-uniform Conv1d weights (as in the reference), zero biases,
# stored in im2col layout w[cout, tap*cin + ci] = W_conv[cout, ci, tap] and
# packed into one bf16 weight slab + one f32 bias column.
# ----------------------------------------------------------------------------
def init_params(key):
    w_packed = jnp.zeros((_W_ROWS, _W_COLS), jnp.float32)
    b_packed = jnp.zeros((_W_ROWS, 1), jnp.float32)   # zeros_ init, kept f32
    for row0, cout, cin in _CNN_LAYERS:
        key, sub = jax.random.split(key)
        fan_in, fan_out = cin * 5, cout * 5
        bound = math.sqrt(6.0 / (fan_in + fan_out))
        w = jax.random.uniform(sub, (cout, cin, 5), jnp.float32, -bound, bound)
        w_im2col = jnp.transpose(w, (0, 2, 1)).reshape(cout, 5 * cin)
        w_packed = w_packed.at[row0:row0 + cout, :5 * cin].set(w_im2col)
    return {"w": w_packed.astype(jnp.bfloat16), "b": b_packed}


# ----------------------------------------------------------------------------
# Jitted device-side part (everything after the host sync for num_t).
# ----------------------------------------------------------------------------
@functools.partial(jax.jit,
                   static_argnames=("num_t", "t_pad", "nt_pad", "b_pad", "b_blk"))
def _forward_impl(xc, yc, xt, params, lower, upper, *,
                  num_t, t_pad, nt_pad, b_pad, b_blk):
    f32 = jnp.float32
    B, Nc, _ = xc.shape
    Nt = xt.shape[1]
    L = b_blk * t_pad

    xc = xc.astype(f32)
    yc = yc.astype(f32)
    xt = xt.astype(f32)

    # Latent grid t (shared across the batch, as in the reference); zero tail.
    t_real = jnp.linspace(lower, upper, num_t).astype(f32)
    t = jnp.zeros((1, t_pad), f32).at[0, :num_t].set(t_real)

    # Real-column mask, tiled over the B_BLK batch regions of the lane slab.
    mask = jnp.tile((jnp.arange(t_pad) < num_t).astype(f32)[None, :], (1, b_blk))

    # Pad Nt to a lane-dense multiple of 128 (sentinel targets, sliced off).
    if nt_pad > Nt:
        xt = jnp.concatenate(
            [xt, jnp.broadcast_to(xt[:, :1, :], (B, nt_pad - Nt, 1))], axis=1)

    # PowerFunction(K=1): phi(yc) = [1, yc]; psi outputscale folded in here.
    phi = _OS_PSI * jnp.concatenate(
        [jnp.ones((B, 1, Nc), f32), jnp.transpose(yc, (0, 2, 1))], axis=1)

    # Pad batch up to a multiple of b_blk (replicate element 0, sliced off).
    if b_pad > B:
        pad = b_pad - B
        rep0 = lambda a: jnp.concatenate(
            [a, jnp.broadcast_to(a[:1], (pad,) + a.shape[1:])], axis=0)
        xc, xt, phi = rep0(xc), rep0(xt), rep0(phi)

    kernel = functools.partial(_fused_kernel, t_pad=t_pad, b_blk=b_blk)
    out = pl.pallas_call(
        kernel,
        out_shape=jax.ShapeDtypeStruct((b_pad, 2, nt_pad), f32),
        grid=(b_pad // b_blk,),
        in_specs=[
            pl.BlockSpec((1, t_pad), lambda i: (0, 0)),
            pl.BlockSpec((1, L), lambda i: (0, 0)),
            pl.BlockSpec((b_blk, Nc, 1), lambda i: (i, 0, 0)),
            pl.BlockSpec((b_blk, 2, Nc), lambda i: (i, 0, 0)),
            pl.BlockSpec((b_blk, nt_pad, 1), lambda i: (i, 0, 0)),
            pl.BlockSpec((_W_ROWS, _W_COLS), lambda i: (0, 0)),
            pl.BlockSpec((_W_ROWS, 1), lambda i: (0, 0)),
        ],
        out_specs=pl.BlockSpec((b_blk, 2, nt_pad), lambda i: (i, 0, 0)),
        compiler_params=pltpu.CompilerParams(
            dimension_semantics=("parallel",),
            vmem_limit_bytes=32 * 1024 * 1024),
    )(t, mask, xc, phi, xt, params["w"], params["b"])

    out = out[:B, :, :Nt]                             # drop batch / Nt padding
    mu = jnp.transpose(out[:, 0:1, :], (0, 2, 1))     # (B, Nt, 1)
    sigma = jnp.transpose(out[:, 1:2, :], (0, 2, 1))  # (B, Nt, 1)
    return mu, sigma


# ----------------------------------------------------------------------------
# Forward wrapper.
# ----------------------------------------------------------------------------
def convcnp1d_forward(xc, yc, xt, params, density=16, b_blk=None):
    # xc, yc : (B, Nc, 1)    xt : (B, Nt, 1)
    B = xc.shape[0]
    Nt = xt.shape[1]

    # Matches the PyTorch reference (`.item()` on min/max): num_t is data
    # dependent, so this host sync + per-bucket recompile is inherent to the
    # module's semantics. Everything downstream is jitted with static shapes.
    tmp = jnp.concatenate([xc, xt], axis=1)
    lower = float(jnp.min(tmp))
    upper = float(jnp.max(tmp))
    num_t = max(int(density * (upper - lower)), 1)   # guard degenerate range

    # Lane-align the latent grid; the +2 guarantees >= 2 zero tail columns so
    # the circular pltpu.roll taps see exact zero conv padding at both edges.
    t_pad = _round_up(num_t + 2, 128)
    nt_pad = _round_up(Nt, 128)
    if b_blk is None:
        # Amortize per-step overhead while keeping >= 2 grid steps (v7x 2 TCs).
        b_blk = 1 if B <= 1 else max(1, min(8, B // 2))
    b_pad = _round_up(B, b_blk)

    return _forward_impl(xc, yc, xt, params,
                         jnp.asarray(lower, jnp.float32),
                         jnp.asarray(upper, jnp.float32),
                         num_t=num_t, t_pad=t_pad, nt_pad=nt_pad,
                         b_pad=b_pad, b_blk=b_blk)


if __name__ == "__main__":
    key = jax.random.PRNGKey(0)
    k1, k2, k3, k4 = jax.random.split(key, 4)

    B, Nc, Nt = 8, 8, 8
    xc = jax.random.uniform(k1, (B, Nc, 1), jnp.float32, -2.0, 2.0)
    yc = jnp.sin(xc) + 0.1 * jax.random.normal(k2, (B, Nc, 1), dtype=jnp.float32)
    xt = jax.random.uniform(k3, (B, Nt, 1), jnp.float32, -2.0, 2.0)

    params = init_params(k4)

    # TODO(synk): torch.distributions.MultivariateNormal has no Pallas
    # equivalent; we return (mu, sigma) where scale_tril = diag_embed(sigma).
    mu, sigma = convcnp1d_forward(xc, yc, xt, params, density=16)
    jax.block_until_ready((mu, sigma))
    assert mu.shape == (B, Nt, 1) and sigma.shape == (B, Nt, 1)
    assert bool(jnp.all(jnp.isfinite(mu))) and bool(jnp.all(jnp.isfinite(sigma)))
    print("KERNEL_OK")
</pallas_src>

<mosaic_0001>
module attributes {stable_mosaic.version = 11 : i64} {
  func.func @_fused_kernel(%arg0: i32, %arg1: memref<1x128xf32, #tpu.memory_space<vmem>>, %arg2: memref<1x512xf32, #tpu.memory_space<vmem>>, %arg3: memref<4x8x1xf32, #tpu.memory_space<vmem>>, %arg4: memref<4x2x8xf32, #tpu.memory_space<vmem>>, %arg5: memref<4x128x1xf32, #tpu.memory_space<vmem>>, %arg6: memref<80x160xbf16, #tpu.memory_space<vmem>>, %arg7: memref<80x1xf32, #tpu.memory_space<vmem>>, %arg8: memref<4x2x128xf32, #tpu.memory_space<vmem>>) attributes {dimension_semantics = [#tpu.dimension_semantics<parallel>], iteration_bounds = array<i64: 2>, scalar_prefetch = 0 : i64, scratch_operands = 0 : i64, tpu.core_type = #tpu.core_type<tc>, window_params = [{pipeline_mode = #tpu.pipeline_mode<synchronous>, transform_indices = @transform_0, window_bounds = array<i64: 1, 128>}, {pipeline_mode = #tpu.pipeline_mode<synchronous>, transform_indices = @transform_1, window_bounds = array<i64: 1, 512>}, {transform_indices = @transform_2, window_bounds = array<i64: 4, 8, 1>}, {transform_indices = @transform_3, window_bounds = array<i64: 4, 2, 8>}, {transform_indices = @transform_4, window_bounds = array<i64: 4, 128, 1>}, {pipeline_mode = #tpu.pipeline_mode<synchronous>, transform_indices = @transform_5, window_bounds = array<i64: 80, 160>}, {pipeline_mode = #tpu.pipeline_mode<synchronous>, transform_indices = @transform_6, window_bounds = array<i64: 80, 1>}, {transform_indices = @transform_7, window_bounds = array<i64: 4, 2, 128>}]} {
    %c0 = arith.constant 0 : index
    %c0_0 = arith.constant 0 : index
    %0 = vector.load %arg1[%c0, %c0_0] : memref<1x128xf32, #tpu.memory_space<vmem>>, vector<1x128xf32>
    %c0_1 = arith.constant 0 : index
    %c0_2 = arith.constant 0 : index
    %1 = vector.load %arg2[%c0_1, %c0_2] : memref<1x512xf32, #tpu.memory_space<vmem>>, vector<1x512xf32>
    %c0_3 = arith.constant 0 : index
    %c0_4 = arith.constant 0 : index
    %c0_5 = arith.constant 0 : index
    %2 = vector.load %arg3[%c0_3, %c0_4, %c0_5] : memref<4x8x1xf32, #tpu.memory_space<vmem>>, vector<1x8x1xf32>
    %3 = vector.shape_cast %2 : vector<1x8x1xf32> to vector<8x1xf32>
    %4 = vector.broadcast %3 : vector<8x1xf32> to vector<8x128xf32>
    %5 = vector.broadcast %0 : vector<1x128xf32> to vector<8x128xf32>
    %6 = arith.subf %4, %5 : vector<8x128xf32>
    %cst = arith.constant -1.04068446 : f32
    %7 = vector.broadcast %cst : f32 to vector<8x128xf32>
    %8 = arith.mulf %7, %6 : vector<8x128xf32>
    %9 = arith.mulf %8, %6 : vector<8x128xf32>
    %10 = math.exp %9 : vector<8x128xf32>
    %c0_6 = arith.constant 0 : index
    %c0_7 = arith.constant 0 : index
    %c0_8 = arith.constant 0 : index
    %11 = vector.load %arg4[%c0_6, %c0_7, %c0_8] : memref<4x2x8xf32, #tpu.memory_space<vmem>>, vector<1x2x8xf32>
    %12 = vector.shape_cast %11 : vector<1x2x8xf32> to vector<2x8xf32>
    %13 = arith.truncf %12 : vector<2x8xf32> to vector<2x8xbf16>
    %14 = arith.truncf %10 : vector<8x128xf32> to vector<8x128xbf16>
    %cst_9 = arith.constant dense<0.000000e+00> : vector<2x128xf32>
    %15 = tpu.matmul %13, %14, %cst_9 {dimension_numbers = #tpu.dot_dimension_numbers<[1], [0], [0], [1], [0, 0, 1, 1], [], []>} : vector<2x8xbf16>, vector<8x128xbf16>, vector<2x128xf32> -> vector<2x128xf32>
    %16 = vector.extract_strided_slice %15 {offsets = [0, 0], sizes = [1, 128], strides = [1, 1]} : vector<2x128xf32> to vector<1x128xf32>
    %17 = vector.extract_strided_slice %15 {offsets = [1, 0], sizes = [1, 128], strides = [1, 1]} : vector<2x128xf32> to vector<1x128xf32>
    %cst_10 = arith.constant 9.99999993E-9 : f32
    %18 = vector.broadcast %cst_10 : f32 to vector<1x128xf32>
    %19 = arith.addf %16, %18 : vector<1x128xf32>
    %20 = arith.divf %17, %19 : vector<1x128xf32>
    %21 = tpu.concatenate %0, %16, %20 in 0 : vector<1x128xf32>, vector<1x128xf32>, vector<1x128xf32> -> vector<3x128xf32>
    %c1 = arith.constant 1 : index
    %c0_11 = arith.constant 0 : index
    %c0_12 = arith.constant 0 : index
    %22 = vector.load %arg3[%c1, %c0_11, %c0_12] : memref<4x8x1xf32, #tpu.memory_space<vmem>>, vector<1x8x1xf32>
    %23 = vector.shape_cast %22 : vector<1x8x1xf32> to vector<8x1xf32>
    %24 = vector.broadcast %23 : vector<8x1xf32> to vector<8x128xf32>
    %25 = vector.broadcast %0 : vector<1x128xf32> to vector<8x128xf32>
    %26 = arith.subf %24, %25 : vector<8x128xf32>
    %cst_13 = arith.constant -1.04068446 : f32
    %27 = vector.broadcast %cst_13 : f32 to vector<8x128xf32>
    %28 = arith.mulf %27, %26 : vector<8x128xf32>
    %29 = arith.mulf %28, %26 : vector<8x128xf32>
    %30 = math.exp %29 : vector<8x128xf32>
    %c1_14 = arith.constant 1 : index
    %c0_15 = arith.constant 0 : index
    %c0_16 = arith.constant 0 : index
    %31 = vector.load %arg4[%c1_14, %c0_15, %c0_16] : memref<4x2x8xf32, #tpu.memory_space<vmem>>, vector<1x2x8xf32>
    %32 = vector.shape_cast %31 : vector<1x2x8xf32> to vector<2x8xf32>
    %33 = arith.truncf %32 : vector<2x8xf32> to vector<2x8xbf16>
    %34 = arith.truncf %30 : vector<8x128xf32> to vector<8x128xbf16>
    %cst_17 = arith.constant dense<0.000000e+00> : vector<2x128xf32>
    %35 = tpu.matmul %33, %34, %cst_17 {dimension_numbers = #tpu.dot_dimension_numbers<[1], [0], [0], [1], [0, 0, 1, 1], [], []>} : vector<2x8xbf16>, vector<8x128xbf16>, vector<2x128xf32> -> vector<2x128xf32>
    %36 = vector.extract_strided_slice %35 {offsets = [0, 0], sizes = [1, 128], strides = [1, 1]} : vector<2x128xf32> to vector<1x128xf32>
    %37 = vector.extract_strided_slice %35 {offsets = [1, 0], sizes = [1, 128], strides = [1, 1]} : vector<2x128xf32> to vector<1x128xf32>
    %cst_18 = arith.constant 9.99999993E-9 : f32
    %38 = vector.broadcast %cst_18 : f32 to vector<1x128xf32>
    %39 = arith.addf %36, %38 : vector<1x128xf32>
    %40 = arith.divf %37, %39 : vector<1x128xf32>
    %41 = tpu.concatenate %0, %36, %40 in 0 : vector<1x128xf32>, vector<1x128xf32>, vector<1x128xf32> -> vector<3x128xf32>
    %c2 = arith.constant 2 : index
    %c0_19 = arith.constant 0 : index
    %c0_20 = arith.constant 0 : index
    %42 = vector.load %arg3[%c2, %c0_19, %c0_20] : memref<4x8x1xf32, #tpu.memory_space<vmem>>, vector<1x8x1xf32>
    %43 = vector.shape_cast %42 : vector<1x8x1xf32> to vector<8x1xf32>
    %44 = vector.broadcast %43 : vector<8x1xf32> to vector<8x128xf32>
    %45 = vector.broadcast %0 : vector<1x128xf32> to vector<8x128xf32>
    %46 = arith.subf %44, %45 : vector<8x128xf32>
    %cst_21 = arith.constant -1.04068446 : f32
    %47 = vector.broadcast %cst_21 : f32 to vector<8x128xf32>
    %48 = arith.mulf %47, %46 : vector<8x128xf32>
    %49 = arith.mulf %48, %46 : vector<8x128xf32>
    %50 = math.exp %49 : vector<8x128xf32>
    %c2_22 = arith.constant 2 : index
    %c0_23 = arith.constant 0 : index
    %c0_24 = arith.constant 0 : index
    %51 = vector.load %arg4[%c2_22, %c0_23, %c0_24] : memref<4x2x8xf32, #tpu.memory_space<vmem>>, vector<1x2x8xf32>
    %52 = vector.shape_cast %51 : vector<1x2x8xf32> to vector<2x8xf32>
    %53 = arith.truncf %52 : vector<2x8xf32> to vector<2x8xbf16>
    %54 = arith.truncf %50 : vector<8x128xf32> to vector<8x128xbf16>
    %cst_25 = arith.constant dense<0.000000e+00> : vector<2x128xf32>
    %55 = tpu.matmul %53, %54, %cst_25 {dimension_numbers = #tpu.dot_dimension_numbers<[1], [0], [0], [1], [0, 0, 1, 1], [], []>} : vector<2x8xbf16>, vector<8x128xbf16>, vector<2x128xf32> -> vector<2x128xf32>
    %56 = vector.extract_strided_slice %55 {offsets = [0, 0], sizes = [1, 128], strides = [1, 1]} : vector<2x128xf32> to vector<1x128xf32>
    %57 = vector.extract_strided_slice %55 {offsets = [1, 0], sizes = [1, 128], strides = [1, 1]} : vector<2x128xf32> to vector<1x128xf32>
    %cst_26 = arith.constant 9.99999993E-9 : f32
    %58 = vector.broadcast %cst_26 : f32 to vector<1x128xf32>
    %59 = arith.addf %56, %58 : vector<1x128xf32>
    %60 = arith.divf %57, %59 : vector<1x128xf32>
    %61 = tpu.concatenate %0, %56, %60 in 0 : vector<1x128xf32>, vector<1x128xf32>, vector<1x128xf32> -> vector<3x128xf32>
    %c3 = arith.constant 3 : index
    %c0_27 = arith.constant 0 : index
    %c0_28 = arith.constant 0 : index
    %62 = vector.load %arg3[%c3, %c0_27, %c0_28] : memref<4x8x1xf32, #tpu.memory_space<vmem>>, vector<1x8x1xf32>
    %63 = vector.shape_cast %62 : vector<1x8x1xf32> to vector<8x1xf32>
    %64 = vector.broadcast %63 : vector<8x1xf32> to vector<8x128xf32>
    %65 = vector.broadcast %0 : vector<1x128xf32> to vector<8x128xf32>
    %66 = arith.subf %64, %65 : vector<8x128xf32>
    %cst_29 = arith.constant -1.04068446 : f32
    %67 = vector.broadcast %cst_29 : f32 to vector<8x128xf32>
    %68 = arith.mulf %67, %66 : vector<8x128xf32>
    %69 = arith.mulf %68, %66 : vector<8x128xf32>
    %70 = math.exp %69 : vector<8x128xf32>
    %c3_30 = arith.constant 3 : index
    %c0_31 = arith.constant 0 : index
    %c0_32 = arith.constant 0 : index
    %71 = vector.load %arg4[%c3_30, %c0_31, %c0_32] : memref<4x2x8xf32, #tpu.memory_space<vmem>>, vector<1x2x8xf32>
    %72 = vector.shape_cast %71 : vector<1x2x8xf32> to vector<2x8xf32>
    %73 = arith.truncf %72 : vector<2x8xf32> to vector<2x8xbf16>
    %74 = arith.truncf %70 : vector<8x128xf32> to vector<8x128xbf16>
    %cst_33 = arith.constant dense<0.000000e+00> : vector<2x128xf32>
    %75 = tpu.matmul %73, %74, %cst_33 {dimension_numbers = #tpu.dot_dimension_numbers<[1], [0], [0], [1], [0, 0, 1, 1], [], []>} : vector<2x8xbf16>, vector<8x128xbf16>, vector<2x128xf32> -> vector<2x128xf32>
    %76 = vector.extract_strided_slice %75 {offsets = [0, 0], sizes = [1, 128], strides = [1, 1]} : vector<2x128xf32> to vector<1x128xf32>
    %77 = vector.extract_strided_slice %75 {offsets = [1, 0], sizes = [1, 128], strides = [1, 1]} : vector<2x128xf32> to vector<1x128xf32>
    %cst_34 = arith.constant 9.99999993E-9 : f32
    %78 = vector.broadcast %cst_34 : f32 to vector<1x128xf32>
    %79 = arith.addf %76, %78 : vector<1x128xf32>
    %80 = arith.divf %77, %79 : vector<1x128xf32>
    %81 = tpu.concatenate %0, %76, %80 in 0 : vector<1x128xf32>, vector<1x128xf32>, vector<1x128xf32> -> vector<3x128xf32>
    %82 = tpu.concatenate %21, %41, %61, %81 in 1 : vector<3x128xf32>, vector<3x128xf32>, vector<3x128xf32>, vector<3x128xf32> -> vector<3x512xf32>
    %83 = vector.broadcast %1 : vector<1x512xf32> to vector<3x512xf32>
    %84 = arith.mulf %82, %83 : vector<3x512xf32>
    %c2_i32 = arith.constant 2 : i32
    %85 = tpu.dynamic_rotate %84 by %c2_i32 dim 1 : vector<3x512xf32>, i32 -> vector<3x512xf32>
    %c1_i32 = arith.constant 1 : i32
    %86 = tpu.dynamic_rotate %84 by %c1_i32 dim 1 : vector<3x512xf32>, i32 -> vector<3x512xf32>
    %c511_i32 = arith.constant 511 : i32
    %87 = tpu.dynamic_rotate %84 by %c511_i32 dim 1 : vector<3x512xf32>, i32 -> vector<3x512xf32>
    %c510_i32 = arith.constant 510 : i32
    %88 = tpu.dynamic_rotate %84 by %c510_i32 dim 1 : vector<3x512xf32>, i32 -> vector<3x512xf32>
    %89 = tpu.concatenate %85, %86, %84, %87, %88 in 0 : vector<3x512xf32>, vector<3x512xf32>, vector<3x512xf32>, vector<3x512xf32>, vector<3x512xf32> -> vector<15x512xf32>
    %90 = arith.truncf %89 : vector<15x512xf32> to vector<15x512xbf16>
    %c0_35 = arith.constant 0 : index
    %c0_36 = arith.constant 0 : index
    %91 = vector.load %arg6[%c0_35, %c0_36] : memref<80x160xbf16, #tpu.memory_space<vmem>>, vector<16x15xbf16>
    %c0_37 = arith.constant 0 : index
    %c0_38 = arith.constant 0 : index
    %92 = vector.load %arg7[%c0_37, %c0_38] : memref<80x1xf32, #tpu.memory_space<vmem>>, vector<16x1xf32>
    %cst_39 = arith.constant dense<0.000000e+00> : vector<16x512xf32>
    %93 = tpu.matmul %91, %90, %cst_39 {dimension_numbers = #tpu.dot_dimension_numbers<[1], [0], [0], [1], [0, 0, 1, 1], [], []>} : vector<16x15xbf16>, vector<15x512xbf16>, vector<16x512xf32> -> vector<16x512xf32>
    %94 = vector.broadcast %92 : vector<16x1xf32> to vector<16x512xf32>
    %95 = arith.addf %93, %94 : vector<16x512xf32>
    %cst_40 = arith.constant 0.000000e+00 : f32
    %96 = vector.broadcast %cst_40 : f32 to vector<16x512xf32>
    %97 = arith.maximumf %95, %96 : vector<16x512xf32>
    %98 = vector.broadcast %1 : vector<1x512xf32> to vector<16x512xf32>
    %99 = arith.mulf %97, %98 : vector<16x512xf32>
    %c2_i32_41 = arith.constant 2 : i32
    %100 = tpu.dynamic_rotate %99 by %c2_i32_41 dim 1 : vector<16x512xf32>, i32 -> vector<16x512xf32>
    %c1_i32_42 = arith.constant 1 : i32
    %101 = tpu.dynamic_rotate %99 by %c1_i32_42 dim 1 : vector<16x512xf32>, i32 -> vector<16x512xf32>
    %c511_i32_43 = arith.constant 511 : i32
    %102 = tpu.dynamic_rotate %99 by %c511_i32_43 dim 1 : vector<16x512xf32>, i32 -> vector<16x512xf32>
    %c510_i32_44 = arith.constant 510 : i32
    %103 = tpu.dynamic_rotate %99 by %c510_i32_44 dim 1 : vector<16x512xf32>, i32 -> vector<16x512xf32>
    %104 = tpu.concatenate %100, %101, %99, %102, %103 in 0 : vector<16x512xf32>, vector<16x512xf32>, vector<16x512xf32>, vector<16x512xf32>, vector<16x512xf32> -> vector<80x512xf32>
    %105 = arith.truncf %104 : vector<80x512xf32> to vector<80x512xbf16>
    %c16 = arith.constant 16 : index
    %c0_45 = arith.constant 0 : index
    %106 = vector.load %arg6[%c16, %c0_45] : memref<80x160xbf16, #tpu.memory_space<vmem>>, vector<32x80xbf16>
    %c16_46 = arith.constant 16 : index
    %c0_47 = arith.constant 0 : index
    %107 = vector.load %arg7[%c16_46, %c0_47] : memref<80x1xf32, #tpu.memory_space<vmem>>, vector<32x1xf32>
    %cst_48 = arith.constant dense<0.000000e+00> : vector<32x512xf32>
    %108 = tpu.matmul %106, %105, %cst_48 {dimension_numbers = #tpu.dot_dimension_numbers<[1], [0], [0], [1], [0, 0, 1, 1], [], []>} : vector<32x80xbf16>, vector<80x512xbf16>, vector<32x512xf32> -> vector<32x512xf32>
    %109 = vector.broadcast %107 : vector<32x1xf32> to vector<32x512xf32>
    %110 = arith.addf %108, %109 : vector<32x512xf32>
    %cst_49 = arith.constant 0.000000e+00 : f32
    %111 = vector.broadcast %cst_49 : f32 to vector<32x512xf32>
    %112 = arith.maximumf %110, %111 : vector<32x512xf32>
    %113 = vector.broadcast %1 : vector<1x512xf32> to vector<32x512xf32>
    %114 = arith.mulf %112, %113 : vector<32x512xf32>
    %c2_i32_50 = arith.constant 2 : i32
    %115 = tpu.dynamic_rotate %114 by %c2_i32_50 dim 1 : vector<32x512xf32>, i32 -> vector<32x512xf32>
    %c1_i32_51 = arith.constant 1 : i32
    %116 = tpu.dynamic_rotate %114 by %c1_i32_51 dim 1 : vector<32x512xf32>, i32 -> vector<32x512xf32>
    %c511_i32_52 = arith.constant 511 : i32
    %117 = tpu.dynamic_rotate %114 by %c511_i32_52 dim 1 : vector<32x512xf32>, i32 -> vector<32x512xf32>
    %c510_i32_53 = arith.constant 510 : i32
    %118 = tpu.dynamic_rotate %114 by %c510_i32_53 dim 1 : vector<32x512xf32>, i32 -> vector<32x512xf32>
    %119 = tpu.concatenate %115, %116, %114, %117, %118 in 0 : vector<32x512xf32>, vector<32x512xf32>, vector<32x512xf32>, vector<32x512xf32>, vector<32x512xf32> -> vector<160x512xf32>
    %120 = arith.truncf %119 : vector<160x512xf32> to vector<160x512xbf16>
    %c48 = arith.constant 48 : index
    %c0_54 = arith.constant 0 : index
    %121 = vector.load %arg6[%c48, %c0_54] : memref<80x160xbf16, #tpu.memory_space<vmem>>, vector<16x160xbf16>
    %c48_55 = arith.constant 48 : index
    %c0_56 = arith.constant 0 : index
    %122 = vector.load %arg7[%c48_55, %c0_56] : memref<80x1xf32, #tpu.memory_space<vmem>>, vector<16x1xf32>
    %cst_57 = arith.constant dense<0.000000e+00> : vector<16x512xf32>
    %123 = tpu.matmul %121, %120, %cst_57 {dimension_numbers = #tpu.dot_dimension_numbers<[1], [0], [0], [1], [0, 0, 1, 1], [], []>} : vector<16x160xbf16>, vector<160x512xbf16>, vector<16x512xf32> -> vector<16x512xf32>
    %124 = vector.broadcast %122 : vector<16x1xf32> to vector<16x512xf32>
    %125 = arith.addf %123, %124 : vector<16x512xf32>
    %cst_58 = arith.constant 0.000000e+00 : f32
    %126 = vector.broadcast %cst_58 : f32 to vector<16x512xf32>
    %127 = arith.maximumf %125, %126 : vector<16x512xf32>
    %128 = vector.broadcast %1 : vector<1x512xf32> to vector<16x512xf32>
    %129 = arith.mulf %127, %128 : vector<16x512xf32>
    %c2_i32_59 = arith.constant 2 : i32
    %130 = tpu.dynamic_rotate %129 by %c2_i32_59 dim 1 : vector<16x512xf32>, i32 -> vector<16x512xf32>
    %c1_i32_60 = arith.constant 1 : i32
    %131 = tpu.dynamic_rotate %129 by %c1_i32_60 dim 1 : vector<16x512xf32>, i32 -> vector<16x512xf32>
    %c511_i32_61 = arith.constant 511 : i32
    %132 = tpu.dynamic_rotate %129 by %c511_i32_61 dim 1 : vector<16x512xf32>, i32 -> vector<16x512xf32>
    %c510_i32_62 = arith.constant 510 : i32
    %133 = tpu.dynamic_rotate %129 by %c510_i32_62 dim 1 : vector<16x512xf32>, i32 -> vector<16x512xf32>
    %134 = tpu.concatenate %130, %131, %129, %132, %133 in 0 : vector<16x512xf32>, vector<16x512xf32>, vector<16x512xf32>, vector<16x512xf32>, vector<16x512xf32> -> vector<80x512xf32>
    %135 = arith.truncf %134 : vector<80x512xf32> to vector<80x512xbf16>
    %c64 = arith.constant 64 : index
    %c0_63 = arith.constant 0 : index
    %136 = vector.load %arg6[%c64, %c0_63] : memref<80x160xbf16, #tpu.memory_space<vmem>>, vector<2x80xbf16>
    %c64_64 = arith.constant 64 : index
    %c0_65 = arith.constant 0 : index
    %137 = vector.load %arg7[%c64_64, %c0_65] : memref<80x1xf32, #tpu.memory_space<vmem>>, vector<2x1xf32>
    %cst_66 = arith.constant dense<0.000000e+00> : vector<2x512xf32>
    %138 = tpu.matmul %136, %135, %cst_66 {dimension_numbers = #tpu.dot_dimension_numbers<[1], [0], [0], [1], [0, 0, 1, 1], [], []>} : vector<2x80xbf16>, vector<80x512xbf16>, vector<2x512xf32> -> vector<2x512xf32>
    %139 = vector.broadcast %137 : vector<2x1xf32> to vector<2x512xf32>
    %140 = arith.addf %138, %139 : vector<2x512xf32>
    %141 = vector.extract_strided_slice %140 {offsets = [0, 0], sizes = [1, 512], strides = [1, 1]} : vector<2x512xf32> to vector<1x512xf32>
    %142 = vector.extract_strided_slice %140 {offsets = [1, 0], sizes = [1, 512], strides = [1, 1]} : vector<2x512xf32> to vector<1x512xf32>
    %cst_67 = arith.constant 0.000000e+00 : f32
    %143 = vector.broadcast %cst_67 : f32 to vector<1x512xf32>
    %144 = arith.maximumf %142, %143 : vector<1x512xf32>
    %145 = math.absf %142 : vector<1x512xf32>
    %cst_68 = arith.constant 0.000000e+00 : f32
    %146 = vector.broadcast %cst_68 : f32 to vector<1x512xf32>
    %147 = arith.subf %146, %145 : vector<1x512xf32>
    %148 = math.exp %147 : vector<1x512xf32>
    %149 = math.log1p %148 : vector<1x512xf32>
    %150 = arith.addf %144, %149 : vector<1x512xf32>
    %151 = tpu.concatenate %141, %150 in 0 : vector<1x512xf32>, vector<1x512xf32> -> vector<2x512xf32>
    %cst_69 = arith.constant 0.693147182 : f32
    %152 = vector.broadcast %cst_69 : f32 to vector<1x512xf32>
    %153 = arith.mulf %1, %152 : vector<1x512xf32>
    %154 = vector.broadcast %153 : vector<1x512xf32> to vector<2x512xf32>
    %155 = arith.mulf %151, %154 : vector<2x512xf32>
    %156 = arith.truncf %155 : vector<2x512xf32> to vector<2x512xbf16>
    %c0_70 = arith.constant 0 : index
    %c0_71 = arith.constant 0 : index
    %c0_72 = arith.constant 0 : index
    %157 = vector.load %arg5[%c0_70, %c0_71, %c0_72] : memref<4x128x1xf32, #tpu.memory_space<vmem>>, vector<1x128x1xf32>
    %158 = vector.shape_cast %157 : vector<1x128x1xf32> to vector<128x1xf32>
    %159 = vector.broadcast %158 : vector<128x1xf32> to vector<128x128xf32>
    %160 = vector.broadcast %0 : vector<1x128xf32> to vector<128x128xf32>
    %161 = arith.subf %159, %160 : vector<128x128xf32>
    %cst_73 = arith.constant -1.04068446 : f32
    %162 = vector.broadcast %cst_73 : f32 to vector<128x128xf32>
    %163 = arith.mulf %162, %161 : vector<128x128xf32>
    %164 = arith.mulf %163, %161 : vector<128x128xf32>
    %165 = math.exp %164 : vector<128x128xf32>
    %166 = arith.truncf %165 : vector<128x128xf32> to vector<128x128xbf16>
    %167 = vector.extract_strided_slice %156 {offsets = [0, 0], sizes = [2, 128], strides = [1, 1]} : vector<2x512xbf16> to vector<2x128xbf16>
    %cst_74 = arith.constant dense<0.000000e+00> : vector<2x128xf32>
    %168 = tpu.matmul %167, %166, %cst_74 {dimension_numbers = #tpu.dot_dimension_numbers<[1], [1], [0], [0], [0, 0, 1, 0], [], []>} : vector<2x128xbf16>, vector<128x128xbf16>, vector<2x128xf32> -> vector<2x128xf32>
    %c0_75 = arith.constant 0 : index
    %c0_76 = arith.constant 0 : index
    %c0_77 = arith.constant 0 : index
    %169 = vector.load %arg8[%c0_75, %c0_76, %c0_77] : memref<4x2x128xf32, #tpu.memory_space<vmem>>, vector<1x2x128xf32>
    %170 = vector.shape_cast %169 : vector<1x2x128xf32> to vector<2x128xf32>
    %171 = vector.shape_cast %168 : vector<2x128xf32> to vector<1x2x128xf32>
    tpu.vector_store %arg8[%c0_75, %c0_76, %c0_77], %171 {strides = array<i32>} : memref<4x2x128xf32, #tpu.memory_space<vmem>>, vector<1x2x128xf32>,
    %c1_78 = arith.constant 1 : index
    %c0_79 = arith.constant 0 : index
    %c0_80 = arith.constant 0 : index
    %172 = vector.load %arg5[%c1_78, %c0_79, %c0_80] : memref<4x128x1xf32, #tpu.memory_space<vmem>>, vector<1x128x1xf32>
    %173 = vector.shape_cast %172 : vector<1x128x1xf32> to vector<128x1xf32>
    %174 = vector.broadcast %173 : vector<128x1xf32> to vector<128x128xf32>
    %175 = vector.broadcast %0 : vector<1x128xf32> to vector<128x128xf32>
    %176 = arith.subf %174, %175 : vector<128x128xf32>
    %cst_81 = arith.constant -1.04068446 : f32
    %177 = vector.broadcast %cst_81 : f32 to vector<128x128xf32>
    %178 = arith.mulf %177, %176 : vector<128x128xf32>
    %179 = arith.mulf %178, %176 : vector<128x128xf32>
    %180 = math.exp %179 : vector<128x128xf32>
    %181 = arith.truncf %180 : vector<128x128xf32> to vector<128x128xbf16>
    %182 = vector.extract_strided_slice %156 {offsets = [0, 128], sizes = [2, 128], strides = [1, 1]} : vector<2x512xbf16> to vector<2x128xbf16>
    %cst_82 = arith.constant dense<0.000000e+00> : vector<2x128xf32>
    %183 = tpu.matmul %182, %181, %cst_82 {dimension_numbers = #tpu.dot_dimension_numbers<[1], [1], [0], [0], [0, 0, 1, 0], [], []>} : vector<2x128xbf16>, vector<128x128xbf16>, vector<2x128xf32> -> vector<2x128xf32>
    %c1_83 = arith.constant 1 : index
    %c0_84 = arith.constant 0 : index
    %c0_85 = arith.constant 0 : index
    %184 = vector.load %arg8[%c1_83, %c0_84, %c0_85] : memref<4x2x128xf32, #tpu.memory_space<vmem>>, vector<1x2x128xf32>
    %185 = vector.shape_cast %184 : vector<1x2x128xf32> to vector<2x128xf32>
    %186 = vector.shape_cast %183 : vector<2x128xf32> to vector<1x2x128xf32>
    tpu.vector_store %arg8[%c1_83, %c0_84, %c0_85], %186 {strides = array<i32>} : memref<4x2x128xf32, #tpu.memory_space<vmem>>, vector<1x2x128xf32>,
    %c2_86 = arith.constant 2 : index
    %c0_87 = arith.constant 0 : index
    %c0_88 = arith.constant 0 : index
    %187 = vector.load %arg5[%c2_86, %c0_87, %c0_88] : memref<4x128x1xf32, #tpu.memory_space<vmem>>, vector<1x128x1xf32>
    %188 = vector.shape_cast %187 : vector<1x128x1xf32> to vector<128x1xf32>
    %189 = vector.broadcast %188 : vector<128x1xf32> to vector<128x128xf32>
    %190 = vector.broadcast %0 : vector<1x128xf32> to vector<128x128xf32>
    %191 = arith.subf %189, %190 : vector<128x128xf32>
    %cst_89 = arith.constant -1.04068446 : f32
    %192 = vector.broadcast %cst_89 : f32 to vector<128x128xf32>
    %193 = arith.mulf %192, %191 : vector<128x128xf32>
    %194 = arith.mulf %193, %191 : vector<128x128xf32>
    %195 = math.exp %194 : vector<128x128xf32>
    %196 = arith.truncf %195 : vector<128x128xf32> to vector<128x128xbf16>
    %197 = vector.extract_strided_slice %156 {offsets = [0, 256], sizes = [2, 128], strides = [1, 1]} : vector<2x512xbf16> to vector<2x128xbf16>
    %cst_90 = arith.constant dense<0.000000e+00> : vector<2x128xf32>
    %198 = tpu.matmul %197, %196, %cst_90 {dimension_numbers = #tpu.dot_dimension_numbers<[1], [1], [0], [0], [0, 0, 1, 0], [], []>} : vector<2x128xbf16>, vector<128x128xbf16>, vector<2x128xf32> -> vector<2x128xf32>
    %c2_91 = arith.constant 2 : index
    %c0_92 = arith.constant 0 : index
    %c0_93 = arith.constant 0 : index
    %199 = vector.load %arg8[%c2_91, %c0_92, %c0_93] : memref<4x2x128xf32, #tpu.memory_space<vmem>>, vector<1x2x128xf32>
    %200 = vector.shape_cast %199 : vector<1x2x128xf32> to vector<2x128xf32>
    %201 = vector.shape_cast %198 : vector<2x128xf32> to vector<1x2x128xf32>
    tpu.vector_store %arg8[%c2_91, %c0_92, %c0_93], %201 {strides = array<i32>} : memref<4x2x128xf32, #tpu.memory_space<vmem>>, vector<1x2x128xf32>,
    %c3_94 = arith.constant 3 : index
    %c0_95 = arith.constant 0 : index
    %c0_96 = arith.constant 0 : index
    %202 = vector.load %arg5[%c3_94, %c0_95, %c0_96] : memref<4x128x1xf32, #tpu.memory_space<vmem>>, vector<1x128x1xf32>
    %203 = vector.shape_cast %202 : vector<1x128x1xf32> to vector<128x1xf32>
    %204 = vector.broadcast %203 : vector<128x1xf32> to vector<128x128xf32>
    %205 = vector.broadcast %0 : vector<1x128xf32> to vector<128x128xf32>
    %206 = arith.subf %204, %205 : vector<128x128xf32>
    %cst_97 = arith.constant -1.04068446 : f32
    %207 = vector.broadcast %cst_97 : f32 to vector<128x128xf32>
    %208 = arith.mulf %207, %206 : vector<128x128xf32>
    %209 = arith.mulf %208, %206 : vector<128x128xf32>
    %210 = math.exp %209 : vector<128x128xf32>
    %211 = arith.truncf %210 : vector<128x128xf32> to vector<128x128xbf16>
    %212 = vector.extract_strided_slice %156 {offsets = [0, 384], sizes = [2, 128], strides = [1, 1]} : vector<2x512xbf16> to vector<2x128xbf16>
    %cst_98 = arith.constant dense<0.000000e+00> : vector<2x128xf32>
    %213 = tpu.matmul %212, %211, %cst_98 {dimension_numbers = #tpu.dot_dimension_numbers<[1], [1], [0], [0], [0, 0, 1, 0], [], []>} : vector<2x128xbf16>, vector<128x128xbf16>, vector<2x128xf32> -> vector<2x128xf32>
    %c3_99 = arith.constant 3 : index
    %c0_100 = arith.constant 0 : index
    %c0_101 = arith.constant 0 : index
    %214 = vector.load %arg8[%c3_99, %c0_100, %c0_101] : memref<4x2x128xf32, #tpu.memory_space<vmem>>, vector<1x2x128xf32>
    %215 = vector.shape_cast %214 : vector<1x2x128xf32> to vector<2x128xf32>
    %216 = vector.shape_cast %213 : vector<2x128xf32> to vector<1x2x128xf32>
    tpu.vector_store %arg8[%c3_99, %c0_100, %c0_101], %216 {strides = array<i32>} : memref<4x2x128xf32, #tpu.memory_space<vmem>>, vector<1x2x128xf32>,
    return
  }
  func.func @transform_0(%arg0: i32) -> (i32, i32) {
    %c0_i32 = arith.constant 0 : i32
    %c0_i32_0 = arith.constant 0 : i32
    %c0_i32_1 = arith.constant 0 : i32
    return %c0_i32, %c0_i32_0 : i32, i32
  }
  func.func @transform_1(%arg0: i32) -> (i32, i32) {
    %c0_i32 = arith.constant 0 : i32
    %c0_i32_0 = arith.constant 0 : i32
    %c0_i32_1 = arith.constant 0 : i32
    return %c0_i32, %c0_i32_0 : i32, i32
  }
  func.func @transform_2(%arg0: i32) -> (i32, i32, i32) {
    %c0_i32 = arith.constant 0 : i32
    %c0_i32_0 = arith.constant 0 : i32
    %c0_i32_1 = arith.constant 0 : i32
    return %arg0, %c0_i32, %c0_i32_0 : i32, i32, i32
  }
  func.func @transform_3(%arg0: i32) -> (i32, i32, i32) {
    %c0_i32 = arith.constant 0 : i32
    %c0_i32_0 = arith.constant 0 : i32
    %c0_i32_1 = arith.constant 0 : i32
    return %arg0, %c0_i32, %c0_i32_0 : i32, i32, i32
  }
  func.func @transform_4(%arg0: i32) -> (i32, i32, i32) {
    %c0_i32 = arith.constant 0 : i32
    %c0_i32_0 = arith.constant 0 : i32
    %c0_i32_1 = arith.constant 0 : i32
    return %arg0, %c0_i32, %c0_i32_0 : i32, i32, i32
  }
  func.func @transform_5(%arg0: i32) -> (i32, i32) {
    %c0_i32 = arith.constant 0 : i32
    %c0_i32_0 = arith.constant 0 : i32
    %c0_i32_1 = arith.constant 0 : i32
    return %c0_i32, %c0_i32_0 : i32, i32
  }
  func.func @transform_6(%arg0: i32) -> (i32, i32) {
    %c0_i32 = arith.constant 0 : i32
    %c0_i32_0 = arith.constant 0 : i32
    %c0_i32_1 = arith.constant 0 : i32
    return %c0_i32, %c0_i32_0 : i32, i32
  }
  func.func @transform_7(%arg0: i32) -> (i32, i32, i32) {
    %c0_i32 = arith.constant 0 : i32
    %c0_i32_0 = arith.constant 0 : i32
    %c0_i32_1 = arith.constant 0 : i32
    return %arg0, %c0_i32, %c0_i32_0 : i32, i32, i32
  }
}

</mosaic_0001>

<llo_original>
// kernel: _forward_impl.1
$region0: #{_forward_impl.1}
  #allocation0 [shape = 'u32[]', space=smem, size = 0x4, offset = 0x4, fixed_abs, tag = 'smem constant byte address 0x4 - core index']
  #allocation1 [shape = 'u32[144,128]{1,0:T(1,128)}', space=vmem, size = 0x12000, scoped, tag = 'internal scratch']
  %s0 = inlined_call_operand.vmem [shape: f32[1,128], index: 0, kind: input, shape index: {}]
  %s1 = inlined_call_operand.vmem [shape: f32[1,512], index: 1, kind: input, shape index: {}]
  %s2 = inlined_call_operand.vmem [shape: f32[8,8,1], index: 2, kind: input, shape index: {}]
  %s3 = inlined_call_operand.vmem [shape: f32[8,2,8], index: 3, kind: input, shape index: {}]
  %s4 = inlined_call_operand.vmem [shape: f32[8,128,1], index: 4, kind: input, shape index: {}]
  %s5 = inlined_call_operand.vmem [shape: bf16[80,160], index: 5, kind: input, shape index: {}]
  %s6 = inlined_call_operand.vmem [shape: f32[80,1], index: 6, kind: input, shape index: {}]
  %s7 = inlined_call_operand.vmem [shape: f32[8,2,128], index: 7, kind: output, shape index: {}]
  %s8 = sld [smem:[#allocation0]]
  $region61: #{_forward_impl.1} parent=0
    _
  %s10 = ssub.s32 1, %s8
  %s11 = scalar_select 0, %s10, %s8
  loop: start=0, step=1, limit=4
  $region2: #{_forward_impl.1} parent=0 // loop_pre_header
    _
  $region3: #{_forward_impl.1} parent=0 // loop_header
    %s13 = sphi 0, %s17
    %p14 = scmp.ge.s32.totalorder %s13, 4
    %s21 = sphi 0, %s21
    %s23 = sphi 0, %s21
    %s24 = sphi 0, %s23
    %s38 = sphi 0, %s24
    %s42 = sphi 0, %s42
    %s44 = sphi 0, %s42
    %s45 = sphi 0, %s44
    %s59 = sphi 0, %s45
    %s65 = sphi 0, %s67
    %s68 = sphi 0, %s65
    %s69 = sphi 0, %s68
    %s85 = sphi 0, %s69
    %s91 = sphi 0, %s93
    %s94 = sphi 0, %s91
    %s95 = sphi 0, %s94
    %s111 = sphi 0, %s95
    %s117 = sphi 0, %s119
    %s120 = sphi 0, %s117
    %s121 = sphi 0, %s120
    %s137 = sphi 0, %s121
    %s141 = sphi 0, %s141
    %s143 = sphi 0, %s141
    %s144 = sphi 0, %s143
    %s158 = sphi 0, %s144
    %s162 = sphi 0, %s162
    %s164 = sphi 0, %s162
    %s165 = sphi 0, %s164
    %s179 = sphi 0, %s165
    %s185 = sphi 0, %s187
    %s188 = sphi 0, %s185
    %s189 = sphi 0, %s188
    %s205 = sphi 0, %s189
  $region4: #{_forward_impl.1} parent=0 // loop_header_branch
    %16 = sbr.rel (%p14) target = $region8
  $region5: #{_forward_impl.1} parent=0 // loop_body
    %s18 = ssub.s32 %s13, 1
    %s19 = ssub.s32 %s13, 2
    %s20 = sadd.s32 %s13, 1
    %s22 = sadd.s32 %s21, 1
    %p25 = scmp.eq.s32.totalorder %s13, 1
    %p26 = scmp.ne.s32.totalorder %s21, %s23
    %p27 = scmp.eq.s32.totalorder %s13, 0
    %p28 = por %p26, %p27
    %p29 = scmp.ne.s32.totalorder %s21, %s23
    %p30 = scmp.eq.s32.totalorder %s18, 1
    %p31 = por %p29, %p30
    %p32 = scmp.ne.s32.totalorder %s23, %s24
    %p33 = scmp.eq.s32.totalorder %s18, 0
    %p34 = por %p32, %p33
    %p35 = scmp.ne.s32.totalorder %s23, %s24
    %p36 = scmp.eq.s32.totalorder %s19, 1
    %p37 = por %p35, %p36
    %p39 = scmp.ne.s32.totalorder %s24, %s38
    %p40 = scmp.eq.s32.totalorder %s19, 0
    %p41 = por %p39, %p40
    %s43 = sadd.s32 %s42, 1
    %p46 = scmp.eq.s32.totalorder %s13, 1
    %p47 = scmp.ne.s32.totalorder %s42, %s44
    %p48 = scmp.eq.s32.totalorder %s13, 0
    %p49 = por %p47, %p48
    %p50 = scmp.ne.s32.totalorder %s42, %s44
    %p51 = scmp.eq.s32.totalorder %s18, 1
    %p52 = por %p50, %p51
    %p53 = scmp.ne.s32.totalorder %s44, %s45
    %p54 = scmp.eq.s32.totalorder %s18, 0
    %p55 = por %p53, %p54
    %p56 = scmp.ne.s32.totalorder %s44, %s45
    %p57 = scmp.eq.s32.totalorder %s19, 1
    %p58 = por %p56, %p57
    %p60 = scmp.ne.s32.totalorder %s45, %s59
    %p61 = scmp.eq.s32.totalorder %s19, 0
    %p62 = por %p60, %p61
    %s63 = ssub.s32 %s13, %s20
    %p64 = scmp.eq.s32.totalorder %s63, 0
    %s66 = sadd.s32 %s65, 1
    %s67 = scalar_select %p64, %s65, %s66
    %p70 = pneg %p64
    %p71 = scmp.eq.s32.totalorder %s13, 1
    %p72 = por %p70, %p71
    %p73 = scmp.ne.s32.totalorder %s65, %s68
    %p74 = scmp.eq.s32.totalorder %s13, 0
    %p75 = por %p73, %p74
    %p76 = scmp.ne.s32.totalorder %s65, %s68
    %p77 = scmp.eq.s32.totalorder %s18, 1
    %p78 = por %p76, %p77
    %p79 = scmp.ne.s32.totalorder %s68, %s69
    %p80 = scmp.eq.s32.totalorder %s18, 0
    %p81 = por %p79, %p80
    %p82 = scmp.ne.s32.totalorder %s68, %s69
    %p83 = scmp.eq.s32.totalorder %s19, 1
    %p84 = por %p82, %p83
    %p86 = scmp.ne.s32.totalorder %s69, %s85
    %p87 = scmp.eq.s32.totalorder %s19, 0
    %p88 = por %p86, %p87
    %s89 = ssub.s32 %s13, %s20
    %p90 = scmp.eq.s32.totalorder %s89, 0
    %s92 = sadd.s32 %s91, 1
    %s93 = scalar_select %p90, %s91, %s92
    %p96 = pneg %p90
    %p97 = scmp.eq.s32.totalorder %s13, 1
    %p98 = por %p96, %p97
    %p99 = scmp.ne.s32.totalorder %s91, %s94
    %p100 = scmp.eq.s32.totalorder %s13, 0
    %p101 = por %p99, %p100
    %p102 = scmp.ne.s32.totalorder %s91, %s94
    %p103 = scmp.eq.s32.totalorder %s18, 1
    %p104 = por %p102, %p103
    %p105 = scmp.ne.s32.totalorder %s94, %s95
    %p106 = scmp.eq.s32.totalorder %s18, 0
    %p107 = por %p105, %p106
    %p108 = scmp.ne.s32.totalorder %s94, %s95
    %p109 = scmp.eq.s32.totalorder %s19, 1
    %p110 = por %p108, %p109
    %p112 = scmp.ne.s32.totalorder %s95, %s111
    %p113 = scmp.eq.s32.totalorder %s19, 0
    %p114 = por %p112, %p113
    %s115 = ssub.s32 %s13, %s20
    %p116 = scmp.eq.s32.totalorder %s115, 0
    %s118 = sadd.s32 %s117, 1
    %s119 = scalar_select %p116, %s117, %s118
    %p122 = pneg %p116
    %p123 = scmp.eq.s32.totalorder %s13, 1
    %p124 = por %p122, %p123
    %p125 = scmp.ne.s32.totalorder %s117, %s120
    %p126 = scmp.eq.s32.totalorder %s13, 0
    %p127 = por %p125, %p126
    %p128 = scmp.ne.s32.totalorder %s117, %s120
    %p129 = scmp.eq.s32.totalorder %s18, 1
    %p130 = por %p128, %p129
    %p131 = scmp.ne.s32.totalorder %s120, %s121
    %p132 = scmp.eq.s32.totalorder %s18, 0
    %p133 = por %p131, %p132
    %p134 = scmp.ne.s32.totalorder %s120, %s121
    %p135 = scmp.eq.s32.totalorder %s19, 1
    %p136 = por %p134, %p135
    %p138 = scmp.ne.s32.totalorder %s121, %s137
    %p139 = scmp.eq.s32.totalorder %s19, 0
    %p140 = por %p138, %p139
    %s142 = sadd.s32 %s141, 1
    %p145 = scmp.eq.s32.totalorder %s13, 1
    %p146 = scmp.ne.s32.totalorder %s141, %s143
    %p147 = scmp.eq.s32.totalorder %s13, 0
    %p148 = por %p146, %p147
    %p149 = scmp.ne.s32.totalorder %s141, %s143
    %p150 = scmp.eq.s32.totalorder %s18, 1
    %p151 = por %p149, %p150
    %p152 = scmp.ne.s32.totalorder %s143, %s144
    %p153 = scmp.eq.s32.totalorder %s18, 0
    %p154 = por %p152, %p153
    %p155 = scmp.ne.s32.totalorder %s143, %s144
    %p156 = scmp.eq.s32.totalorder %s19, 1
    %p157 = por %p155, %p156
    %p159 = scmp.ne.s32.totalorder %s144, %s158
    %p160 = scmp.eq.s32.totalorder %s19, 0
    %p161 = por %p159, %p160
    %s163 = sadd.s32 %s162, 1
    %p166 = scmp.eq.s32.totalorder %s13, 1
    %p167 = scmp.ne.s32.totalorder %s162, %s164
    %p168 = scmp.eq.s32.totalorder %s13, 0
    %p169 = por %p167, %p168
    %p170 = scmp.ne.s32.totalorder %s162, %s164
    %p171 = scmp.eq.s32.totalorder %s18, 1
    %p172 = por %p170, %p171
    %p173 = scmp.ne.s32.totalorder %s164, %s165
    %p174 = scmp.eq.s32.totalorder %s18, 0
    %p175 = por %p173, %p174
    %p176 = scmp.ne.s32.totalorder %s164, %s165
    %p177 = scmp.eq.s32.totalorder %s19, 1
    %p178 = por %p176, %p177
    %p180 = scmp.ne.s32.totalorder %s165, %s179
    %p181 = scmp.eq.s32.totalorder %s19, 0
    %p182 = por %p180, %p181
    %s183 = ssub.s32 %s13, %s20
    %p184 = scmp.eq.s32.totalorder %s183, 0
    %s186 = sadd.s32 %s185, 1
    %s187 = scalar_select %p184, %s185, %s186
    %p190 = pneg %p184
    %p191 = scmp.eq.s32.totalorder %s13, 1
    %p192 = por %p190, %p191
    %p193 = scmp.ne.s32.totalorder %s185, %s188
    %p194 = scmp.eq.s32.totalorder %s13, 0
    %p195 = por %p193, %p194
    %p196 = scmp.ne.s32.totalorder %s185, %s188
    %p197 = scmp.eq.s32.totalorder %s18, 1
    %p198 = por %p196, %p197
    %p199 = scmp.ne.s32.totalorder %s188, %s189
    %p200 = scmp.eq.s32.totalorder %s18, 0
    %p201 = por %p199, %p200
    %p202 = scmp.ne.s32.totalorder %s188, %s189
    %p203 = scmp.eq.s32.totalorder %s19, 1
    %p204 = por %p202, %p203
    %p206 = scmp.ne.s32.totalorder %s189, %s205
    %p207 = scmp.eq.s32.totalorder %s19, 0
    %p208 = por %p206, %p207
    %p209 = scmp.le.s32.totalorder 1, %s13
    %p210 = scmp.lt.s32.totalorder %s13, 3
    %p211 = pnand %p209, %p210
    %p212 = pneg %p211
    // Predicated region
    $region9: #{_forward_impl.1} parent=5 // pred_check
      _
    $region10: #{_forward_impl.1} parent=5 // pred_check_branch
      %214 = sbr.rel (%p211) target = $region12
    $region11: #{_forward_impl.1} parent=5 // pred_region
      %s215 = ssub.s32 %s13, 1
      // Predicated region
      $region13: #{_forward_impl.1} parent=11 // pred_check
        %p216 = pneg %p34
      $region14: #{_forward_impl.1} parent=11 // pred_check_branch
        %218 = sbr.rel (%p216) target = $region16
      $region15: #{_forward_impl.1} parent=11 // pred_region
        _
      $region16: #{_forward_impl.1} parent=11 // pred_fallthru
        _
      // Predicated region
      $region17: #{_forward_impl.1} parent=11 // pred_check
        %p219 = pneg %p55
      $region18: #{_forward_impl.1} parent=11 // pred_check_branch
        %221 = sbr.rel (%p219) target = $region20
      $region19: #{_forward_impl.1} parent=11 // pred_region
        _
      $region20: #{_forward_impl.1} parent=11 // pred_fallthru
        _
      // Predicated region
      $region21: #{_forward_impl.1} parent=11 // pred_check
        %p222 = pneg %p154
      $region22: #{_forward_impl.1} parent=11 // pred_check_branch
        %224 = sbr.rel (%p222) target = $region24
      $region23: #{_forward_impl.1} parent=11 // pred_region
        _
      $region24: #{_forward_impl.1} parent=11 // pred_fallthru
        _
      // Predicated region
      $region25: #{_forward_impl.1} parent=11 // pred_check
        %p225 = pneg %p175
      $region26: #{_forward_impl.1} parent=11 // pred_check_branch
        %227 = sbr.rel (%p225) target = $region28
      $region27: #{_forward_impl.1} parent=11 // pred_region
        _
      $region28: #{_forward_impl.1} parent=11 // pred_fallthru
        _
    $region12: #{_forward_impl.1} parent=5 // pred_fallthru
      _
    %p228 = scmp.lt.s32.totalorder %s13, 2
    // Predicated region
    $region29: #{_forward_impl.1} parent=5 // pred_check
      %p229 = pneg %p228
    $region30: #{_forward_impl.1} parent=5 // pred_check_branch
      %231 = sbr.rel (%p229) target = $region32
    $region31: #{_forward_impl.1} parent=5 // pred_region
      // Predicated region
      $region33: #{_forward_impl.1} parent=31 // pred_check
        %p232 = pneg %p75
      $region34: #{_forward_impl.1} parent=31 // pred_check_branch
        %234 = sbr.rel (%p232) target = $region36
      $region35: #{_forward_impl.1} parent=31 // pred_region
        %s235 = smul.u32 4, %s13
        %p236 = scmp.lt.s32.totalorder %s235, 7
        %s237 = scalar_select %p236, %s235, 7
        %s238 = smul.addr %s237, 8
        %s239 = scalar_lea.vmem %s2, %s238
        %s240 = smul.u32 4, %s13
      $region36: #{_forward_impl.1} parent=31 // pred_fallthru
        _
      // Predicated region
      $region37: #{_forward_impl.1} parent=31 // pred_check
        %p241 = pneg %p101
      $region38: #{_forward_impl.1} parent=31 // pred_check_branch
        %243 = sbr.rel (%p241) target = $region40
      $region39: #{_forward_impl.1} parent=31 // pred_region
        %s244 = smul.u32 4, %s13
        %p245 = scmp.lt.s32.totalorder %s244, 7
        %s246 = scalar_select %p245, %s244, 7
        %s247 = smul.addr %s246, 2
        %s248 = scalar_lea.vmem %s3, %s247
        %s249 = smul.u32 4, %s13
      $region40: #{_forward_impl.1} parent=31 // pred_fallthru
        _
      // Predicated region
      $region41: #{_forward_impl.1} parent=31 // pred_check
        %p250 = pneg %p127
      $region42: #{_forward_impl.1} parent=31 // pred_check_branch
        %252 = sbr.rel (%p250) target = $region44
      $region43: #{_forward_impl.1} parent=31 // pred_region
        %s253 = smul.u32 4, %s13
        %p254 = scmp.lt.s32.totalorder %s253, 7
        %s255 = scalar_select %p254, %s253, 7
        %s256 = smul.addr %s255, 16
        %s257 = smul.addr %s256, 8
        %s258 = scalar_lea.vmem %s4, %s257
        %s259 = smul.u32 4, %s13
      $region44: #{_forward_impl.1} parent=31 // pred_fallthru
        _
    $region32: #{_forward_impl.1} parent=5 // pred_fallthru
      _
    %p260 = scmp.le.s32.totalorder 1, %s13
    %p261 = scmp.lt.s32.totalorder %s13, 3
    %p262 = pnand %p260, %p261
    %p263 = pneg %p262
    // Predicated region
    $region45: #{_forward_impl.1} parent=5 // pred_check
      _
    $region46: #{_forward_impl.1} parent=5 // pred_check_branch
      %265 = sbr.rel (%p262) target = $region48
    $region47: #{_forward_impl.1} parent=5 // pred_region
      %s266 = ssub.s32 %s13, 1
      %p267 = pneg %p34
      %p268 = pneg %p31
      %p269 = pneg %p55
      %p270 = pneg %p52
      %s271 = smul.u32 4, %s18
      %p272 = scmp.lt.s32.totalorder %s271, 7
      %s273 = scalar_select %p272, %s271, 7
      %s274 = smul.addr %s273, 8
      %s275 = scalar_lea.vmem %s2, %s274
      %p276 = pneg %p81
      %p277 = pneg %p78
      %s278 = smul.u32 4, %s18
      %p279 = scmp.lt.s32.totalorder %s278, 7
      %s280 = scalar_select %p279, %s278, 7
      %s281 = smul.addr %s280, 2
      %s282 = scalar_lea.vmem %s3, %s281
      %p283 = pneg %p107
      %p284 = pneg %p104
      %s285 = smul.u32 4, %s18
      %p286 = scmp.lt.s32.totalorder %s285, 7
      %s287 = scalar_select %p286, %s285, 7
      %s288 = smul.addr %s287, 16
      %s289 = smul.addr %s288, 8
      %s290 = scalar_lea.vmem %s4, %s289
      %p291 = pneg %p133
      %p292 = pneg %p130
      %p293 = pneg %p154
      %p294 = pneg %p151
      %p295 = pneg %p175
      %p296 = pneg %p172
      %p297 = pneg %p201
      %p298 = pneg %p198
      %s299 = smul.u32 4, %s18
      %p300 = scmp.lt.s32.totalorder %s299, 7
      %s301 = scalar_select %p300, %s299, 7
      %s302 = smul.addr %s301, 2
      %s303 = scalar_lea.vmem %s7, %s302
      %s304 = smul.u32 4, %s18
      %p305 = scmp.lt.s32.totalorder %s304, 7
      %s306 = scalar_select %p305, %s304, 7
      %s307 = smul.addr %s306, 8
      %s308 = scalar_lea.vmem %s2, %s307
      %s309 = smul.u32 4, %s18
      %s310 = smul.u32 4, %s18
      %p311 = scmp.lt.s32.totalorder %s310, 7
      %s312 = scalar_select %p311, %s310, 7
      %s313 = smul.addr %s312, 2
      %s314 = scalar_lea.vmem %s3, %s313
      %s315 = smul.u32 4, %s18
      %s316 = smul.u32 4, %s18
      %p317 = scmp.lt.s32.totalorder %s316, 7
      %s318 = scalar_select %p317, %s316, 7
      %s319 = smul.addr %s318, 16
      %s320 = smul.addr %s319, 8
      %s321 = scalar_lea.vmem %s4, %s320
      %s322 = smul.u32 4, %s18
      %s323 = smul.u32 4, %s18
      %p324 = scmp.lt.s32.totalorder %s323, 7
      %s325 = scalar_select %p324, %s323, 7
      %s326 = smul.addr %s325, 2
      %s327 = scalar_lea.vmem %s7, %s326
      %s328 = smul.u32 4, %s18
      %v330 = vld [vmem:[%s0] sm:$0x1]
      %v331 = vld [vmem:[%s1] sm:$0xf]
      %v332 = vld [vmem:[%s308] sm:$0xff]
      %334 = vset.pattern.permute.xlu0 0
      %335 = vperm.xlu0 %334, %v332
      %v336 = vpop.permute.xlu0 %335
      %v339 = vlaneseq
      %v340 = vshrl.u32 %v339, 7
      %v341 = vsub.s32 0, %v340
      %v342 = vrot.slane %v330, %v341
      %v344 = vsub.f32 %v336, %v342
      %v345 = vmul.f32 %v344, -1.0406845
      %v346 = vmul.f32 %v345, %v344
      %v347 = vmul.f32 %v346, 1.442695
      %v348 = vpow.pop %v347
      %v349 = vld [vmem:[%s314] sm:$0x3]
      %v350 = vpack.c.bf16 %v349, %v349
      %v351 = vpack.c.bf16 %v348, %v348
      %vm352 = vcmask 64512
      %v354 = vsel %vm352, %v350, 0
      %vm356 = vcmask 1043456
      %v358 = vsel %vm356, %v351, 0
      %360 = vmatprep.subr.bf16.mxu0 0
      %361 = vmatpush1.bf16.msra.mxu0 %v358
      %362 = vmatprep.subr.bf16.mxu0 0
      %363 = vmatpush1.bf16.msra.mxu0 0
      %364 = vmatprep.subr.bf16.mxu0 0
      %365 = vmatpush1.bf16.msra.mxu0 0
      %366 = vmatprep.subr.bf16.mxu0 0
      %367 = vmatpush1.bf16.msra.mxu0 0
      %368 = vmatprep.subr.bf16.mxu0 0
      %369 = vmatpush1.bf16.msra.mxu0 0
      %370 = vmatprep.subr.bf16.mxu0 0
      %371 = vmatpush1.bf16.msra.mxu0 0
      %372 = vmatprep.subr.bf16.mxu0 0
      %373 = vmatpush1.bf16.msra.mxu0 0
      %374 = vmatprep.subr.bf16.mxu0 0
      %375 = vmatpush1.bf16.msra.mxu0 0
      %376 = vmatprep.subr.bf16.mxu0 0
      %377 = vmatpush1.bf16.msra.mxu0 0
      %378 = vmatprep.subr.bf16.mxu0 0
      %379 = vmatpush1.bf16.msra.mxu0 0
      %380 = vmatprep.subr.bf16.mxu0 0
      %381 = vmatpush1.bf16.msra.mxu0 0
      %382 = vmatprep.subr.bf16.mxu0 0
      %383 = vmatpush1.bf16.msra.mxu0 0
      %384 = vmatprep.subr.bf16.mxu0 0
      %385 = vmatpush1.bf16.msra.mxu0 0
      %386 = vmatprep.subr.bf16.mxu0 0
      %387 = vmatpush1.bf16.msra.mxu0 0
      %388 = vmatprep.subr.bf16.mxu0 0
      %389 = vmatpush1.bf16.msra.mxu0 0
      %390 = vmatprep.subr.bf16.mxu0 0
      %391 = vmatpush1.bf16.msra.mxu0 0
      %392 = vmatprep.mubr.bf16.mxu0 0
      %393 = vmatmul.mubr.bf16.gmra.mrb[0].mxu0 %v354
      %v394 = vpop.f32.mrb[0].mxu0
      %v395 = vadd.f32 0.0, %v394
      %v396 = vpop.f32.mrb[0].mxu0
      %v397 = vpop.f32.mrb[0].mxu0
      %v398 = vpop.f32.mrb[0].mxu0
      %399 = vdwg.mxu0
      %v400 = vadd.f32 %v395, 1e-08
      %v402 = vrot.slane %v400, 7
      %v404 = vrcp.pop %v402
      %v405 = vmul.f32 %v395, %v404
      %v407 = vrot.slane %v395, 7
      %v410 = vrot.slane %v405, 7
      %vm412 = vcmask 1040384
      %v413 = vsel %vm412, %v330, %v407
      %vm414 = vcmask 1041408
      %v415 = vsel %vm414, %v413, %v410
      %s416 = scalar_lea.vmem %s308, 8
      %v417 = vld [vmem:[%s416] sm:$0xff]
      %419 = vset.pattern.permute.xlu0 0
      %420 = vperm.xlu0 %419, %v417
      %v421 = vpop.permute.xlu0 %420
      %v423 = vsub.f32 %v421, %v342
      %v424 = vmul.f32 %v423, -1.0406845
      %v425 = vmul.f32 %v424, %v423
      %v426 = vmul.f32 %v425, 1.442695
      %v427 = vpow.pop %v426
      %s428 = scalar_lea.vmem %s314, 2
      %v429 = vld [vmem:[%s428] sm:$0x3]
      %v430 = vpack.c.bf16 %v429, %v429
      %v431 = vpack.c.bf16 %v427, %v427
      %v433 = vsel %vm352, %v430, 0
      %v436 = vsel %vm356, %v431, 0
      %438 = vmatprep.subr.bf16.mxu0 0
      %439 = vmatpush1.bf16.msra.mxu0 %v436
      %440 = vmatprep.subr.bf16.mxu0 0
      %441 = vmatpush1.bf16.msra.mxu0 0
      %442 = vmatprep.subr.bf16.mxu0 0
      %443 = vmatpush1.bf16.msra.mxu0 0
      %444 = vmatprep.subr.bf16.mxu0 0
      %445 = vmatpush1.bf16.msra.mxu0 0
      %446 = vmatprep.subr.bf16.mxu0 0
      %447 = vmatpush1.bf16.msra.mxu0 0
      %448 = vmatprep.subr.bf16.mxu0 0
      %449 = vmatpush1.bf16.msra.mxu0 0
      %450 = vmatprep.subr.bf16.mxu0 0
      %451 = vmatpush1.bf16.msra.mxu0 0
      %452 = vmatprep.subr.bf16.mxu0 0
      %453 = vmatpush1.bf16.msra.mxu0 0
      %454 = vmatprep.subr.bf16.mxu0 0
      %455 = vmatpush1.bf16.msra.mxu0 0
      %456 = vmatprep.subr.bf16.mxu0 0
      %457 = vmatpush1.bf16.msra.mxu0 0
      %458 = vmatprep.subr.bf16.mxu0 0
      %459 = vmatpush1.bf16.msra.mxu0 0
      %460 = vmatprep.subr.bf16.mxu0 0
      %461 = vmatpush1.bf16.msra.mxu0 0
      %462 = vmatprep.subr.bf16.mxu0 0
      %463 = vmatpush1.bf16.msra.mxu0 0
      %464 = vmatprep.subr.bf16.mxu0 0
      %465 = vmatpush1.bf16.msra.mxu0 0
      %466 = vmatprep.subr.bf16.mxu0 0
      %467 = vmatpush1.bf16.msra.mxu0 0
      %468 = vmatprep.subr.bf16.mxu0 0
      %469 = vmatpush1.bf16.msra.mxu0 0
      %470 = vmatprep.mubr.bf16.mxu0 0
      %471 = vmatmul.mubr.bf16.gmra.mrb[0].mxu0 %v433
      %v472 = vpop.f32.mrb[0].mxu0
      %v473 = vadd.f32 0.0, %v472
      %v474 = vpop.f32.mrb[0].mxu0
      %v475 = vpop.f32.mrb[0].mxu0
      %v476 = vpop.f32.mrb[0].mxu0
      %477 = vdwg.mxu0
      %v478 = vadd.f32 %v473, 1e-08
      %v480 = vrot.slane %v478, 7
      %v482 = vrcp.pop %v480
      %v483 = vmul.f32 %v473, %v482
      %v485 = vrot.slane %v473, 7
      %v488 = vrot.slane %v483, 7
      %v490 = vsel %vm412, %v330, %v485
      %v491 = vsel %vm414, %v490, %v488
      %s492 = scalar_lea.vmem %s308, 16
      %v493 = vld [vmem:[%s492] sm:$0xff]
      %495 = vset.pattern.permute.xlu0 0
      %496 = vperm.xlu0 %495, %v493
      %v497 = vpop.permute.xlu0 %496
      %v499 = vsub.f32 %v497, %v342
      %v500 = vmul.f32 %v499, -1.0406845
      %v501 = vmul.f32 %v500, %v499
      %v502 = vmul.f32 %v501, 1.442695
      %v503 = vpow.pop %v502
      %s504 = scalar_lea.vmem %s314, 4
      %v505 = vld [vmem:[%s504] sm:$0x3]
      %v506 = vpack.c.bf16 %v505, %v505
      %v507 = vpack.c.bf16 %v503, %v503
      %v509 = vsel %vm352, %v506, 0
      %v512 = vsel %vm356, %v507, 0
      %514 = vmatprep.subr.bf16.mxu0 0
      %515 = vmatpush1.bf16.msra.mxu0 %v512
      %516 = vmatprep.subr.bf16.mxu0 0
      %517 = vmatpush1.bf16.msra.mxu0 0
      %518 = vmatprep.subr.bf16.mxu0 0
      %519 = vmatpush1.bf16.msra.mxu0 0
      %520 = vmatprep.subr.bf16.mxu0 0
      %521 = vmatpush1.bf16.msra.mxu0 0
      %522 = vmatprep.subr.bf16.mxu0 0
      %523 = vmatpush1.bf16.msra.mxu0 0
      %524 = vmatprep.subr.bf16.mxu0 0
      %525 = vmatpush1.bf16.msra.mxu0 0
      %526 = vmatprep.subr.bf16.mxu0 0
      %527 = vmatpush1.bf16.msra.mxu0 0
      %528 = vmatprep.subr.bf16.mxu0 0
      %529 = vmatpush1.bf16.msra.mxu0 0
      %530 = vmatprep.subr.bf16.mxu0 0
      %531 = vmatpush1.bf16.msra.mxu0 0
      %532 = vmatprep.subr.bf16.mxu0 0
      %533 = vmatpush1.bf16.msra.mxu0 0
      %534 = vmatprep.subr.bf16.mxu0 0
      %535 = vmatpush1.bf16.msra.mxu0 0
      %536 = vmatprep.subr.bf16.mxu0 0
      %537 = vmatpush1.bf16.msra.mxu0 0
      %538 = vmatprep.subr.bf16.mxu0 0
      %539 = vmatpush1.bf16.msra.mxu0 0
      %540 = vmatprep.subr.bf16.mxu0 0
      %541 = vmatpush1.bf16.msra.mxu0 0
      %542 = vmatprep.subr.bf16.mxu0 0
      %543 = vmatpush1.bf16.msra.mxu0 0
      %544 = vmatprep.subr.bf16.mxu0 0
      %545 = vmatpush1.bf16.msra.mxu0 0
      %546 = vmatprep.mubr.bf16.mxu0 0
      %547 = vmatmul.mubr.bf16.gmra.mrb[0].mxu0 %v509
      %v548 = vpop.f32.mrb[0].mxu0
      %v549 = vadd.f32 0.0, %v548
      %v550 = vpop.f32.mrb[0].mxu0
      %v551 = vpop.f32.mrb[0].mxu0
      %v552 = vpop.f32.mrb[0].mxu0
      %553 = vdwg.mxu0
      %v554 = vadd.f32 %v549, 1e-08
      %v556 = vrot.slane %v554, 7
      %v558 = vrcp.pop %v556
      %v559 = vmul.f32 %v549, %v558
      %v561 = vrot.slane %v549, 7
      %v564 = vrot.slane %v559, 7
      %v566 = vsel %vm412, %v330, %v561
      %v567 = vsel %vm414, %v566, %v564
      %s568 = scalar_lea.vmem %s308, 24
      %v569 = vld [vmem:[%s568] sm:$0xff]
      %571 = vset.pattern.permute.xlu0 0
      %572 = vperm.xlu0 %571, %v569
      %v573 = vpop.permute.xlu0 %572
      %v575 = vsub.f32 %v573, %v342
      %v576 = vmul.f32 %v575, -1.0406845
      %v577 = vmul.f32 %v576, %v575
      %v578 = vmul.f32 %v577, 1.442695
      %v579 = vpow.pop %v578
      %s580 = scalar_lea.vmem %s314, 6
      %v581 = vld [vmem:[%s580] sm:$0x3]
      %v582 = vpack.c.bf16 %v581, %v581
      %v583 = vpack.c.bf16 %v579, %v579
      %v585 = vsel %vm352, %v582, 0
      %v588 = vsel %vm356, %v583, 0
      %590 = vmatprep.subr.bf16.mxu0 0
      %591 = vmatpush1.bf16.msra.mxu0 %v588
      %592 = vmatprep.subr.bf16.mxu0 0
      %593 = vmatpush1.bf16.msra.mxu0 0
      %594 = vmatprep.subr.bf16.mxu0 0
      %595 = vmatpush1.bf16.msra.mxu0 0
      %596 = vmatprep.subr.bf16.mxu0 0
      %597 = vmatpush1.bf16.msra.mxu0 0
      %598 = vmatprep.subr.bf16.mxu0 0
      %599 = vmatpush1.bf16.msra.mxu0 0
      %600 = vmatprep.subr.bf16.mxu0 0
      %601 = vmatpush1.bf16.msra.mxu0 0
      %602 = vmatprep.subr.bf16.mxu0 0
      %603 = vmatpush1.bf16.msra.mxu0 0
      %604 = vmatprep.subr.bf16.mxu0 0
      %605 = vmatpush1.bf16.msra.mxu0 0
      %606 = vmatprep.subr.bf16.mxu0 0
      %607 = vmatpush1.bf16.msra.mxu0 0
      %608 = vmatprep.subr.bf16.mxu0 0
      %609 = vmatpush1.bf16.msra.mxu0 0
      %610 = vmatprep.subr.bf16.mxu0 0
      %611 = vmatpush1.bf16.msra.mxu0 0
      %612 = vmatprep.subr.bf16.mxu0 0
      %613 = vmatpush1.bf16.msra.mxu0 0
      %614 = vmatprep.subr.bf16.mxu0 0
      %615 = vmatpush1.bf16.msra.mxu0 0
      %616 = vmatprep.subr.bf16.mxu0 0
      %617 = vmatpush1.bf16.msra.mxu0 0
      %618 = vmatprep.subr.bf16.mxu0 0
      %619 = vmatpush1.bf16.msra.mxu0 0
      %620 = vmatprep.subr.bf16.mxu0 0
      %621 = vmatpush1.bf16.msra.mxu0 0
      %622 = vmatprep.mubr.bf16.mxu0 0
      %623 = vmatmul.mubr.bf16.gmra.mrb[0].mxu0 %v585
      %v624 = vpop.f32.mrb[0].mxu0
      %v625 = vadd.f32 0.0, %v624
      %v626 = vpop.f32.mrb[0].mxu0
      %v627 = vpop.f32.mrb[0].mxu0
      %v628 = vpop.f32.mrb[0].mxu0
      %629 = vdwg.mxu0
      %v630 = vadd.f32 %v625, 1e-08
      %v632 = vrot.slane %v630, 7
      %v634 = vrcp.pop %v632
      %v635 = vmul.f32 %v625, %v634
      %v637 = vrot.slane %v625, 7
      %v640 = vrot.slane %v635, 7
      %v642 = vsel %vm412, %v330, %v637
      %v643 = vsel %vm414, %v642, %v640
      %v645 = vlaneseq
      %v646 = vshrl.u32 %v645, 7
      %v647 = vsub.s32 0, %v646
      %v648 = vrot.slane %v331, %v647
      %v649 = vlaneseq
      %v650 = vshrl.u32 %v649, 7
      %v651 = vsub.s32 1, %v650
      %v652 = vrot.slane %v331, %v651
      %v653 = vlaneseq
      %v654 = vshrl.u32 %v653, 7
      %v655 = vsub.s32 2, %v654
      %v656 = vrot.slane %v331, %v655
      %v657 = vlaneseq
      %v658 = vshrl.u32 %v657, 7
      %v659 = vsub.s32 3, %v658
      %v660 = vrot.slane %v331, %v659
      %v665 = vmul.f32 %v415, %v648
      %v666 = vmul.f32 %v491, %v652
      %v667 = vmul.f32 %v567, %v656
      %v668 = vmul.f32 %v643, %v660
      %669 = vrot.lane.b32.xlu0 %v665, 2
      %v670 = vpop.permute.xlu0 %669
      %671 = vrot.lane.b32.xlu0 %v666, 2
      %v672 = vpop.permute.xlu0 %671
      %673 = vrot.lane.b32.xlu0 %v667, 2
      %v674 = vpop.permute.xlu0 %673
      %675 = vrot.lane.b32.xlu0 %v668, 2
      %v676 = vpop.permute.xlu0 %675
      %v677 = vlaneseq
      %v678 = vand.u32 %v677, 127
      %vm679 = vcmp.lt.s32.totalorder %v678, 2
      %v680 = vsel %vm679, %v674, %v676
      %v681 = vsel %vm679, %v672, %v674
      %v682 = vsel %vm679, %v670, %v672
      %v683 = vsel %vm679, %v676, %v670
      %684 = vrot.lane.b32.xlu0 %v665, 1
      %v685 = vpop.permute.xlu0 %684
      %686 = vrot.lane.b32.xlu0 %v666, 1
      %v687 = vpop.permute.xlu0 %686
      %688 = vrot.lane.b32.xlu0 %v667, 1
      %v689 = vpop.permute.xlu0 %688
      %690 = vrot.lane.b32.xlu0 %v668, 1
      %v691 = vpop.permute.xlu0 %690
      %vm692 = vcmp.lt.s32.totalorder %v678, 1
      %v693 = vsel %vm692, %v689, %v691
      %v694 = vsel %vm692, %v687, %v689
      %v695 = vsel %vm692, %v685, %v687
      %v696 = vsel %vm692, %v691, %v685
      %697 = vrot.lane.b32.xlu0 %v665, 127
      %v698 = vpop.permute.xlu0 %697
      %699 = vrot.lane.b32.xlu0 %v666, 127
      %v700 = vpop.permute.xlu0 %699
      %701 = vrot.lane.b32.xlu0 %v667, 127
      %v702 = vpop.permute.xlu0 %701
      %703 = vrot.lane.b32.xlu0 %v668, 127
      %v704 = vpop.permute.xlu0 %703
      %vm705 = vcmp.lt.s32.totalorder %v678, 127
      %v706 = vsel %vm705, %v702, %v704
      %v707 = vsel %vm705, %v700, %v702
      %v708 = vsel %vm705, %v698, %v700
      %v709 = vsel %vm705, %v704, %v698
      %710 = vrot.lane.b32.xlu0 %v665, 126
      %v711 = vpop.permute.xlu0 %710
      %712 = vrot.lane.b32.xlu0 %v666, 126
      %v713 = vpop.permute.xlu0 %712
      %714 = vrot.lane.b32.xlu0 %v667, 126
      %v715 = vpop.permute.xlu0 %714
      %716 = vrot.lane.b32.xlu0 %v668, 126
      %v717 = vpop.permute.xlu0 %716
      %vm718 = vcmp.lt.s32.totalorder %v678, 126
      %v719 = vsel %vm718, %v715, %v717
      %v720 = vsel %vm718, %v713, %v715
      %v721 = vsel %vm718, %v711, %v713
      %v722 = vsel %vm718, %v717, %v711
      %v727 = vrot.slane %v696, 5
      %v728 = vrot.slane %v695, 5
      %v729 = vrot.slane %v694, 5
      %v730 = vrot.slane %v693, 5
      %v739 = vrot.slane %v665, 2
      %v740 = vrot.slane %v666, 2
      %v741 = vrot.slane %v667, 2
      %v742 = vrot.slane %v668, 2
      %v751 = vrot.slane %v708, 7
      %v752 = vrot.slane %v707, 7
      %v753 = vrot.slane %v706, 7
      %v754 = vrot.slane %v709, 7
      %v763 = vrot.slane %v721, 4
      %v764 = vrot.slane %v720, 4
      %v765 = vrot.slane %v719, 4
      %v766 = vrot.slane %v722, 4
      %vm771 = vcmask 1042432
      %v772 = vsel %vm771, %v683, %v727
      %v773 = vsel %vm771, %v682, %v728
      %v774 = vsel %vm771, %v681, %v729
      %v775 = vsel %vm771, %v680, %v730
      %vm776 = vcmask 1045504
      %v777 = vsel %vm776, %v772, %v739
      %v778 = vsel %vm776, %v773, %v740
      %v779 = vsel %vm776, %v774, %v741
      %v780 = vsel %vm776, %v775, %v742
      %v781 = vsel %vm412, %v739, %v751
      %v782 = vsel %vm412, %v740, %v752
      %v783 = vsel %vm412, %v741, %v753
      %v784 = vsel %vm412, %v742, %v754
      %v785 = vsel %vm356, %v781, %v763
      %v786 = vsel %vm356, %v782, %v764
      %v787 = vsel %vm356, %v783, %v765
      %v788 = vsel %vm356, %v784, %v766
      %v789 = vpack.c.bf16 %v785, %v777
      %v790 = vpack.c.bf16 %v786, %v778
      %v791 = vpack.c.bf16 %v787, %v779
      %v792 = vpack.c.bf16 %v788, %v780
      %v793 = vld [vmem:[%s5] sm:$0xf]
      %v794 = vld [vmem:[%s5 + $0x8] sm:$0xf]
      %v795 = vld [vmem:[%s6] sm:$0xff]
      %v796 = vld [vmem:[%s6 + $0x8] sm:$0xff]
      %798 = vset.pattern.permute.xlu0 0
      %799 = vperm.xlu0 %798, %v795
      %v800 = vpop.permute.xlu0 %799
      %803 = vset.pattern.permute.xlu0 0
      %804 = vperm.xlu0 %803, %v796
      %v805 = vpop.permute.xlu0 %804
      %v809 = vunpack.c.l.b16 %v793
      %v810 = vunpack.c.l.b16 %v794
      %v811 = vpack.c.b16 %v810, %v809
      %vm812 = vcmask 121856
      %v814 = vsel %vm812, %v811, 0
      %vm816 = vcmask 1046528
      %vm817 = vcmask 1047552
      %v818 = vsel %vm816, 4294967295, 65535
      %v819 = vsel %vm817, %v818, 0
      %v821 = vand.u32 %v789, %v819
      %v824 = vand.u32 %v790, %v819
      %v827 = vand.u32 %v791, %v819
      %v830 = vand.u32 %v792, %v819
      %832 = vmatprep.subr.bf16.mxu0 %v824
      %833 = vmatpush1.bf16.msra.mxu0 %v821
      %834 = vmatprep.subr.bf16.mxu0 0
      %835 = vmatpush1.bf16.msra.mxu0 0
      %836 = vmatprep.subr.bf16.mxu0 0
      %837 = vmatpush1.bf16.msra.mxu0 0
      %838 = vmatprep.subr.bf16.mxu0 0
      %839 = vmatpush1.bf16.msra.mxu0 0
      %840 = vmatprep.subr.bf16.mxu0 0
      %841 = vmatpush1.bf16.msra.mxu0 0
      %842 = vmatprep.subr.bf16.mxu0 0
      %843 = vmatpush1.bf16.msra.mxu0 0
      %844 = vmatprep.subr.bf16.mxu0 0
      %845 = vmatpush1.bf16.msra.mxu0 0
      %846 = vmatprep.subr.bf16.mxu0 0
      %847 = vmatpush1.bf16.msra.mxu0 0
      %848 = vmatprep.subr.bf16.mxu0 0
      %849 = vmatpush1.bf16.msra.mxu0 0
      %850 = vmatprep.subr.bf16.mxu0 0
      %851 = vmatpush1.bf16.msra.mxu0 0
      %852 = vmatprep.subr.bf16.mxu0 0
      %853 = vmatpush1.bf16.msra.mxu0 0
      %854 = vmatprep.subr.bf16.mxu0 0
      %855 = vmatpush1.bf16.msra.mxu0 0
      %856 = vmatprep.subr.bf16.mxu0 0
      %857 = vmatpush1.bf16.msra.mxu0 0
      %858 = vmatprep.subr.bf16.mxu0 0
      %859 = vmatpush1.bf16.msra.mxu0 0
      %860 = vmatprep.subr.bf16.mxu0 0
      %861 = vmatpush1.bf16.msra.mxu0 0
      %862 = vmatprep.subr.bf16.mxu0 0
      %863 = vmatpush1.bf16.msra.mxu0 0
      %864 = vmatprep.mubr.bf16.mxu0 0
      %865 = vmatmul.mubr.bf16.gmra.mrb[0].mxu0 %v814
      %v866 = vpop.f32.mrb[0].mxu0
      %v867 = vadd.f32 %v800, %v866
      %v868 = vpop.f32.mrb[0].mxu0
      %v869 = vadd.f32 %v800, %v868
      %v870 = vpop.f32.mrb[0].mxu0
      %v871 = vadd.f32 %v805, %v870
      %v872 = vpop.f32.mrb[0].mxu0
      %v873 = vadd.f32 %v805, %v872
      %874 = vdwg.mxu0
      %875 = vmatprep.subr.bf16.mxu0 %v830
      %876 = vmatpush1.bf16.msra.mxu0 %v827
      %877 = vmatprep.subr.bf16.mxu0 0
      %878 = vmatpush1.bf16.msra.mxu0 0
      %879 = vmatprep.subr.bf16.mxu0 0
      %880 = vmatpush1.bf16.msra.mxu0 0
      %881 = vmatprep.subr.bf16.mxu0 0
      %882 = vmatpush1.bf16.msra.mxu0 0
      %883 = vmatprep.subr.bf16.mxu0 0
      %884 = vmatpush1.bf16.msra.mxu0 0
      %885 = vmatprep.subr.bf16.mxu0 0
      %886 = vmatpush1.bf16.msra.mxu0 0
      %887 = vmatprep.subr.bf16.mxu0 0
      %888 = vmatpush1.bf16.msra.mxu0 0
      %889 = vmatprep.subr.bf16.mxu0 0
      %890 = vmatpush1.bf16.msra.mxu0 0
      %891 = vmatprep.subr.bf16.mxu0 0
      %892 = vmatpush1.bf16.msra.mxu0 0
      %893 = vmatprep.subr.bf16.mxu0 0
      %894 = vmatpush1.bf16.msra.mxu0 0
      %895 = vmatprep.subr.bf16.mxu0 0
      %896 = vmatpush1.bf16.msra.mxu0 0
      %897 = vmatprep.subr.bf16.mxu0 0
      %898 = vmatpush1.bf16.msra.mxu0 0
      %899 = vmatprep.subr.bf16.mxu0 0
      %900 = vmatpush1.bf16.msra.mxu0 0
      %901 = vmatprep.subr.bf16.mxu0 0
      %902 = vmatpush1.bf16.msra.mxu0 0
      %903 = vmatprep.subr.bf16.mxu0 0
      %904 = vmatpush1.bf16.msra.mxu0 0
      %905 = vmatprep.subr.bf16.mxu0 0
      %906 = vmatpush1.bf16.msra.mxu0 0
      %907 = vmatprep.mubr.bf16.mxu0 0
      %908 = vmatmul.mubr.bf16.gmra.mrb[0].mxu0 %v814
      %v909 = vpop.f32.mrb[0].mxu0
      %v910 = vadd.f32 %v800, %v909
      %v911 = vpop.f32.mrb[0].mxu0
      %v912 = vadd.f32 %v800, %v911
      %v913 = vpop.f32.mrb[0].mxu0
      %v914 = vadd.f32 %v805, %v913
      %v915 = vpop.f32.mrb[0].mxu0
      %v916 = vadd.f32 %v805, %v915
      %917 = vdwg.mxu0
      %v918 = vmax.f32 %v867, 0.0
      %v919 = vmax.f32 %v869, 0.0
      %v920 = vmax.f32 %v910, 0.0
      %v921 = vmax.f32 %v912, 0.0
      %v922 = vmax.f32 %v871, 0.0
      %v923 = vmax.f32 %v873, 0.0
      %v924 = vmax.f32 %v914, 0.0
      %v925 = vmax.f32 %v916, 0.0
      %v926 = vmul.f32 %v918, %v648
      %v927 = vmul.f32 %v919, %v652
      %v928 = vmul.f32 %v920, %v656
      %v929 = vmul.f32 %v921, %v660
      %v930 = vmul.f32 %v922, %v648
      %v931 = vmul.f32 %v923, %v652
      %v932 = vmul.f32 %v924, %v656
      %v933 = vmul.f32 %v925, %v660
      %934 = vrot.lane.b32.xlu0 %v926, 2
      %v935 = vpop.permute.xlu0 %934
      %936 = vrot.lane.b32.xlu0 %v930, 2
      %v937 = vpop.permute.xlu0 %936
      %938 = vrot.lane.b32.xlu0 %v927, 2
      %v939 = vpop.permute.xlu0 %938
      %940 = vrot.lane.b32.xlu0 %v931, 2
      %v941 = vpop.permute.xlu0 %940
      %942 = vrot.lane.b32.xlu0 %v928, 2
      %v943 = vpop.permute.xlu0 %942
      %944 = vrot.lane.b32.xlu0 %v932, 2
      %v945 = vpop.permute.xlu0 %944
      %946 = vrot.lane.b32.xlu0 %v929, 2
      %v947 = vpop.permute.xlu0 %946
      %948 = vrot.lane.b32.xlu0 %v933, 2
      %v949 = vpop.permute.xlu0 %948
      %v950 = vsel %vm679, %v943, %v947
      %v951 = vsel %vm679, %v945, %v949
      %v952 = vsel %vm679, %v939, %v943
      %v953 = vsel %vm679, %v941, %v945
      %v954 = vsel %vm679, %v935, %v939
      %v955 = vsel %vm679, %v937, %v941
      %v956 = vsel %vm679, %v947, %v935
      %v957 = vsel %vm679, %v949, %v937
      %958 = vrot.lane.b32.xlu0 %v926, 1
      %v959 = vpop.permute.xlu0 %958
      %960 = vrot.lane.b32.xlu0 %v930, 1
      %v961 = vpop.permute.xlu0 %960
      %962 = vrot.lane.b32.xlu0 %v927, 1
      %v963 = vpop.permute.xlu0 %962
      %964 = vrot.lane.b32.xlu0 %v931, 1
      %v965 = vpop.permute.xlu0 %964
      %966 = vrot.lane.b32.xlu0 %v928, 1
      %v967 = vpop.permute.xlu0 %966
      %968 = vrot.lane.b32.xlu0 %v932, 1
      %v969 = vpop.permute.xlu0 %968
      %970 = vrot.lane.b32.xlu0 %v929, 1
      %v971 = vpop.permute.xlu0 %970
      %972 = vrot.lane.b32.xlu0 %v933, 1
      %v973 = vpop.permute.xlu0 %972
      %v974 = vsel %vm692, %v967, %v971
      %v975 = vsel %vm692, %v969, %v973
      %v976 = vsel %vm692, %v963, %v967
      %v977 = vsel %vm692, %v965, %v969
      %v978 = vsel %vm692, %v959, %v963
      %v979 = vsel %vm692, %v961, %v965
      %v980 = vsel %vm692, %v971, %v959
      %v981 = vsel %vm692, %v973, %v961
      %982 = vrot.lane.b32.xlu0 %v926, 127
      %v983 = vpop.permute.xlu0 %982
      %984 = vrot.lane.b32.xlu0 %v930, 127
      %v985 = vpop.permute.xlu0 %984
      %986 = vrot.lane.b32.xlu0 %v927, 127
      %v987 = vpop.permute.xlu0 %986
      %988 = vrot.lane.b32.xlu0 %v931, 127
      %v989 = vpop.permute.xlu0 %988
      %990 = vrot.lane.b32.xlu0 %v928, 127
      %v991 = vpop.permute.xlu0 %990
      %992 = vrot.lane.b32.xlu0 %v932, 127
      %v993 = vpop.permute.xlu0 %992
      %994 = vrot.lane.b32.xlu0 %v929, 127
      %v995 = vpop.permute.xlu0 %994
      %996 = vrot.lane.b32.xlu0 %v933, 127
      %v997 = vpop.permute.xlu0 %996
      %v998 = vsel %vm705, %v991, %v995
      %v999 = vsel %vm705, %v993, %v997
      %v1000 = vsel %vm705, %v987, %v991
      %v1001 = vsel %vm705, %v989, %v993
      %v1002 = vsel %vm705, %v983, %v987
      %v1003 = vsel %vm705, %v985, %v989
      %v1004 = vsel %vm705, %v995, %v983
      %v1005 = vsel %vm705, %v997, %v985
      %1006 = vrot.lane.b32.xlu0 %v926, 126
      %v1007 = vpop.permute.xlu0 %1006
      %1008 = vrot.lane.b32.xlu0 %v930, 126
      %v1009 = vpop.permute.xlu0 %1008
      %1010 = vrot.lane.b32.xlu0 %v927, 126
      %v1011 = vpop.permute.xlu0 %1010
      %1012 = vrot.lane.b32.xlu0 %v931, 126
      %v1013 = vpop.permute.xlu0 %1012
      %1014 = vrot.lane.b32.xlu0 %v928, 126
      %v1015 = vpop.permute.xlu0 %1014
      %1016 = vrot.lane.b32.xlu0 %v932, 126
      %v1017 = vpop.permute.xlu0 %1016
      %1018 = vrot.lane.b32.xlu0 %v929, 126
      %v1019 = vpop.permute.xlu0 %1018
      %1020 = vrot.lane.b32.xlu0 %v933, 126
      %v1021 = vpop.permute.xlu0 %1020
      %v1022 = vsel %vm718, %v1015, %v1019
      %v1023 = vsel %vm718, %v1017, %v1021
      %v1024 = vsel %vm718, %v1011, %v1015
      %v1025 = vsel %vm718, %v1013, %v1017
      %v1026 = vsel %vm718, %v1007, %v1011
      %v1027 = vsel %vm718, %v1009, %v1013
      %v1028 = vsel %vm718, %v1019, %v1007
      %v1029 = vsel %vm718, %v1021, %v1009
      %v1030 = vpack.c.bf16 %v957, %v956
      %v1031 = vpack.c.bf16 %v955, %v954
      %v1032 = vpack.c.bf16 %v953, %v952
      %v1033 = vpack.c.bf16 %v951, %v950
      %v1034 = vpack.c.bf16 %v981, %v980
      %v1035 = vpack.c.bf16 %v979, %v978
      %v1036 = vpack.c.bf16 %v977, %v976
      %v1037 = vpack.c.bf16 %v975, %v974
      %v1038 = vpack.c.bf16 %v930, %v926
      %v1039 = vpack.c.bf16 %v931, %v927
      %v1040 = vpack.c.bf16 %v932, %v928
      %v1041 = vpack.c.bf16 %v933, %v929
      %v1042 = vpack.c.bf16 %v1003, %v1002
      %v1043 = vpack.c.bf16 %v1001, %v1000
      %v1044 = vpack.c.bf16 %v999, %v998
      %v1045 = vpack.c.bf16 %v1005, %v1004
      %v1046 = vpack.c.bf16 %v1027, %v1026
      %v1047 = vpack.c.bf16 %v1025, %v1024
      %v1048 = vpack.c.bf16 %v1023, %v1022
      %v1049 = vpack.c.bf16 %v1029, %v1028
      %v1050 = vld [vmem:[%s5 + $0x10] sm:$0xf]
      %v1051 = vld [vmem:[%s5 + $0x18] sm:$0xf]
      %v1052 = vld [vmem:[%s5 + $0x20] sm:$0xf]
      %v1053 = vld [vmem:[%s5 + $0x28] sm:$0xf]
      %v1054 = vld [vmem:[%s6 + $0x10] sm:$0xff]
      %v1055 = vld [vmem:[%s6 + $0x18] sm:$0xff]
      %v1056 = vld [vmem:[%s6 + $0x20] sm:$0xff]
      %v1057 = vld [vmem:[%s6 + $0x28] sm:$0xff]
      %1059 = vset.pattern.permute.xlu0 0
      %1060 = vperm.xlu0 %1059, %v1054
      %v1061 = vpop.permute.xlu0 %1060
      %1064 = vset.pattern.permute.xlu0 0
      %1065 = vperm.xlu0 %1064, %v1055
      %v1066 = vpop.permute.xlu0 %1065
      %1069 = vset.pattern.permute.xlu0 0
      %1070 = vperm.xlu0 %1069, %v1056
      %v1071 = vpop.permute.xlu0 %1070
      %1074 = vset.pattern.permute.xlu0 0
      %1075 = vperm.xlu0 %1074, %v1057
      %v1076 = vpop.permute.xlu0 %1075
      %v1082 = vunpack.c.l.b16 %v1050
      %v1083 = vunpack.c.l.b16 %v1051
      %v1084 = vunpack.c.l.b16 %v1052
      %v1085 = vunpack.c.l.b16 %v1053
      %v1086 = vpack.c.b16 %v1083, %v1082
      %v1087 = vpack.c.b16 %v1085, %v1084
      %vm1088 = vcmask 654336
      %v1090 = vsel %vm1088, %v1086, 0
      %v1093 = vsel %vm1088, %v1087, 0
      %1095 = vmatprep.subr.bf16.mxu0 %v1031
      %1096 = vmatpush1.bf16.msra.mxu0 %v1030
      %1097 = vmatprep.subr.bf16.mxu0 %v1035
      %1098 = vmatpush1.bf16.msra.mxu0 %v1034
      %1099 = vmatprep.subr.bf16.mxu0 %v1039
      %1100 = vmatpush1.bf16.msra.mxu0 %v1038
      %1101 = vmatprep.subr.bf16.mxu0 %v1043
      %1102 = vmatpush1.bf16.msra.mxu0 %v1042
      %1103 = vmatprep.subr.bf16.mxu0 %v1047
      %1104 = vmatpush1.bf16.msra.mxu0 %v1046
      %1105 = vmatprep.subr.bf16.mxu0 0
      %1106 = vmatpush1.bf16.msra.mxu0 0
      %1107 = vmatprep.subr.bf16.mxu0 0
      %1108 = vmatpush1.bf16.msra.mxu0 0
      %1109 = vmatprep.subr.bf16.mxu0 0
      %1110 = vmatpush1.bf16.msra.mxu0 0
      %1111 = vmatprep.subr.bf16.mxu0 0
      %1112 = vmatpush1.bf16.msra.mxu0 0
      %1113 = vmatprep.subr.bf16.mxu0 0
      %1114 = vmatpush1.bf16.msra.mxu0 0
      %1115 = vmatprep.subr.bf16.mxu0 0
      %1116 = vmatpush1.bf16.msra.mxu0 0
      %1117 = vmatprep.subr.bf16.mxu0 0
      %1118 = vmatpush1.bf16.msra.mxu0 0
      %1119 = vmatprep.subr.bf16.mxu0 0
      %1120 = vmatpush1.bf16.msra.mxu0 0
      %1121 = vmatprep.subr.bf16.mxu0 0
      %1122 = vmatpush1.bf16.msra.mxu0 0
      %1123 = vmatprep.subr.bf16.mxu0 0
      %1124 = vmatpush1.bf16.msra.mxu0 0
      %1125 = vmatprep.subr.bf16.mxu0 0
      %1126 = vmatpush1.bf16.msra.mxu0 0
      %1127 = vmatprep.mubr.bf16.mxu0 0
      %1128 = vmatmul.mubr.bf16.gmra.mrb[0].mxu0 %v1090
      %v1129 = vpop.f32.mrb[0].mxu0
      %v1130 = vadd.f32 %v1061, %v1129
      %v1131 = vpop.f32.mrb[0].mxu0
      %v1132 = vadd.f32 %v1061, %v1131
      %v1133 = vpop.f32.mrb[0].mxu0
      %v1134 = vadd.f32 %v1066, %v1133
      %v1135 = vpop.f32.mrb[0].mxu0
      %v1136 = vadd.f32 %v1066, %v1135
      %1137 = vmatprep.mubr.bf16.mxu0 0
      %1138 = vmatmul.mubr.bf16.gmra.mrb[0].mxu0 %v1093
      %v1139 = vpop.f32.mrb[0].mxu0
      %v1140 = vadd.f32 %v1071, %v1139
      %v1141 = vpop.f32.mrb[0].mxu0
      %v1142 = vadd.f32 %v1071, %v1141
      %v1143 = vpop.f32.mrb[0].mxu0
      %v1144 = vadd.f32 %v1076, %v1143
      %v1145 = vpop.f32.mrb[0].mxu0
      %v1146 = vadd.f32 %v1076, %v1145
      %1147 = vdwg.mxu0
      %1148 = vmatprep.subr.bf16.mxu0 %v1033
      %1149 = vmatpush1.bf16.msra.mxu0 %v1032
      %1150 = vmatprep.subr.bf16.mxu0 %v1037
      %1151 = vmatpush1.bf16.msra.mxu0 %v1036
      %1152 = vmatprep.subr.bf16.mxu0 %v1041
      %1153 = vmatpush1.bf16.msra.mxu0 %v1040
      %1154 = vmatprep.subr.bf16.mxu0 %v1045
      %1155 = vmatpush1.bf16.msra.mxu0 %v1044
      %1156 = vmatprep.subr.bf16.mxu0 %v1049
      %1157 = vmatpush1.bf16.msra.mxu0 %v1048
      %1158 = vmatprep.subr.bf16.mxu0 0
      %1159 = vmatpush1.bf16.msra.mxu0 0
      %1160 = vmatprep.subr.bf16.mxu0 0
      %1161 = vmatpush1.bf16.msra.mxu0 0
      %1162 = vmatprep.subr.bf16.mxu0 0
      %1163 = vmatpush1.bf16.msra.mxu0 0
      %1164 = vmatprep.subr.bf16.mxu0 0
      %1165 = vmatpush1.bf16.msra.mxu0 0
      %1166 = vmatprep.subr.bf16.mxu0 0
      %1167 = vmatpush1.bf16.msra.mxu0 0
      %1168 = vmatprep.subr.bf16.mxu0 0
      %1169 = vmatpush1.bf16.msra.mxu0 0
      %1170 = vmatprep.subr.bf16.mxu0 0
      %1171 = vmatpush1.bf16.msra.mxu0 0
      %1172 = vmatprep.subr.bf16.mxu0 0
      %1173 = vmatpush1.bf16.msra.mxu0 0
      %1174 = vmatprep.subr.bf16.mxu0 0
      %1175 = vmatpush1.bf16.msra.mxu0 0
      %1176 = vmatprep.subr.bf16.mxu0 0
      %1177 = vmatpush1.bf16.msra.mxu0 0
      %1178 = vmatprep.subr.bf16.mxu0 0
      %1179 = vmatpush1.bf16.msra.mxu0 0
      %1180 = vmatprep.mubr.bf16.mxu0 0
      %1181 = vmatmul.mubr.bf16.gmra.mrb[0].mxu0 %v1090
      %v1182 = vpop.f32.mrb[0].mxu0
      %v1183 = vadd.f32 %v1061, %v1182
      %v1184 = vpop.f32.mrb[0].mxu0
      %v1185 = vadd.f32 %v1061, %v1184
      %v1186 = vpop.f32.mrb[0].mxu0
      %v1187 = vadd.f32 %v1066, %v1186
      %v1188 = vpop.f32.mrb[0].mxu0
      %v1189 = vadd.f32 %v1066, %v1188
      %1190 = vmatprep.mubr.bf16.mxu0 0
      %1191 = vmatmul.mubr.bf16.gmra.mrb[0].mxu0 %v1093
      %v1192 = vpop.f32.mrb[0].mxu0
      %v1193 = vadd.f32 %v1071, %v1192
      %v1194 = vpop.f32.mrb[0].mxu0
      %v1195 = vadd.f32 %v1071, %v1194
      %v1196 = vpop.f32.mrb[0].mxu0
      %v1197 = vadd.f32 %v1076, %v1196
      %v1198 = vpop.f32.mrb[0].mxu0
      %v1199 = vadd.f32 %v1076, %v1198
      %1200 = vdwg.mxu0
      %v1201 = vmax.f32 %v1130, 0.0
      %v1202 = vmax.f32 %v1132, 0.0
      %v1203 = vmax.f32 %v1183, 0.0
      %v1204 = vmax.f32 %v1185, 0.0
      %v1205 = vmax.f32 %v1134, 0.0
      %v1206 = vmax.f32 %v1136, 0.0
      %v1207 = vmax.f32 %v1187, 0.0
      %v1208 = vmax.f32 %v1189, 0.0
      %v1209 = vmax.f32 %v1140, 0.0
      %v1210 = vmax.f32 %v1142, 0.0
      %v1211 = vmax.f32 %v1193, 0.0
      %v1212 = vmax.f32 %v1195, 0.0
      %v1213 = vmax.f32 %v1144, 0.0
      %v1214 = vmax.f32 %v1146, 0.0
      %v1215 = vmax.f32 %v1197, 0.0
      %v1216 = vmax.f32 %v1199, 0.0
      %v1217 = vmul.f32 %v1201, %v648
      %v1218 = vmul.f32 %v1202, %v652
      %v1219 = vmul.f32 %v1203, %v656
      %v1220 = vmul.f32 %v1204, %v660
      %v1221 = vmul.f32 %v1205, %v648
      %v1222 = vmul.f32 %v1206, %v652
      %v1223 = vmul.f32 %v1207, %v656
      %v1224 = vmul.f32 %v1208, %v660
      %v1225 = vmul.f32 %v1209, %v648
      %v1226 = vmul.f32 %v1210, %v652
      %v1227 = vmul.f32 %v1211, %v656
      %v1228 = vmul.f32 %v1212, %v660
      %v1229 = vmul.f32 %v1213, %v648
      %v1230 = vmul.f32 %v1214, %v652
      %v1231 = vmul.f32 %v1215, %v656
      %v1232 = vmul.f32 %v1216, %v660
      %1233 = vrot.lane.b32.xlu0 %v1217, 2
      %v1234 = vpop.permute.xlu0 %1233
      %1235 = vrot.lane.b32.xlu0 %v1221, 2
      %v1236 = vpop.permute.xlu0 %1235
      %1237 = vrot.lane.b32.xlu0 %v1225, 2
      %v1238 = vpop.permute.xlu0 %1237
      %1239 = vrot.lane.b32.xlu0 %v1229, 2
      %v1240 = vpop.permute.xlu0 %1239
      %1241 = vrot.lane.b32.xlu0 %v1218, 2
      %v1242 = vpop.permute.xlu0 %1241
      %1243 = vrot.lane.b32.xlu0 %v1222, 2
      %v1244 = vpop.permute.xlu0 %1243
      %1245 = vrot.lane.b32.xlu0 %v1226, 2
      %v1246 = vpop.permute.xlu0 %1245
      %1247 = vrot.lane.b32.xlu0 %v1230, 2
      %v1248 = vpop.permute.xlu0 %1247
      %1249 = vrot.lane.b32.xlu0 %v1219, 2
      %v1250 = vpop.permute.xlu0 %1249
      %1251 = vrot.lane.b32.xlu0 %v1223, 2
      %v1252 = vpop.permute.xlu0 %1251
      %1253 = vrot.lane.b32.xlu0 %v1227, 2
      %v1254 = vpop.permute.xlu0 %1253
      %1255 = vrot.lane.b32.xlu0 %v1231, 2
      %v1256 = vpop.permute.xlu0 %1255
      %1257 = vrot.lane.b32.xlu0 %v1220, 2
      %v1258 = vpop.permute.xlu0 %1257
      %1259 = vrot.lane.b32.xlu0 %v1224, 2
      %v1260 = vpop.permute.xlu0 %1259
      %1261 = vrot.lane.b32.xlu0 %v1228, 2
      %v1262 = vpop.permute.xlu0 %1261
      %1263 = vrot.lane.b32.xlu0 %v1232, 2
      %v1264 = vpop.permute.xlu0 %1263
      %v1265 = vsel %vm679, %v1250, %v1258
      %v1266 = vsel %vm679, %v1252, %v1260
      %v1267 = vsel %vm679, %v1254, %v1262
      %v1268 = vsel %vm679, %v1256, %v1264
      %v1269 = vsel %vm679, %v1242, %v1250
      %v1270 = vsel %vm679, %v1244, %v1252
      %v1271 = vsel %vm679, %v1246, %v1254
      %v1272 = vsel %vm679, %v1248, %v1256
      %v1273 = vsel %vm679, %v1234, %v1242
      %v1274 = vsel %vm679, %v1236, %v1244
      %v1275 = vsel %vm679, %v1238, %v1246
      %v1276 = vsel %vm679, %v1240, %v1248
      %v1277 = vsel %vm679, %v1258, %v1234
      %v1278 = vsel %vm679, %v1260, %v1236
      %v1279 = vsel %vm679, %v1262, %v1238
      %v1280 = vsel %vm679, %v1264, %v1240
      %1281 = vrot.lane.b32.xlu0 %v1217, 1
      %v1282 = vpop.permute.xlu0 %1281
      %1283 = vrot.lane.b32.xlu0 %v1221, 1
      %v1284 = vpop.permute.xlu0 %1283
      %1285 = vrot.lane.b32.xlu0 %v1225, 1
      %v1286 = vpop.permute.xlu0 %1285
      %1287 = vrot.lane.b32.xlu0 %v1229, 1
      %v1288 = vpop.permute.xlu0 %1287
      %1289 = vrot.lane.b32.xlu0 %v1218, 1
      %v1290 = vpop.permute.xlu0 %1289
      %1291 = vrot.lane.b32.xlu0 %v1222, 1
      %v1292 = vpop.permute.xlu0 %1291
      %1293 = vrot.lane.b32.xlu0 %v1226, 1
      %v1294 = vpop.permute.xlu0 %1293
      %1295 = vrot.lane.b32.xlu0 %v1230, 1
      %v1296 = vpop.permute.xlu0 %1295
      %1297 = vrot.lane.b32.xlu0 %v1219, 1
      %v1298 = vpop.permute.xlu0 %1297
      %1299 = vrot.lane.b32.xlu0 %v1223, 1
      %v1300 = vpop.permute.xlu0 %1299
      %1301 = vrot.lane.b32.xlu0 %v1227, 1
      %v1302 = vpop.permute.xlu0 %1301
      %1303 = vrot.lane.b32.xlu0 %v1231, 1
      %v1304 = vpop.permute.xlu0 %1303
      %1305 = vrot.lane.b32.xlu0 %v1220, 1
      %v1306 = vpop.permute.xlu0 %1305
      %1307 = vrot.lane.b32.xlu0 %v1224, 1
      %v1308 = vpop.permute.xlu0 %1307
      %1309 = vrot.lane.b32.xlu0 %v1228, 1
      %v1310 = vpop.permute.xlu0 %1309
      %1311 = vrot.lane.b32.xlu0 %v1232, 1
      %v1312 = vpop.permute.xlu0 %1311
      %v1313 = vsel %vm692, %v1298, %v1306
      %v1314 = vsel %vm692, %v1300, %v1308
      %v1315 = vsel %vm692, %v1302, %v1310
      %v1316 = vsel %vm692, %v1304, %v1312
      %v1317 = vsel %vm692, %v1290, %v1298
      %v1318 = vsel %vm692, %v1292, %v1300
      %v1319 = vsel %vm692, %v1294, %v1302
      %v1320 = vsel %vm692, %v1296, %v1304
      %v1321 = vsel %vm692, %v1282, %v1290
      %v1322 = vsel %vm692, %v1284, %v1292
      %v1323 = vsel %vm692, %v1286, %v1294
      %v1324 = vsel %vm692, %v1288, %v1296
      %v1325 = vsel %vm692, %v1306, %v1282
      %v1326 = vsel %vm692, %v1308, %v1284
      %v1327 = vsel %vm692, %v1310, %v1286
      %v1328 = vsel %vm692, %v1312, %v1288
      %1329 = vrot.lane.b32.xlu0 %v1217, 127
      %v1330 = vpop.permute.xlu0 %1329
      %1331 = vrot.lane.b32.xlu0 %v1221, 127
      %v1332 = vpop.permute.xlu0 %1331
      %1333 = vrot.lane.b32.xlu0 %v1225, 127
      %v1334 = vpop.permute.xlu0 %1333
      %1335 = vrot.lane.b32.xlu0 %v1229, 127
      %v1336 = vpop.permute.xlu0 %1335
      %1337 = vrot.lane.b32.xlu0 %v1218, 127
      %v1338 = vpop.permute.xlu0 %1337
      %1339 = vrot.lane.b32.xlu0 %v1222, 127
      %v1340 = vpop.permute.xlu0 %1339
      %1341 = vrot.lane.b32.xlu0 %v1226, 127
      %v1342 = vpop.permute.xlu0 %1341
      %1343 = vrot.lane.b32.xlu0 %v1230, 127
      %v1344 = vpop.permute.xlu0 %1343
      %1345 = vrot.lane.b32.xlu0 %v1219, 127
      %v1346 = vpop.permute.xlu0 %1345
      %1347 = vrot.lane.b32.xlu0 %v1223, 127
      %v1348 = vpop.permute.xlu0 %1347
      %1349 = vrot.lane.b32.xlu0 %v1227, 127
      %v1350 = vpop.permute.xlu0 %1349
      %1351 = vrot.lane.b32.xlu0 %v1231, 127
      %v1352 = vpop.permute.xlu0 %1351
      %1353 = vrot.lane.b32.xlu0 %v1220, 127
      %v1354 = vpop.permute.xlu0 %1353
      %1355 = vrot.lane.b32.xlu0 %v1224, 127
      %v1356 = vpop.permute.xlu0 %1355
      %1357 = vrot.lane.b32.xlu0 %v1228, 127
      %v1358 = vpop.permute.xlu0 %1357
      %1359 = vrot.lane.b32.xlu0 %v1232, 127
      %v1360 = vpop.permute.xlu0 %1359
      %v1361 = vsel %vm705, %v1346, %v1354
      %v1362 = vsel %vm705, %v1348, %v1356
      %v1363 = vsel %vm705, %v1350, %v1358
      %v1364 = vsel %vm705, %v1352, %v1360
      %v1365 = vsel %vm705, %v1338, %v1346
      %v1366 = vsel %vm705, %v1340, %v1348
      %v1367 = vsel %vm705, %v1342, %v1350
      %v1368 = vsel %vm705, %v1344, %v1352
      %v1369 = vsel %vm705, %v1330, %v1338
      %v1370 = vsel %vm705, %v1332, %v1340
      %v1371 = vsel %vm705, %v1334, %v1342
      %v1372 = vsel %vm705, %v1336, %v1344
      %v1373 = vsel %vm705, %v1354, %v1330
      %v1374 = vsel %vm705, %v1356, %v1332
      %v1375 = vsel %vm705, %v1358, %v1334
      %v1376 = vsel %vm705, %v1360, %v1336
      %1377 = vrot.lane.b32.xlu0 %v1217, 126
      %v1378 = vpop.permute.xlu0 %1377
      %1379 = vrot.lane.b32.xlu0 %v1221, 126
      %v1380 = vpop.permute.xlu0 %1379
      %1381 = vrot.lane.b32.xlu0 %v1225, 126
      %v1382 = vpop.permute.xlu0 %1381
      %1383 = vrot.lane.b32.xlu0 %v1229, 126
      %v1384 = vpop.permute.xlu0 %1383
      %1385 = vrot.lane.b32.xlu0 %v1218, 126
      %v1386 = vpop.permute.xlu0 %1385
      %1387 = vrot.lane.b32.xlu0 %v1222, 126
      %v1388 = vpop.permute.xlu0 %1387
      %1389 = vrot.lane.b32.xlu0 %v1226, 126
      %v1390 = vpop.permute.xlu0 %1389
      %1391 = vrot.lane.b32.xlu0 %v1230, 126
      %v1392 = vpop.permute.xlu0 %1391
      %1393 = vrot.lane.b32.xlu0 %v1219, 126
      %v1394 = vpop.permute.xlu0 %1393
      %1395 = vrot.lane.b32.xlu0 %v1223, 126
      %v1396 = vpop.permute.xlu0 %1395
      %1397 = vrot.lane.b32.xlu0 %v1227, 126
      %v1398 = vpop.permute.xlu0 %1397
      %1399 = vrot.lane.b32.xlu0 %v1231, 126
      %v1400 = vpop.permute.xlu0 %1399
      %1401 = vrot.lane.b32.xlu0 %v1220, 126
      %v1402 = vpop.permute.xlu0 %1401
      %1403 = vrot.lane.b32.xlu0 %v1224, 126
      %v1404 = vpop.permute.xlu0 %1403
      %1405 = vrot.lane.b32.xlu0 %v1228, 126
      %v1406 = vpop.permute.xlu0 %1405
      %1407 = vrot.lane.b32.xlu0 %v1232, 126
      %v1408 = vpop.permute.xlu0 %1407
      %v1409 = vsel %vm718, %v1394, %v1402
      %v1410 = vsel %vm718, %v1396, %v1404
      %v1411 = vsel %vm718, %v1398, %v1406
      %v1412 = vsel %vm718, %v1400, %v1408
      %v1413 = vsel %vm718, %v1386, %v1394
      %v1414 = vsel %vm718, %v1388, %v1396
      %v1415 = vsel %vm718, %v1390, %v1398
      %v1416 = vsel %vm718, %v1392, %v1400
      %v1417 = vsel %vm718, %v1378, %v1386
      %v1418 = vsel %vm718, %v1380, %v1388
      %v1419 = vsel %vm718, %v1382, %v1390
      %v1420 = vsel %vm718, %v1384, %v1392
      %v1421 = vsel %vm718, %v1402, %v1378
      %v1422 = vsel %vm718, %v1404, %v1380
      %v1423 = vsel %vm718, %v1406, %v1382
      %v1424 = vsel %vm718, %v1408, %v1384
      %v1425 = vpack.c.bf16 %v1278, %v1277
      %v1426 = vpack.c.bf16 %v1274, %v1273
      %v1427 = vpack.c.bf16 %v1270, %v1269
      %v1428 = vpack.c.bf16 %v1266, %v1265
      %v1429 = vpack.c.bf16 %v1280, %v1279
      %v1430 = vpack.c.bf16 %v1276, %v1275
      %v1431 = vpack.c.bf16 %v1272, %v1271
      %v1432 = vpack.c.bf16 %v1268, %v1267
      %v1433 = vpack.c.bf16 %v1326, %v1325
      %v1434 = vpack.c.bf16 %v1322, %v1321
      %v1435 = vpack.c.bf16 %v1318, %v1317
      %v1436 = vpack.c.bf16 %v1314, %v1313
      %v1437 = vpack.c.bf16 %v1328, %v1327
      %v1438 = vpack.c.bf16 %v1324, %v1323
      %v1439 = vpack.c.bf16 %v1320, %v1319
      %v1440 = vpack.c.bf16 %v1316, %v1315
      %v1441 = vpack.c.bf16 %v1221, %v1217
      %v1442 = vpack.c.bf16 %v1222, %v1218
      %v1443 = vpack.c.bf16 %v1223, %v1219
      %v1444 = vpack.c.bf16 %v1224, %v1220
      %v1445 = vpack.c.bf16 %v1229, %v1225
      %v1446 = vpack.c.bf16 %v1230, %v1226
      %v1447 = vpack.c.bf16 %v1231, %v1227
      %v1448 = vpack.c.bf16 %v1232, %v1228
      %v1449 = vpack.c.bf16 %v1370, %v1369
      %v1450 = vpack.c.bf16 %v1366, %v1365
      %v1451 = vpack.c.bf16 %v1362, %v1361
      %v1452 = vpack.c.bf16 %v1374, %v1373
      %v1453 = vpack.c.bf16 %v1372, %v1371
      %v1454 = vpack.c.bf16 %v1368, %v1367
      %v1455 = vpack.c.bf16 %v1364, %v1363
      %v1456 = vpack.c.bf16 %v1376, %v1375
      %v1457 = vpack.c.bf16 %v1418, %v1417
      %v1458 = vpack.c.bf16 %v1414, %v1413
      %v1459 = vpack.c.bf16 %v1410, %v1409
      %v1460 = vpack.c.bf16 %v1422, %v1421
      %v1461 = vpack.c.bf16 %v1420, %v1419
      %v1462 = vpack.c.bf16 %v1416, %v1415
      %v1463 = vpack.c.bf16 %v1412, %v1411
      %v1464 = vpack.c.bf16 %v1424, %v1423
      %v1465 = vld [vmem:[%s5 + $0x30] sm:$0xff]
      %v1466 = vld [vmem:[%s5 + $0x38] sm:$0xff]
      %v1467 = vld [vmem:[%s6 + $0x30] sm:$0xff]
      %v1468 = vld [vmem:[%s6 + $0x38] sm:$0xff]
      %1470 = vset.pattern.permute.xlu0 0
      %1471 = vperm.xlu0 %1470, %v1467
      %v1472 = vpop.permute.xlu0 %1471
      %1475 = vset.pattern.permute.xlu0 0
      %1476 = vperm.xlu0 %1475, %v1468
      %v1477 = vpop.permute.xlu0 %1476
      %v1481 = vunpack.c.l.b16 %v1465
      %v1482 = vunpack.c.h.b16 %v1465
      %v1483 = vunpack.c.l.b16 %v1466
      %v1484 = vunpack.c.h.b16 %v1466
      %v1485 = vpack.c.b16 %v1483, %v1481
      %v1486 = vpack.c.b16 %v1484, %v1482
      %vm1488 = vcmask 261120
      %v1490 = vsel %vm1488, %v1486, 0
      %1492 = vmatprep.subr.bf16.mxu0 %v1426
      %1493 = vmatpush1.bf16.msra.mxu0 %v1425
      %1494 = vmatprep.subr.bf16.mxu0 %v1430
      %1495 = vmatpush1.bf16.msra.mxu0 %v1429
      %1496 = vmatprep.subr.bf16.mxu0 %v1434
      %1497 = vmatpush1.bf16.msra.mxu0 %v1433
      %1498 = vmatprep.subr.bf16.mxu0 %v1438
      %1499 = vmatpush1.bf16.msra.mxu0 %v1437
      %1500 = vmatprep.subr.bf16.mxu0 %v1442
      %1501 = vmatpush1.bf16.msra.mxu0 %v1441
      %1502 = vmatprep.subr.bf16.mxu0 %v1446
      %1503 = vmatpush1.bf16.msra.mxu0 %v1445
      %1504 = vmatprep.subr.bf16.mxu0 %v1450
      %1505 = vmatpush1.bf16.msra.mxu0 %v1449
      %1506 = vmatprep.subr.bf16.mxu0 %v1454
      %1507 = vmatpush1.bf16.msra.mxu0 %v1453
      %1508 = vmatprep.subr.bf16.mxu0 %v1458
      %1509 = vmatpush1.bf16.msra.mxu0 %v1457
      %1510 = vmatprep.subr.bf16.mxu0 %v1462
      %1511 = vmatpush1.bf16.msra.mxu0 %v1461
      %1512 = vmatprep.subr.bf16.mxu0 0
      %1513 = vmatpush1.bf16.msra.mxu0 0
      %1514 = vmatprep.subr.bf16.mxu0 0
      %1515 = vmatpush1.bf16.msra.mxu0 0
      %1516 = vmatprep.subr.bf16.mxu0 0
      %1517 = vmatpush1.bf16.msra.mxu0 0
      %1518 = vmatprep.subr.bf16.mxu0 0
      %1519 = vmatpush1.bf16.msra.mxu0 0
      %1520 = vmatprep.subr.bf16.mxu0 0
      %1521 = vmatpush1.bf16.msra.mxu0 0
      %1522 = vmatprep.subr.bf16.mxu0 0
      %1523 = vmatpush1.bf16.msra.mxu0 0
      %1524 = vmatprep.mubr.bf16.mxu0 %v1490
      %1525 = vmatmul.mubr.bf16.gmra.mrb[0].mxu0 %v1485
      %v1526 = vpop.f32.mrb[0].mxu0
      %v1527 = vadd.f32 %v1472, %v1526
      %v1528 = vpop.f32.mrb[0].mxu0
      %v1529 = vadd.f32 %v1472, %v1528
      %v1530 = vpop.f32.mrb[0].mxu0
      %v1531 = vadd.f32 %v1477, %v1530
      %v1532 = vpop.f32.mrb[0].mxu0
      %v1533 = vadd.f32 %v1477, %v1532
      %1534 = vdwg.mxu0
      %1535 = vmatprep.subr.bf16.mxu0 %v1428
      %1536 = vmatpush1.bf16.msra.mxu0 %v1427
      %1537 = vmatprep.subr.bf16.mxu0 %v1432
      %1538 = vmatpush1.bf16.msra.mxu0 %v1431
      %1539 = vmatprep.subr.bf16.mxu0 %v1436
      %1540 = vmatpush1.bf16.msra.mxu0 %v1435
      %1541 = vmatprep.subr.bf16.mxu0 %v1440
      %1542 = vmatpush1.bf16.msra.mxu0 %v1439
      %1543 = vmatprep.subr.bf16.mxu0 %v1444
      %1544 = vmatpush1.bf16.msra.mxu0 %v1443
      %1545 = vmatprep.subr.bf16.mxu0 %v1448
      %1546 = vmatpush1.bf16.msra.mxu0 %v1447
      %1547 = vmatprep.subr.bf16.mxu0 %v1452
      %1548 = vmatpush1.bf16.msra.mxu0 %v1451
      %1549 = vmatprep.subr.bf16.mxu0 %v1456
      %1550 = vmatpush1.bf16.msra.mxu0 %v1455
      %1551 = vmatprep.subr.bf16.mxu0 %v1460
      %1552 = vmatpush1.bf16.msra.mxu0 %v1459
      %1553 = vmatprep.subr.bf16.mxu0 %v1464
      %1554 = vmatpush1.bf16.msra.mxu0 %v1463
      %1555 = vmatprep.subr.bf16.mxu0 0
      %1556 = vmatpush1.bf16.msra.mxu0 0
      %1557 = vmatprep.subr.bf16.mxu0 0
      %1558 = vmatpush1.bf16.msra.mxu0 0
      %1559 = vmatprep.subr.bf16.mxu0 0
      %1560 = vmatpush1.bf16.msra.mxu0 0
      %1561 = vmatprep.subr.bf16.mxu0 0
      %1562 = vmatpush1.bf16.msra.mxu0 0
      %1563 = vmatprep.subr.bf16.mxu0 0
      %1564 = vmatpush1.bf16.msra.mxu0 0
      %1565 = vmatprep.subr.bf16.mxu0 0
      %1566 = vmatpush1.bf16.msra.mxu0 0
      %1567 = vmatprep.mubr.bf16.mxu0 %v1490
      %1568 = vmatmul.mubr.bf16.gmra.mrb[0].mxu0 %v1485
      %v1569 = vpop.f32.mrb[0].mxu0
      %v1570 = vadd.f32 %v1472, %v1569
      %v1571 = vpop.f32.mrb[0].mxu0
      %v1572 = vadd.f32 %v1472, %v1571
      %v1573 = vpop.f32.mrb[0].mxu0
      %v1574 = vadd.f32 %v1477, %v1573
      %v1575 = vpop.f32.mrb[0].mxu0
      %v1576 = vadd.f32 %v1477, %v1575
      %1577 = vdwg.mxu0
      %v1578 = vmax.f32 %v1527, 0.0
      %v1579 = vmax.f32 %v1529, 0.0
      %v1580 = vmax.f32 %v1570, 0.0
      %v1581 = vmax.f32 %v1572, 0.0
      %v1582 = vmax.f32 %v1531, 0.0
      %v1583 = vmax.f32 %v1533, 0.0
      %v1584 = vmax.f32 %v1574, 0.0
      %v1585 = vmax.f32 %v1576, 0.0
      %v1586 = vmul.f32 %v1578, %v648
      %v1587 = vmul.f32 %v1579, %v652
      %v1588 = vmul.f32 %v1580, %v656
      %v1589 = vmul.f32 %v1581, %v660
      %v1590 = vmul.f32 %v1582, %v648
      %v1591 = vmul.f32 %v1583, %v652
      %v1592 = vmul.f32 %v1584, %v656
      %v1593 = vmul.f32 %v1585, %v660
      %1594 = vrot.lane.b32.xlu0 %v1586, 2
      %v1595 = vpop.permute.xlu0 %1594
      %1596 = vrot.lane.b32.xlu0 %v1590, 2
      %v1597 = vpop.permute.xlu0 %1596
      %1598 = vrot.lane.b32.xlu0 %v1587, 2
      %v1599 = vpop.permute.xlu0 %1598
      %1600 = vrot.lane.b32.xlu0 %v1591, 2
      %v1601 = vpop.permute.xlu0 %1600
      %1602 = vrot.lane.b32.xlu0 %v1588, 2
      %v1603 = vpop.permute.xlu0 %1602
      %1604 = vrot.lane.b32.xlu0 %v1592, 2
      %v1605 = vpop.permute.xlu0 %1604
      %1606 = vrot.lane.b32.xlu0 %v1589, 2
      %v1607 = vpop.permute.xlu0 %1606
      %1608 = vrot.lane.b32.xlu0 %v1593, 2
      %v1609 = vpop.permute.xlu0 %1608
      %v1610 = vsel %vm679, %v1603, %v1607
      %v1611 = vsel %vm679, %v1605, %v1609
      %v1612 = vsel %vm679, %v1599, %v1603
      %v1613 = vsel %vm679, %v1601, %v1605
      %v1614 = vsel %vm679, %v1595, %v1599
      %v1615 = vsel %vm679, %v1597, %v1601
      %v1616 = vsel %vm679, %v1607, %v1595
      %v1617 = vsel %vm679, %v1609, %v1597
      %1618 = vrot.lane.b32.xlu0 %v1586, 1
      %v1619 = vpop.permute.xlu0 %1618
      %1620 = vrot.lane.b32.xlu0 %v1590, 1
      %v1621 = vpop.permute.xlu0 %1620
      %1622 = vrot.lane.b32.xlu0 %v1587, 1
      %v1623 = vpop.permute.xlu0 %1622
      %1624 = vrot.lane.b32.xlu0 %v1591, 1
      %v1625 = vpop.permute.xlu0 %1624
      %1626 = vrot.lane.b32.xlu0 %v1588, 1
      %v1627 = vpop.permute.xlu0 %1626
      %1628 = vrot.lane.b32.xlu0 %v1592, 1
      %v1629 = vpop.permute.xlu0 %1628
      %1630 = vrot.lane.b32.xlu0 %v1589, 1
      %v1631 = vpop.permute.xlu0 %1630
      %1632 = vrot.lane.b32.xlu0 %v1593, 1
      %v1633 = vpop.permute.xlu0 %1632
      %v1634 = vsel %vm692, %v1627, %v1631
      %v1635 = vsel %vm692, %v1629, %v1633
      %v1636 = vsel %vm692, %v1623, %v1627
      %v1637 = vsel %vm692, %v1625, %v1629
      %v1638 = vsel %vm692, %v1619, %v1623
      %v1639 = vsel %vm692, %v1621, %v1625
      %v1640 = vsel %vm692, %v1631, %v1619
      %v1641 = vsel %vm692, %v1633, %v1621
      %1642 = vrot.lane.b32.xlu0 %v1586, 127
      %v1643 = vpop.permute.xlu0 %1642
      %1644 = vrot.lane.b32.xlu0 %v1590, 127
      %v1645 = vpop.permute.xlu0 %1644
      %1646 = vrot.lane.b32.xlu0 %v1587, 127
      %v1647 = vpop.permute.xlu0 %1646
      %1648 = vrot.lane.b32.xlu0 %v1591, 127
      %v1649 = vpop.permute.xlu0 %1648
      %1650 = vrot.lane.b32.xlu0 %v1588, 127
      %v1651 = vpop.permute.xlu0 %1650
      %1652 = vrot.lane.b32.xlu0 %v1592, 127
      %v1653 = vpop.permute.xlu0 %1652
      %1654 = vrot.lane.b32.xlu0 %v1589, 127
      %v1655 = vpop.permute.xlu0 %1654
      %1656 = vrot.lane.b32.xlu0 %v1593, 127
      %v1657 = vpop.permute.xlu0 %1656
      %v1658 = vsel %vm705, %v1651, %v1655
      %v1659 = vsel %vm705, %v1653, %v1657
      %v1660 = vsel %vm705, %v1647, %v1651
      %v1661 = vsel %vm705, %v1649, %v1653
      %v1662 = vsel %vm705, %v1643, %v1647
      %v1663 = vsel %vm705, %v1645, %v1649
      %v1664 = vsel %vm705, %v1655, %v1643
      %v1665 = vsel %vm705, %v1657, %v1645
      %1666 = vrot.lane.b32.xlu0 %v1586, 126
      %v1667 = vpop.permute.xlu0 %1666
      %1668 = vrot.lane.b32.xlu0 %v1590, 126
      %v1669 = vpop.permute.xlu0 %1668
      %1670 = vrot.lane.b32.xlu0 %v1587, 126
      %v1671 = vpop.permute.xlu0 %1670
      %1672 = vrot.lane.b32.xlu0 %v1591, 126
      %v1673 = vpop.permute.xlu0 %1672
      %1674 = vrot.lane.b32.xlu0 %v1588, 126
      %v1675 = vpop.permute.xlu0 %1674
      %1676 = vrot.lane.b32.xlu0 %v1592, 126
      %v1677 = vpop.permute.xlu0 %1676
      %1678 = vrot.lane.b32.xlu0 %v1589, 126
      %v1679 = vpop.permute.xlu0 %1678
      %1680 = vrot.lane.b32.xlu0 %v1593, 126
      %v1681 = vpop.permute.xlu0 %1680
      %v1682 = vsel %vm718, %v1675, %v1679
      %v1683 = vsel %vm718, %v1677, %v1681
      %v1684 = vsel %vm718, %v1671, %v1675
      %v1685 = vsel %vm718, %v1673, %v1677
      %v1686 = vsel %vm718, %v1667, %v1671
      %v1687 = vsel %vm718, %v1669, %v1673
      %v1688 = vsel %vm718, %v1679, %v1667
      %v1689 = vsel %vm718, %v1681, %v1669
      %v1690 = vpack.c.bf16 %v1617, %v1616
      %v1691 = vpack.c.bf16 %v1615, %v1614
      %v1692 = vpack.c.bf16 %v1613, %v1612
      %v1693 = vpack.c.bf16 %v1611, %v1610
      %v1694 = vpack.c.bf16 %v1641, %v1640
      %v1695 = vpack.c.bf16 %v1639, %v1638
      %v1696 = vpack.c.bf16 %v1637, %v1636
      %v1697 = vpack.c.bf16 %v1635, %v1634
      %v1698 = vpack.c.bf16 %v1590, %v1586
      %v1699 = vpack.c.bf16 %v1591, %v1587
      %v1700 = vpack.c.bf16 %v1592, %v1588
      %v1701 = vpack.c.bf16 %v1593, %v1589
      %v1702 = vpack.c.bf16 %v1663, %v1662
      %v1703 = vpack.c.bf16 %v1661, %v1660
      %v1704 = vpack.c.bf16 %v1659, %v1658
      %v1705 = vpack.c.bf16 %v1665, %v1664
      %v1706 = vpack.c.bf16 %v1687, %v1686
      %v1707 = vpack.c.bf16 %v1685, %v1684
      %v1708 = vpack.c.bf16 %v1683, %v1682
      %v1709 = vpack.c.bf16 %v1689, %v1688
      %v1710 = vld [vmem:[%s5 + $0x40] sm:$0x1]
      %v1711 = vld [vmem:[%s6 + $0x40] sm:$0x3]
      %1713 = vset.pattern.permute.xlu0 0
      %1714 = vperm.xlu0 %1713, %v1711
      %v1715 = vpop.permute.xlu0 %1714
      %v1718 = vsel %vm1088, %v1710, 0
      %1720 = vmatprep.subr.bf16.mxu0 %v1691
      %1721 = vmatpush1.bf16.msra.mxu0 %v1690
      %1722 = vmatprep.subr.bf16.mxu0 %v1695
      %1723 = vmatpush1.bf16.msra.mxu0 %v1694
      %1724 = vmatprep.subr.bf16.mxu0 %v1699
      %1725 = vmatpush1.bf16.msra.mxu0 %v1698
      %1726 = vmatprep.subr.bf16.mxu0 %v1703
      %1727 = vmatpush1.bf16.msra.mxu0 %v1702
      %1728 = vmatprep.subr.bf16.mxu0 %v1707
      %1729 = vmatpush1.bf16.msra.mxu0 %v1706
      %1730 = vmatprep.subr.bf16.mxu0 0
      %1731 = vmatpush1.bf16.msra.mxu0 0
      %1732 = vmatprep.subr.bf16.mxu0 0
      %1733 = vmatpush1.bf16.msra.mxu0 0
      %1734 = vmatprep.subr.bf16.mxu0 0
      %1735 = vmatpush1.bf16.msra.mxu0 0
      %1736 = vmatprep.subr.bf16.mxu0 0
      %1737 = vmatpush1.bf16.msra.mxu0 0
      %1738 = vmatprep.subr.bf16.mxu0 0
      %1739 = vmatpush1.bf16.msra.mxu0 0
      %1740 = vmatprep.subr.bf16.mxu0 0
      %1741 = vmatpush1.bf16.msra.mxu0 0
      %1742 = vmatprep.subr.bf16.mxu0 0
      %1743 = vmatpush1.bf16.msra.mxu0 0
      %1744 = vmatprep.subr.bf16.mxu0 0
      %1745 = vmatpush1.bf16.msra.mxu0 0
      %1746 = vmatprep.subr.bf16.mxu0 0
      %1747 = vmatpush1.bf16.msra.mxu0 0
      %1748 = vmatprep.subr.bf16.mxu0 0
      %1749 = vmatpush1.bf16.msra.mxu0 0
      %1750 = vmatprep.subr.bf16.mxu0 0
      %1751 = vmatpush1.bf16.msra.mxu0 0
      %1752 = vmatprep.mubr.bf16.mxu0 0
      %1753 = vmatmul.mubr.bf16.gmra.mrb[0].mxu0 %v1718
      %v1754 = vpop.f32.mrb[0].mxu0
      %v1755 = vadd.f32 %v1715, %v1754
      %v1756 = vpop.f32.mrb[0].mxu0
      %v1757 = vadd.f32 %v1715, %v1756
      %v1758 = vpop.f32.mrb[0].mxu0
      %v1759 = vpop.f32.mrb[0].mxu0
      %1760 = vdwg.mxu0
      %1761 = vmatprep.subr.bf16.mxu0 %v1693
      %1762 = vmatpush1.bf16.msra.mxu0 %v1692
      %1763 = vmatprep.subr.bf16.mxu0 %v1697
      %1764 = vmatpush1.bf16.msra.mxu0 %v1696
      %1765 = vmatprep.subr.bf16.mxu0 %v1701
      %1766 = vmatpush1.bf16.msra.mxu0 %v1700
      %1767 = vmatprep.subr.bf16.mxu0 %v1705
      %1768 = vmatpush1.bf16.msra.mxu0 %v1704
      %1769 = vmatprep.subr.bf16.mxu0 %v1709
      %1770 = vmatpush1.bf16.msra.mxu0 %v1708
      %1771 = vmatprep.subr.bf16.mxu0 0
      %1772 = vmatpush1.bf16.msra.mxu0 0
      %1773 = vmatprep.subr.bf16.mxu0 0
      %1774 = vmatpush1.bf16.msra.mxu0 0
      %1775 = vmatprep.subr.bf16.mxu0 0
      %1776 = vmatpush1.bf16.msra.mxu0 0
      %1777 = vmatprep.subr.bf16.mxu0 0
      %1778 = vmatpush1.bf16.msra.mxu0 0
      %1779 = vmatprep.subr.bf16.mxu0 0
      %1780 = vmatpush1.bf16.msra.mxu0 0
      %1781 = vmatprep.subr.bf16.mxu0 0
      %1782 = vmatpush1.bf16.msra.mxu0 0
      %1783 = vmatprep.subr.bf16.mxu0 0
      %1784 = vmatpush1.bf16.msra.mxu0 0
      %1785 = vmatprep.subr.bf16.mxu0 0
      %1786 = vmatpush1.bf16.msra.mxu0 0
      %1787 = vmatprep.subr.bf16.mxu0 0
      %1788 = vmatpush1.bf16.msra.mxu0 0
      %1789 = vmatprep.subr.bf16.mxu0 0
      %1790 = vmatpush1.bf16.msra.mxu0 0
      %1791 = vmatprep.subr.bf16.mxu0 0
      %1792 = vmatpush1.bf16.msra.mxu0 0
      %1793 = vmatprep.mubr.bf16.mxu0 0
      %1794 = vmatmul.mubr.bf16.gmra.mrb[0].mxu0 %v1718
      %v1795 = vpop.f32.mrb[0].mxu0
      %v1796 = vadd.f32 %v1715, %v1795
      %v1797 = vpop.f32.mrb[0].mxu0
      %v1798 = vadd.f32 %v1715, %v1797
      %v1799 = vpop.f32.mrb[0].mxu0
      %v1800 = vpop.f32.mrb[0].mxu0
      %1801 = vdwg.mxu0
      %v1802 = vmax.f32 %v1755, 0.0
      %v1803 = vmax.f32 %v1757, 0.0
      %v1804 = vmax.f32 %v1796, 0.0
      %v1805 = vmax.f32 %v1798, 0.0
      %v1806 = vand.u32 2147483647, %v1755
      %v1807 = vand.u32 2147483647, %v1757
      %v1808 = vand.u32 2147483647, %v1796
      %v1809 = vand.u32 2147483647, %v1798
      %v1810 = vsub.f32 0.0, %v1806
      %v1811 = vsub.f32 0.0, %v1807
      %v1812 = vsub.f32 0.0, %v1808
      %v1813 = vsub.f32 0.0, %v1809
      %v1814 = vmul.f32 %v1810, 1.442695
      %v1815 = vpow.pop %v1814
      %v1816 = vmul.f32 %v1811, 1.442695
      %v1817 = vpow.pop %v1816
      %v1818 = vmul.f32 %v1812, 1.442695
      %v1819 = vpow.pop %v1818
      %v1820 = vmul.f32 %v1813, 1.442695
      %v1821 = vpow.pop %v1820
      %v1822 = vadd.f32 %v1815, 1.0
      %v1823 = vlog2.pop %v1822
      %v1824 = vmul.f32 %v1823, 0.6931472
      %v1825 = vmul.f32 -0.5, %v1815
      %v1826 = vadd.f32 %v1825, 1.0
      %v1827 = vmul.f32 %v1826, %v1815
      %v1828 = vand.u32 2147483647, %v1815
      %vm1829 = vcmp.lt.f32.partialorder %v1828, 0.0004427343
      %v1830 = vsel %vm1829, %v1827, %v1824
      %v1831 = vadd.f32 %v1817, 1.0
      %v1832 = vlog2.pop %v1831
      %v1833 = vmul.f32 %v1832, 0.6931472
      %v1834 = vmul.f32 -0.5, %v1817
      %v1835 = vadd.f32 %v1834, 1.0
      %v1836 = vmul.f32 %v1835, %v1817
      %v1837 = vand.u32 2147483647, %v1817
      %vm1838 = vcmp.lt.f32.partialorder %v1837, 0.0004427343
      %v1839 = vsel %vm1838, %v1836, %v1833
      %v1840 = vadd.f32 %v1819, 1.0
      %v1841 = vlog2.pop %v1840
      %v1842 = vmul.f32 %v1841, 0.6931472
      %v1843 = vmul.f32 -0.5, %v1819
      %v1844 = vadd.f32 %v1843, 1.0
      %v1845 = vmul.f32 %v1844, %v1819
      %v1846 = vand.u32 2147483647, %v1819
      %vm1847 = vcmp.lt.f32.partialorder %v1846, 0.0004427343
      %v1848 = vsel %vm1847, %v1845, %v1842
      %v1849 = vadd.f32 %v1821, 1.0
      %v1850 = vlog2.pop %v1849
      %v1851 = vmul.f32 %v1850, 0.6931472
      %v1852 = vmul.f32 -0.5, %v1821
      %v1853 = vadd.f32 %v1852, 1.0
      %v1854 = vmul.f32 %v1853, %v1821
      %v1855 = vand.u32 2147483647, %v1821
      %vm1856 = vcmp.lt.f32.partialorder %v1855, 0.0004427343
      %v1857 = vsel %vm1856, %v1854, %v1851
      %v1858 = vadd.f32 %v1802, %v1830
      %v1859 = vadd.f32 %v1803, %v1839
      %v1860 = vadd.f32 %v1804, %v1848
      %v1861 = vadd.f32 %v1805, %v1857
      %v1862 = vsel %vm412, %v1755, %v1858
      %v1863 = vsel %vm412, %v1757, %v1859
      %v1864 = vsel %vm412, %v1796, %v1860
      %v1865 = vsel %vm412, %v1798, %v1861
      %v1866 = vmul.f32 %v331, 0.6931472
      %v1868 = vlaneseq
      %v1869 = vshrl.u32 %v1868, 7
      %v1870 = vsub.s32 0, %v1869
      %v1871 = vrot.slane %v1866, %v1870
      %v1872 = vlaneseq
      %v1873 = vshrl.u32 %v1872, 7
      %v1874 = vsub.s32 1, %v1873
      %v1875 = vrot.slane %v1866, %v1874
      %v1876 = vlaneseq
      %v1877 = vshrl.u32 %v1876, 7
      %v1878 = vsub.s32 2, %v1877
      %v1879 = vrot.slane %v1866, %v1878
      %v1880 = vlaneseq
      %v1881 = vshrl.u32 %v1880, 7
      %v1882 = vsub.s32 3, %v1881
      %v1883 = vrot.slane %v1866, %v1882
      %v1888 = vmul.f32 %v1862, %v1871
      %v1889 = vmul.f32 %v1863, %v1875
      %v1890 = vmul.f32 %v1864, %v1879
      %v1891 = vmul.f32 %v1865, %v1883
      %v1892 = vpack.c.bf16 %v1888, %v1888
      %v1893 = vpack.c.bf16 %v1889, %v1889
      %v1894 = vpack.c.bf16 %v1890, %v1890
      %v1895 = vpack.c.bf16 %v1891, %v1891
      %v1896 = vld [vmem:[%s321] sm:$0xff]
      %v1897 = vld [vmem:[%s321 + $0x8] sm:$0xff]
      %v1898 = vld [vmem:[%s321 + $0x10] sm:$0xff]
      %v1899 = vld [vmem:[%s321 + $0x18] sm:$0xff]
      %v1900 = vld [vmem:[%s321 + $0x20] sm:$0xff]
      %v1901 = vld [vmem:[%s321 + $0x28] sm:$0xff]
      %v1902 = vld [vmem:[%s321 + $0x30] sm:$0xff]
      %v1903 = vld [vmem:[%s321 + $0x38] sm:$0xff]
      %v1904 = vld [vmem:[%s321 + $0x40] sm:$0xff]
      %v1905 = vld [vmem:[%s321 + $0x48] sm:$0xff]
      %v1906 = vld [vmem:[%s321 + $0x50] sm:$0xff]
      %v1907 = vld [vmem:[%s321 + $0x58] sm:$0xff]
      %v1908 = vld [vmem:[%s321 + $0x60] sm:$0xff]
      %v1909 = vld [vmem:[%s321 + $0x68] sm:$0xff]
      %v1910 = vld [vmem:[%s321 + $0x70] sm:$0xff]
      %v1911 = vld [vmem:[%s321 + $0x78] sm:$0xff]
      %1913 = vset.pattern.permute.xlu0 0
      %1914 = vperm.xlu0 %1913, %v1896
      %v1915 = vpop.permute.xlu0 %1914
      %1918 = vset.pattern.permute.xlu0 0
      %1919 = vperm.xlu0 %1918, %v1897
      %v1920 = vpop.permute.xlu0 %1919
      %1923 = vset.pattern.permute.xlu0 0
      %1924 = vperm.xlu0 %1923, %v1898
      %v1925 = vpop.permute.xlu0 %1924
      %1928 = vset.pattern.permute.xlu0 0
      %1929 = vperm.xlu0 %1928, %v1899
      %v1930 = vpop.permute.xlu0 %1929
      %1933 = vset.pattern.permute.xlu0 0
      %1934 = vperm.xlu0 %1933, %v1900
      %v1935 = vpop.permute.xlu0 %1934
      %1938 = vset.pattern.permute.xlu0 0
      %1939 = vperm.xlu0 %1938, %v1901
      %v1940 = vpop.permute.xlu0 %1939
      %1943 = vset.pattern.permute.xlu0 0
      %1944 = vperm.xlu0 %1943, %v1902
      %v1945 = vpop.permute.xlu0 %1944
      %1948 = vset.pattern.permute.xlu0 0
      %1949 = vperm.xlu0 %1948, %v1903
      %v1950 = vpop.permute.xlu0 %1949
      %1953 = vset.pattern.permute.xlu0 0
      %1954 = vperm.xlu0 %1953, %v1904
      %v1955 = vpop.permute.xlu0 %1954
      %1958 = vset.pattern.permute.xlu0 0
      %1959 = vperm.xlu0 %1958, %v1905
      %v1960 = vpop.permute.xlu0 %1959
      %1963 = vset.pattern.permute.xlu0 0
      %1964 = vperm.xlu0 %1963, %v1906
      %v1965 = vpop.permute.xlu0 %1964
      %1968 = vset.pattern.permute.xlu0 0
      %1969 = vperm.xlu0 %1968, %v1907
      %v1970 = vpop.permute.xlu0 %1969
      %1973 = vset.pattern.permute.xlu0 0
      %1974 = vperm.xlu0 %1973, %v1908
      %v1975 = vpop.permute.xlu0 %1974
      %1978 = vset.pattern.permute.xlu0 0
      %1979 = vperm.xlu0 %1978, %v1909
      %v1980 = vpop.permute.xlu0 %1979
      %1983 = vset.pattern.permute.xlu0 0
      %1984 = vperm.xlu0 %1983, %v1910
      %v1985 = vpop.permute.xlu0 %1984
      %1988 = vset.pattern.permute.xlu0 0
      %1989 = vperm.xlu0 %1988, %v1911
      %v1990 = vpop.permute.xlu0 %1989
      %v1992 = vsub.f32 %v1915, %v342
      %v1993 = vsub.f32 %v1920, %v342
      %v1994 = vsub.f32 %v1925, %v342
      %v1995 = vsub.f32 %v1930, %v342
      %v1996 = vsub.f32 %v1935, %v342
      %v1997 = vsub.f32 %v1940, %v342
      %v1998 = vsub.f32 %v1945, %v342
      %v1999 = vsub.f32 %v1950, %v342
      %v2000 = vsub.f32 %v1955, %v342
      %v2001 = vsub.f32 %v1960, %v342
      %v2002 = vsub.f32 %v1965, %v342
      %v2003 = vsub.f32 %v1970, %v342
      %v2004 = vsub.f32 %v1975, %v342
      %v2005 = vsub.f32 %v1980, %v342
      %v2006 = vsub.f32 %v1985, %v342
      %v2007 = vsub.f32 %v1990, %v342
      %v2008 = vmul.f32 %v1992, -1.0406845
      %v2009 = vmul.f32 %v1993, -1.0406845
      %v2010 = vmul.f32 %v1994, -1.0406845
      %v2011 = vmul.f32 %v1995, -1.0406845
      %v2012 = vmul.f32 %v1996, -1.0406845
      %v2013 = vmul.f32 %v1997, -1.0406845
      %v2014 = vmul.f32 %v1998, -1.0406845
      %v2015 = vmul.f32 %v1999, -1.0406845
      %v2016 = vmul.f32 %v2000, -1.0406845
      %v2017 = vmul.f32 %v2001, -1.0406845
      %v2018 = vmul.f32 %v2002, -1.0406845
      %v2019 = vmul.f32 %v2003, -1.0406845
      %v2020 = vmul.f32 %v2004, -1.0406845
      %v2021 = vmul.f32 %v2005, -1.0406845
      %v2022 = vmul.f32 %v2006, -1.0406845
      %v2023 = vmul.f32 %v2007, -1.0406845
      %v2024 = vmul.f32 %v2008, %v1992
      %v2025 = vmul.f32 %v2009, %v1993
      %v2026 = vmul.f32 %v2010, %v1994
      %v2027 = vmul.f32 %v2011, %v1995
      %v2028 = vmul.f32 %v2012, %v1996
      %v2029 = vmul.f32 %v2013, %v1997
      %v2030 = vmul.f32 %v2014, %v1998
      %v2031 = vmul.f32 %v2015, %v1999
      %v2032 = vmul.f32 %v2016, %v2000
      %v2033 = vmul.f32 %v2017, %v2001
      %v2034 = vmul.f32 %v2018, %v2002
      %v2035 = vmul.f32 %v2019, %v2003
      %v2036 = vmul.f32 %v2020, %v2004
      %v2037 = vmul.f32 %v2021, %v2005
      %v2038 = vmul.f32 %v2022, %v2006
      %v2039 = vmul.f32 %v2023, %v2007
      %v2040 = vmul.f32 %v2024, 1.442695
      %v2041 = vpow.pop %v2040
      %v2042 = vmul.f32 %v2025, 1.442695
      %v2043 = vpow.pop %v2042
      %v2044 = vmul.f32 %v2026, 1.442695
      %v2045 = vpow.pop %v2044
      %v2046 = vmul.f32 %v2027, 1.442695
      %v2047 = vpow.pop %v2046
      %v2048 = vmul.f32 %v2028, 1.442695
      %v2049 = vpow.pop %v2048
      %v2050 = vmul.f32 %v2029, 1.442695
      %v2051 = vpow.pop %v2050
      %v2052 = vmul.f32 %v2030, 1.442695
      %v2053 = vpow.pop %v2052
      %v2054 = vmul.f32 %v2031, 1.442695
      %v2055 = vpow.pop %v2054
      %v2056 = vmul.f32 %v2032, 1.442695
      %v2057 = vpow.pop %v2056
      %v2058 = vmul.f32 %v2033, 1.442695
      %v2059 = vpow.pop %v2058
      %v2060 = vmul.f32 %v2034, 1.442695
      %v2061 = vpow.pop %v2060
      %v2062 = vmul.f32 %v2035, 1.442695
      %v2063 = vpow.pop %v2062
      %v2064 = vmul.f32 %v2036, 1.442695
      %v2065 = vpow.pop %v2064
      %v2066 = vmul.f32 %v2037, 1.442695
      %v2067 = vpow.pop %v2066
      %v2068 = vmul.f32 %v2038, 1.442695
      %v2069 = vpow.pop %v2068
      %v2070 = vmul.f32 %v2039, 1.442695
      %v2071 = vpow.pop %v2070
      %v2072 = vpack.c.bf16 %v2043, %v2041
      %v2073 = vpack.c.bf16 %v2047, %v2045
      %v2074 = vpack.c.bf16 %v2051, %v2049
      %v2075 = vpack.c.bf16 %v2055, %v2053
      %v2076 = vpack.c.bf16 %v2059, %v2057
      %v2077 = vpack.c.bf16 %v2063, %v2061
      %v2078 = vpack.c.bf16 %v2067, %v2065
      %v2079 = vpack.c.bf16 %v2071, %v2069
      %2080 = vmatprep.subr.bf16.mxu0 0
      %2081 = vmatpush1.bf16.xpose.msra.mxu0 %v2072
      %2082 = vmatprep.subr.bf16.mxu0 0
      %2083 = vmatpush1.bf16.xpose.msra.mxu0 %v2073
      %2084 = vmatprep.subr.bf16.mxu0 0
      %2085 = vmatpush1.bf16.xpose.msra.mxu0 %v2074
      %2086 = vmatprep.subr.bf16.mxu0 0
      %2087 = vmatpush1.bf16.xpose.msra.mxu0 %v2075
      %2088 = vmatprep.subr.bf16.mxu0 0
      %2089 = vmatpush1.bf16.xpose.msra.mxu0 %v2076
      %2090 = vmatprep.subr.bf16.mxu0 0
      %2091 = vmatpush1.bf16.xpose.msra.mxu0 %v2077
      %2092 = vmatprep.subr.bf16.mxu0 0
      %2093 = vmatpush1.bf16.xpose.msra.mxu0 %v2078
      %2094 = vmatprep.subr.bf16.mxu0 0
      %2095 = vmatpush1.bf16.xpose.msra.mxu0 %v2079
      %2096 = vmatprep.subr.bf16.mxu0 0
      %2097 = vmatpush1.bf16.xpose.msra.mxu0 0
      %2098 = vmatprep.subr.bf16.mxu0 0
      %2099 = vmatpush1.bf16.xpose.msra.mxu0 0
      %2100 = vmatprep.subr.bf16.mxu0 0
      %2101 = vmatpush1.bf16.xpose.msra.mxu0 0
      %2102 = vmatprep.subr.bf16.mxu0 0
      %2103 = vmatpush1.bf16.xpose.msra.mxu0 0
      %2104 = vmatprep.subr.bf16.mxu0 0
      %2105 = vmatpush1.bf16.xpose.msra.mxu0 0
      %2106 = vmatprep.subr.bf16.mxu0 0
      %2107 = vmatpush1.bf16.xpose.msra.mxu0 0
      %2108 = vmatprep.subr.bf16.mxu0 0
      %2109 = vmatpush1.bf16.xpose.msra.mxu0 0
      %2110 = vmatprep.subr.bf16.mxu0 0
      %2111 = vmatpush1.bf16.xpose.msra.mxu0 0
      %2112 = vmatprep.mubr.bf16.mxu0 0
      %2113 = vmatmul.mubr.bf16.gmra.mrb[0].mxu0 %v1892
      %v2114 = vpop.f32.mrb[0].mxu0
      %v2115 = vadd.f32 0.0, %v2114
      %v2116 = vpop.f32.mrb[0].mxu0
      %v2117 = vpop.f32.mrb[0].mxu0
      %v2118 = vpop.f32.mrb[0].mxu0
      %2119 = vdwg.mxu0
      %2120 = vst [vmem:[%s327] sm:$0x3] %v2115
      %s2121 = scalar_lea.vmem %s321, 128
      %v2122 = vld [vmem:[%s2121] sm:$0xff]
      %v2123 = vld [vmem:[%s2121 + $0x8] sm:$0xff]
      %v2124 = vld [vmem:[%s2121 + $0x10] sm:$0xff]
      %v2125 = vld [vmem:[%s2121 + $0x18] sm:$0xff]
      %v2126 = vld [vmem:[%s2121 + $0x20] sm:$0xff]
      %v2127 = vld [vmem:[%s2121 + $0x28] sm:$0xff]
      %v2128 = vld [vmem:[%s2121 + $0x30] sm:$0xff]
      %v2129 = vld [vmem:[%s2121 + $0x38] sm:$0xff]
      %v2130 = vld [vmem:[%s2121 + $0x40] sm:$0xff]
      %v2131 = vld [vmem:[%s2121 + $0x48] sm:$0xff]
      %v2132 = vld [vmem:[%s2121 + $0x50] sm:$0xff]
      %v2133 = vld [vmem:[%s2121 + $0x58] sm:$0xff]
      %v2134 = vld [vmem:[%s2121 + $0x60] sm:$0xff]
      %v2135 = vld [vmem:[%s2121 + $0x68] sm:$0xff]
      %v2136 = vld [vmem:[%s2121 + $0x70] sm:$0xff]
      %v2137 = vld [vmem:[%s2121 + $0x78] sm:$0xff]
      %2139 = vset.pattern.permute.xlu0 0
      %2140 = vperm.xlu0 %2139, %v2122
      %v2141 = vpop.permute.xlu0 %2140
      %2144 = vset.pattern.permute.xlu0 0
      %2145 = vperm.xlu0 %2144, %v2123
      %v2146 = vpop.permute.xlu0 %2145
      %2149 = vset.pattern.permute.xlu0 0
      %2150 = vperm.xlu0 %2149, %v2124
      %v2151 = vpop.permute.xlu0 %2150
      %2154 = vset.pattern.permute.xlu0 0
      %2155 = vperm.xlu0 %2154, %v2125
      %v2156 = vpop.permute.xlu0 %2155
      %2159 = vset.pattern.permute.xlu0 0
      %2160 = vperm.xlu0 %2159, %v2126
      %v2161 = vpop.permute.xlu0 %2160
      %2164 = vset.pattern.permute.xlu0 0
      %2165 = vperm.xlu0 %2164, %v2127
      %v2166 = vpop.permute.xlu0 %2165
      %2169 = vset.pattern.permute.xlu0 0
      %2170 = vperm.xlu0 %2169, %v2128
      %v2171 = vpop.permute.xlu0 %2170
      %2174 = vset.pattern.permute.xlu0 0
      %2175 = vperm.xlu0 %2174, %v2129
      %v2176 = vpop.permute.xlu0 %2175
      %2179 = vset.pattern.permute.xlu0 0
      %2180 = vperm.xlu0 %2179, %v2130
      %v2181 = vpop.permute.xlu0 %2180
      %2184 = vset.pattern.permute.xlu0 0
      %2185 = vperm.xlu0 %2184, %v2131
      %v2186 = vpop.permute.xlu0 %2185
      %2189 = vset.pattern.permute.xlu0 0
      %2190 = vperm.xlu0 %2189, %v2132
      %v2191 = vpop.permute.xlu0 %2190
      %2194 = vset.pattern.permute.xlu0 0
      %2195 = vperm.xlu0 %2194, %v2133
      %v2196 = vpop.permute.xlu0 %2195
      %2199 = vset.pattern.permute.xlu0 0
      %2200 = vperm.xlu0 %2199, %v2134
      %v2201 = vpop.permute.xlu0 %2200
      %2204 = vset.pattern.permute.xlu0 0
      %2205 = vperm.xlu0 %2204, %v2135
      %v2206 = vpop.permute.xlu0 %2205
      %2209 = vset.pattern.permute.xlu0 0
      %2210 = vperm.xlu0 %2209, %v2136
      %v2211 = vpop.permute.xlu0 %2210
      %2214 = vset.pattern.permute.xlu0 0
      %2215 = vperm.xlu0 %2214, %v2137
      %v2216 = vpop.permute.xlu0 %2215
      %v2218 = vsub.f32 %v2141, %v342
      %v2219 = vsub.f32 %v2146, %v342
      %v2220 = vsub.f32 %v2151, %v342
      %v2221 = vsub.f32 %v2156, %v342
      %v2222 = vsub.f32 %v2161, %v342
      %v2223 = vsub.f32 %v2166, %v342
      %v2224 = vsub.f32 %v2171, %v342
      %v2225 = vsub.f32 %v2176, %v342
      %v2226 = vsub.f32 %v2181, %v342
      %v2227 = vsub.f32 %v2186, %v342
      %v2228 = vsub.f32 %v2191, %v342
      %v2229 = vsub.f32 %v2196, %v342
      %v2230 = vsub.f32 %v2201, %v342
      %v2231 = vsub.f32 %v2206, %v342
      %v2232 = vsub.f32 %v2211, %v342
      %v2233 = vsub.f32 %v2216, %v342
      %v2234 = vmul.f32 %v2218, -1.0406845
      %v2235 = vmul.f32 %v2219, -1.0406845
      %v2236 = vmul.f32 %v2220, -1.0406845
      %v2237 = vmul.f32 %v2221, -1.0406845
      %v2238 = vmul.f32 %v2222, -1.0406845
      %v2239 = vmul.f32 %v2223, -1.0406845
      %v2240 = vmul.f32 %v2224, -1.0406845
      %v2241 = vmul.f32 %v2225, -1.0406845
      %v2242 = vmul.f32 %v2226, -1.0406845
      %v2243 = vmul.f32 %v2227, -1.0406845
      %v2244 = vmul.f32 %v2228, -1.0406845
      %v2245 = vmul.f32 %v2229, -1.0406845
      %v2246 = vmul.f32 %v2230, -1.0406845
      %v2247 = vmul.f32 %v2231, -1.0406845
      %v2248 = vmul.f32 %v2232, -1.0406845
      %v2249 = vmul.f32 %v2233, -1.0406845
      %v2250 = vmul.f32 %v2234, %v2218
      %v2251 = vmul.f32 %v2235, %v2219
      %v2252 = vmul.f32 %v2236, %v2220
      %v2253 = vmul.f32 %v2237, %v2221
      %v2254 = vmul.f32 %v2238, %v2222
      %v2255 = vmul.f32 %v2239, %v2223
      %v2256 = vmul.f32 %v2240, %v2224
      %v2257 = vmul.f32 %v2241, %v2225
      %v2258 = vmul.f32 %v2242, %v2226
      %v2259 = vmul.f32 %v2243, %v2227
      %v2260 = vmul.f32 %v2244, %v2228
      %v2261 = vmul.f32 %v2245, %v2229
      %v2262 = vmul.f32 %v2246, %v2230
      %v2263 = vmul.f32 %v2247, %v2231
      %v2264 = vmul.f32 %v2248, %v2232
      %v2265 = vmul.f32 %v2249, %v2233
      %v2266 = vmul.f32 %v2250, 1.442695
      %v2267 = vpow.pop %v2266
      %v2268 = vmul.f32 %v2251, 1.442695
      %v2269 = vpow.pop %v2268
      %v2270 = vmul.f32 %v2252, 1.442695
      %v2271 = vpow.pop %v2270
      %v2272 = vmul.f32 %v2253, 1.442695
      %v2273 = vpow.pop %v2272
      %v2274 = vmul.f32 %v2254, 1.442695
      %v2275 = vpow.pop %v2274
      %v2276 = vmul.f32 %v2255, 1.442695
      %v2277 = vpow.pop %v2276
      %v2278 = vmul.f32 %v2256, 1.442695
      %v2279 = vpow.pop %v2278
      %v2280 = vmul.f32 %v2257, 1.442695
      %v2281 = vpow.pop %v2280
      %v2282 = vmul.f32 %v2258, 1.442695
      %v2283 = vpow.pop %v2282
      %v2284 = vmul.f32 %v2259, 1.442695
      %v2285 = vpow.pop %v2284
      %v2286 = vmul.f32 %v2260, 1.442695
      %v2287 = vpow.pop %v2286
      %v2288 = vmul.f32 %v2261, 1.442695
      %v2289 = vpow.pop %v2288
      %v2290 = vmul.f32 %v2262, 1.442695
      %v2291 = vpow.pop %v2290
      %v2292 = vmul.f32 %v2263, 1.442695
      %v2293 = vpow.pop %v2292
      %v2294 = vmul.f32 %v2264, 1.442695
      %v2295 = vpow.pop %v2294
      %v2296 = vmul.f32 %v2265, 1.442695
      %v2297 = vpow.pop %v2296
      %v2298 = vpack.c.bf16 %v2269, %v2267
      %v2299 = vpack.c.bf16 %v2273, %v2271
      %v2300 = vpack.c.bf16 %v2277, %v2275
      %v2301 = vpack.c.bf16 %v2281, %v2279
      %v2302 = vpack.c.bf16 %v2285, %v2283
      %v2303 = vpack.c.bf16 %v2289, %v2287
      %v2304 = vpack.c.bf16 %v2293, %v2291
      %v2305 = vpack.c.bf16 %v2297, %v2295
      %2306 = vmatprep.subr.bf16.mxu0 0
      %2307 = vmatpush1.bf16.xpose.msra.mxu0 %v2298
      %2308 = vmatprep.subr.bf16.mxu0 0
      %2309 = vmatpush1.bf16.xpose.msra.mxu0 %v2299
      %2310 = vmatprep.subr.bf16.mxu0 0
      %2311 = vmatpush1.bf16.xpose.msra.mxu0 %v2300
      %2312 = vmatprep.subr.bf16.mxu0 0
      %2313 = vmatpush1.bf16.xpose.msra.mxu0 %v2301
      %2314 = vmatprep.subr.bf16.mxu0 0
      %2315 = vmatpush1.bf16.xpose.msra.mxu0 %v2302
      %2316 = vmatprep.subr.bf16.mxu0 0
      %2317 = vmatpush1.bf16.xpose.msra.mxu0 %v2303
      %2318 = vmatprep.subr.bf16.mxu0 0
      %2319 = vmatpush1.bf16.xpose.msra.mxu0 %v2304
      %2320 = vmatprep.subr.bf16.mxu0 0
      %2321 = vmatpush1.bf16.xpose.msra.mxu0 %v2305
      %2322 = vmatprep.subr.bf16.mxu0 0
      %2323 = vmatpush1.bf16.xpose.msra.mxu0 0
      %2324 = vmatprep.subr.bf16.mxu0 0
      %2325 = vmatpush1.bf16.xpose.msra.mxu0 0
      %2326 = vmatprep.subr.bf16.mxu0 0
      %2327 = vmatpush1.bf16.xpose.msra.mxu0 0
      %2328 = vmatprep.subr.bf16.mxu0 0
      %2329 = vmatpush1.bf16.xpose.msra.mxu0 0
      %2330 = vmatprep.subr.bf16.mxu0 0
      %2331 = vmatpush1.bf16.xpose.msra.mxu0 0
      %2332 = vmatprep.subr.bf16.mxu0 0
      %2333 = vmatpush1.bf16.xpose.msra.mxu0 0
      %2334 = vmatprep.subr.bf16.mxu0 0
      %2335 = vmatpush1.bf16.xpose.msra.mxu0 0
      %2336 = vmatprep.subr.bf16.mxu0 0
      %2337 = vmatpush1.bf16.xpose.msra.mxu0 0
      %2338 = vmatprep.mubr.bf16.mxu0 0
      %2339 = vmatmul.mubr.bf16.gmra.mrb[0].mxu0 %v1893
      %v2340 = vpop.f32.mrb[0].mxu0
      %v2341 = vadd.f32 0.0, %v2340
      %v2342 = vpop.f32.mrb[0].mxu0
      %v2343 = vpop.f32.mrb[0].mxu0
      %v2344 = vpop.f32.mrb[0].mxu0
      %2345 = vdwg.mxu0
      %s2346 = scalar_lea.vmem %s327, 2
      %2347 = vst [vmem:[%s2346] sm:$0x3] %v2341
      %s2348 = scalar_lea.vmem %s321, 256
      %v2349 = vld [vmem:[%s2348] sm:$0xff]
      %v2350 = vld [vmem:[%s2348 + $0x8] sm:$0xff]
      %v2351 = vld [vmem:[%s2348 + $0x10] sm:$0xff]
      %v2352 = vld [vmem:[%s2348 + $0x18] sm:$0xff]
      %v2353 = vld [vmem:[%s2348 + $0x20] sm:$0xff]
      %v2354 = vld [vmem:[%s2348 + $0x28] sm:$0xff]
      %v2355 = vld [vmem:[%s2348 + $0x30] sm:$0xff]
      %v2356 = vld [vmem:[%s2348 + $0x38] sm:$0xff]
      %v2357 = vld [vmem:[%s2348 + $0x40] sm:$0xff]
      %v2358 = vld [vmem:[%s2348 + $0x48] sm:$0xff]
      %v2359 = vld [vmem:[%s2348 + $0x50] sm:$0xff]
      %v2360 = vld [vmem:[%s2348 + $0x58] sm:$0xff]
      %v2361 = vld [vmem:[%s2348 + $0x60] sm:$0xff]
      %v2362 = vld [vmem:[%s2348 + $0x68] sm:$0xff]
      %v2363 = vld [vmem:[%s2348 + $0x70] sm:$0xff]
      %v2364 = vld [vmem:[%s2348 + $0x78] sm:$0xff]
      %2366 = vset.pattern.permute.xlu0 0
      %2367 = vperm.xlu0 %2366, %v2349
      %v2368 = vpop.permute.xlu0 %2367
      %2371 = vset.pattern.permute.xlu0 0
      %2372 = vperm.xlu0 %2371, %v2350
      %v2373 = vpop.permute.xlu0 %2372
      %2376 = vset.pattern.permute.xlu0 0
      %2377 = vperm.xlu0 %2376, %v2351
      %v2378 = vpop.permute.xlu0 %2377
      %2381 = vset.pattern.permute.xlu0 0
      %2382 = vperm.xlu0 %2381, %v2352
      %v2383 = vpop.permute.xlu0 %2382
      %2386 = vset.pattern.permute.xlu0 0
      %2387 = vperm.xlu0 %2386, %v2353
      %v2388 = vpop.permute.xlu0 %2387
      %2391 = vset.pattern.permute.xlu0 0
      %2392 = vperm.xlu0 %2391, %v2354
      %v2393 = vpop.permute.xlu0 %2392
      %2396 = vset.pattern.permute.xlu0 0
      %2397 = vperm.xlu0 %2396, %v2355
      %v2398 = vpop.permute.xlu0 %2397
      %2401 = vset.pattern.permute.xlu0 0
      %2402 = vperm.xlu0 %2401, %v2356
      %v2403 = vpop.permute.xlu0 %2402
      %2406 = vset.pattern.permute.xlu0 0
      %2407 = vperm.xlu0 %2406, %v2357
      %v2408 = vpop.permute.xlu0 %2407
      %2411 = vset.pattern.permute.xlu0 0
      %2412 = vperm.xlu0 %2411, %v2358
      %v2413 = vpop.permute.xlu0 %2412
      %2416 = vset.pattern.permute.xlu0 0
      %2417 = vperm.xlu0 %2416, %v2359
      %v2418 = vpop.permute.xlu0 %2417
      %2421 = vset.pattern.permute.xlu0 0
      %2422 = vperm.xlu0 %2421, %v2360
      %v2423 = vpop.permute.xlu0 %2422
      %2426 = vset.pattern.permute.xlu0 0
      %2427 = vperm.xlu0 %2426, %v2361
      %v2428 = vpop.permute.xlu0 %2427
      %2431 = vset.pattern.permute.xlu0 0
      %2432 = vperm.xlu0 %2431, %v2362
      %v2433 = vpop.permute.xlu0 %2432
      %2436 = vset.pattern.permute.xlu0 0
      %2437 = vperm.xlu0 %2436, %v2363
      %v2438 = vpop.permute.xlu0 %2437
      %2441 = vset.pattern.permute.xlu0 0
      %2442 = vperm.xlu0 %2441, %v2364
      %v2443 = vpop.permute.xlu0 %2442
      %v2445 = vsub.f32 %v2368, %v342
      %v2446 = vsub.f32 %v2373, %v342
      %v2447 = vsub.f32 %v2378, %v342
      %v2448 = vsub.f32 %v2383, %v342
      %v2449 = vsub.f32 %v2388, %v342
      %v2450 = vsub.f32 %v2393, %v342
      %v2451 = vsub.f32 %v2398, %v342
      %v2452 = vsub.f32 %v2403, %v342
      %v2453 = vsub.f32 %v2408, %v342
      %v2454 = vsub.f32 %v2413, %v342
      %v2455 = vsub.f32 %v2418, %v342
      %v2456 = vsub.f32 %v2423, %v342
      %v2457 = vsub.f32 %v2428, %v342
      %v2458 = vsub.f32 %v2433, %v342
      %v2459 = vsub.f32 %v2438, %v342
      %v2460 = vsub.f32 %v2443, %v342
      %v2461 = vmul.f32 %v2445, -1.0406845
      %v2462 = vmul.f32 %v2446, -1.0406845
      %v2463 = vmul.f32 %v2447, -1.0406845
      %v2464 = vmul.f32 %v2448, -1.0406845
      %v2465 = vmul.f32 %v2449, -1.0406845
      %v2466 = vmul.f32 %v2450, -1.0406845
      %v2467 = vmul.f32 %v2451, -1.0406845
      %v2468 = vmul.f32 %v2452, -1.0406845
      %v2469 = vmul.f32 %v2453, -1.0406845
      %v2470 = vmul.f32 %v2454, -1.0406845
      %v2471 = vmul.f32 %v2455, -1.0406845
      %v2472 = vmul.f32 %v2456, -1.0406845
      %v2473 = vmul.f32 %v2457, -1.0406845
      %v2474 = vmul.f32 %v2458, -1.0406845
      %v2475 = vmul.f32 %v2459, -1.0406845
      %v2476 = vmul.f32 %v2460, -1.0406845
      %v2477 = vmul.f32 %v2461, %v2445
      %v2478 = vmul.f32 %v2462, %v2446
      %v2479 = vmul.f32 %v2463, %v2447
      %v2480 = vmul.f32 %v2464, %v2448
      %v2481 = vmul.f32 %v2465, %v2449
      %v2482 = vmul.f32 %v2466, %v2450
      %v2483 = vmul.f32 %v2467, %v2451
      %v2484 = vmul.f32 %v2468, %v2452
      %v2485 = vmul.f32 %v2469, %v2453
      %v2486 = vmul.f32 %v2470, %v2454
      %v2487 = vmul.f32 %v2471, %v2455
      %v2488 = vmul.f32 %v2472, %v2456
      %v2489 = vmul.f32 %v2473, %v2457
      %v2490 = vmul.f32 %v2474, %v2458
      %v2491 = vmul.f32 %v2475, %v2459
      %v2492 = vmul.f32 %v2476, %v2460
      %v2493 = vmul.f32 %v2477, 1.442695
      %v2494 = vpow.pop %v2493
      %v2495 = vmul.f32 %v2478, 1.442695
      %v2496 = vpow.pop %v2495
      %v2497 = vmul.f32 %v2479, 1.442695
      %v2498 = vpow.pop %v2497
      %v2499 = vmul.f32 %v2480, 1.442695
      %v2500 = vpow.pop %v2499
      %v2501 = vmul.f32 %v2481, 1.442695
      %v2502 = vpow.pop %v2501
      %v2503 = vmul.f32 %v2482, 1.442695
      %v2504 = vpow.pop %v2503
      %v2505 = vmul.f32 %v2483, 1.442695
      %v2506 = vpow.pop %v2505
      %v2507 = vmul.f32 %v2484, 1.442695
      %v2508 = vpow.pop %v2507
      %v2509 = vmul.f32 %v2485, 1.442695
      %v2510 = vpow.pop %v2509
      %v2511 = vmul.f32 %v2486, 1.442695
      %v2512 = vpow.pop %v2511
      %v2513 = vmul.f32 %v2487, 1.442695
      %v2514 = vpow.pop %v2513
      %v2515 = vmul.f32 %v2488, 1.442695
      %v2516 = vpow.pop %v2515
      %v2517 = vmul.f32 %v2489, 1.442695
      %v2518 = vpow.pop %v2517
      %v2519 = vmul.f32 %v2490, 1.442695
      %v2520 = vpow.pop %v2519
      %v2521 = vmul.f32 %v2491, 1.442695
      %v2522 = vpow.pop %v2521
      %v2523 = vmul.f32 %v2492, 1.442695
      %v2524 = vpow.pop %v2523
      %v2525 = vpack.c.bf16 %v2496, %v2494
      %v2526 = vpack.c.bf16 %v2500, %v2498
      %v2527 = vpack.c.bf16 %v2504, %v2502
      %v2528 = vpack.c.bf16 %v2508, %v2506
      %v2529 = vpack.c.bf16 %v2512, %v2510
      %v2530 = vpack.c.bf16 %v2516, %v2514
      %v2531 = vpack.c.bf16 %v2520, %v2518
      %v2532 = vpack.c.bf16 %v2524, %v2522
      %2533 = vmatprep.subr.bf16.mxu0 0
      %2534 = vmatpush1.bf16.xpose.msra.mxu0 %v2525
      %2535 = vmatprep.subr.bf16.mxu0 0
      %2536 = vmatpush1.bf16.xpose.msra.mxu0 %v2526
      %2537 = vmatprep.subr.bf16.mxu0 0
      %2538 = vmatpush1.bf16.xpose.msra.mxu0 %v2527
      %2539 = vmatprep.subr.bf16.mxu0 0
      %2540 = vmatpush1.bf16.xpose.msra.mxu0 %v2528
      %2541 = vmatprep.subr.bf16.mxu0 0
      %2542 = vmatpush1.bf16.xpose.msra.mxu0 %v2529
      %2543 = vmatprep.subr.bf16.mxu0 0
      %2544 = vmatpush1.bf16.xpose.msra.mxu0 %v2530
      %2545 = vmatprep.subr.bf16.mxu0 0
      %2546 = vmatpush1.bf16.xpose.msra.mxu0 %v2531
      %2547 = vmatprep.subr.bf16.mxu0 0
      %2548 = vmatpush1.bf16.xpose.msra.mxu0 %v2532
      %2549 = vmatprep.subr.bf16.mxu0 0
      %2550 = vmatpush1.bf16.xpose.msra.mxu0 0
      %2551 = vmatprep.subr.bf16.mxu0 0
      %2552 = vmatpush1.bf16.xpose.msra.mxu0 0
      %2553 = vmatprep.subr.bf16.mxu0 0
      %2554 = vmatpush1.bf16.xpose.msra.mxu0 0
      %2555 = vmatprep.subr.bf16.mxu0 0
      %2556 = vmatpush1.bf16.xpose.msra.mxu0 0
      %2557 = vmatprep.subr.bf16.mxu0 0
      %2558 = vmatpush1.bf16.xpose.msra.mxu0 0
      %2559 = vmatprep.subr.bf16.mxu0 0
      %2560 = vmatpush1.bf16.xpose.msra.mxu0 0
      %2561 = vmatprep.subr.bf16.mxu0 0
      %2562 = vmatpush1.bf16.xpose.msra.mxu0 0
      %2563 = vmatprep.subr.bf16.mxu0 0
      %2564 = vmatpush1.bf16.xpose.msra.mxu0 0
      %2565 = vmatprep.mubr.bf16.mxu0 0
      %2566 = vmatmul.mubr.bf16.gmra.mrb[0].mxu0 %v1894
      %v2567 = vpop.f32.mrb[0].mxu0
      %v2568 = vadd.f32 0.0, %v2567
      %v2569 = vpop.f32.mrb[0].mxu0
      %v2570 = vpop.f32.mrb[0].mxu0
      %v2571 = vpop.f32.mrb[0].mxu0
      %2572 = vdwg.mxu0
      %s2573 = scalar_lea.vmem %s327, 4
      %2574 = vst [vmem:[%s2573] sm:$0x3] %v2568
      %s2575 = scalar_lea.vmem %s321, 384
      %v2576 = vld [vmem:[%s2575] sm:$0xff]
      %v2577 = vld [vmem:[%s2575 + $0x8] sm:$0xff]
      %v2578 = vld [vmem:[%s2575 + $0x10] sm:$0xff]
      %v2579 = vld [vmem:[%s2575 + $0x18] sm:$0xff]
      %v2580 = vld [vmem:[%s2575 + $0x20] sm:$0xff]
      %v2581 = vld [vmem:[%s2575 + $0x28] sm:$0xff]
      %v2582 = vld [vmem:[%s2575 + $0x30] sm:$0xff]
      %v2583 = vld [vmem:[%s2575 + $0x38] sm:$0xff]
      %v2584 = vld [vmem:[%s2575 + $0x40] sm:$0xff]
      %v2585 = vld [vmem:[%s2575 + $0x48] sm:$0xff]
      %v2586 = vld [vmem:[%s2575 + $0x50] sm:$0xff]
      %v2587 = vld [vmem:[%s2575 + $0x58] sm:$0xff]
      %v2588 = vld [vmem:[%s2575 + $0x60] sm:$0xff]
      %v2589 = vld [vmem:[%s2575 + $0x68] sm:$0xff]
      %v2590 = vld [vmem:[%s2575 + $0x70] sm:$0xff]
      %v2591 = vld [vmem:[%s2575 + $0x78] sm:$0xff]
      %2593 = vset.pattern.permute.xlu0 0
      %2594 = vperm.xlu0 %2593, %v2576
      %v2595 = vpop.permute.xlu0 %2594
      %2598 = vset.pattern.permute.xlu0 0
      %2599 = vperm.xlu0 %2598, %v2577
      %v2600 = vpop.permute.xlu0 %2599
      %2603 = vset.pattern.permute.xlu0 0
      %2604 = vperm.xlu0 %2603, %v2578
      %v2605 = vpop.permute.xlu0 %2604
      %2608 = vset.pattern.permute.xlu0 0
      %2609 = vperm.xlu0 %2608, %v2579
      %v2610 = vpop.permute.xlu0 %2609
      %2613 = vset.pattern.permute.xlu0 0
      %2614 = vperm.xlu0 %2613, %v2580
      %v2615 = vpop.permute.xlu0 %2614
      %2618 = vset.pattern.permute.xlu0 0
      %2619 = vperm.xlu0 %2618, %v2581
      %v2620 = vpop.permute.xlu0 %2619
      %2623 = vset.pattern.permute.xlu0 0
      %2624 = vperm.xlu0 %2623, %v2582
      %v2625 = vpop.permute.xlu0 %2624
      %2628 = vset.pattern.permute.xlu0 0
      %2629 = vperm.xlu0 %2628, %v2583
      %v2630 = vpop.permute.xlu0 %2629
      %2633 = vset.pattern.permute.xlu0 0
      %2634 = vperm.xlu0 %2633, %v2584
      %v2635 = vpop.permute.xlu0 %2634
      %2638 = vset.pattern.permute.xlu0 0
      %2639 = vperm.xlu0 %2638, %v2585
      %v2640 = vpop.permute.xlu0 %2639
      %2643 = vset.pattern.permute.xlu0 0
      %2644 = vperm.xlu0 %2643, %v2586
      %v2645 = vpop.permute.xlu0 %2644
      %2648 = vset.pattern.permute.xlu0 0
      %2649 = vperm.xlu0 %2648, %v2587
      %v2650 = vpop.permute.xlu0 %2649
      %2653 = vset.pattern.permute.xlu0 0
      %2654 = vperm.xlu0 %2653, %v2588
      %v2655 = vpop.permute.xlu0 %2654
      %2658 = vset.pattern.permute.xlu0 0
      %2659 = vperm.xlu0 %2658, %v2589
      %v2660 = vpop.permute.xlu0 %2659
      %2663 = vset.pattern.permute.xlu0 0
      %2664 = vperm.xlu0 %2663, %v2590
      %v2665 = vpop.permute.xlu0 %2664
      %2668 = vset.pattern.permute.xlu0 0
      %2669 = vperm.xlu0 %2668, %v2591
      %v2670 = vpop.permute.xlu0 %2669
      %v2672 = vsub.f32 %v2595, %v342
      %v2673 = vsub.f32 %v2600, %v342
      %v2674 = vsub.f32 %v2605, %v342
      %v2675 = vsub.f32 %v2610, %v342
      %v2676 = vsub.f32 %v2615, %v342
      %v2677 = vsub.f32 %v2620, %v342
      %v2678 = vsub.f32 %v2625, %v342
      %v2679 = vsub.f32 %v2630, %v342
      %v2680 = vsub.f32 %v2635, %v342
      %v2681 = vsub.f32 %v2640, %v342
      %v2682 = vsub.f32 %v2645, %v342
      %v2683 = vsub.f32 %v2650, %v342
      %v2684 = vsub.f32 %v2655, %v342
      %v2685 = vsub.f32 %v2660, %v342
      %v2686 = vsub.f32 %v2665, %v342
      %v2687 = vsub.f32 %v2670, %v342
      %v2688 = vmul.f32 %v2672, -1.0406845
      %v2689 = vmul.f32 %v2673, -1.0406845
      %v2690 = vmul.f32 %v2674, -1.0406845
      %v2691 = vmul.f32 %v2675, -1.0406845
      %v2692 = vmul.f32 %v2676, -1.0406845
      %v2693 = vmul.f32 %v2677, -1.0406845
      %v2694 = vmul.f32 %v2678, -1.0406845
      %v2695 = vmul.f32 %v2679, -1.0406845
      %v2696 = vmul.f32 %v2680, -1.0406845
      %v2697 = vmul.f32 %v2681, -1.0406845
      %v2698 = vmul.f32 %v2682, -1.0406845
      %v2699 = vmul.f32 %v2683, -1.0406845
      %v2700 = vmul.f32 %v2684, -1.0406845
      %v2701 = vmul.f32 %v2685, -1.0406845
      %v2702 = vmul.f32 %v2686, -1.0406845
      %v2703 = vmul.f32 %v2687, -1.0406845
      %v2704 = vmul.f32 %v2688, %v2672
      %v2705 = vmul.f32 %v2689, %v2673
      %v2706 = vmul.f32 %v2690, %v2674
      %v2707 = vmul.f32 %v2691, %v2675
      %v2708 = vmul.f32 %v2692, %v2676
      %v2709 = vmul.f32 %v2693, %v2677
      %v2710 = vmul.f32 %v2694, %v2678
      %v2711 = vmul.f32 %v2695, %v2679
      %v2712 = vmul.f32 %v2696, %v2680
      %v2713 = vmul.f32 %v2697, %v2681
      %v2714 = vmul.f32 %v2698, %v2682
      %v2715 = vmul.f32 %v2699, %v2683
      %v2716 = vmul.f32 %v2700, %v2684
      %v2717 = vmul.f32 %v2701, %v2685
      %v2718 = vmul.f32 %v2702, %v2686
      %v2719 = vmul.f32 %v2703, %v2687
      %v2720 = vmul.f32 %v2704, 1.442695
      %v2721 = vpow.pop %v2720
      %v2722 = vmul.f32 %v2705, 1.442695
      %v2723 = vpow.pop %v2722
      %v2724 = vmul.f32 %v2706, 1.442695
      %v2725 = vpow.pop %v2724
      %v2726 = vmul.f32 %v2707, 1.442695
      %v2727 = vpow.pop %v2726
      %v2728 = vmul.f32 %v2708, 1.442695
      %v2729 = vpow.pop %v2728
      %v2730 = vmul.f32 %v2709, 1.442695
      %v2731 = vpow.pop %v2730
      %v2732 = vmul.f32 %v2710, 1.442695
      %v2733 = vpow.pop %v2732
      %v2734 = vmul.f32 %v2711, 1.442695
      %v2735 = vpow.pop %v2734
      %v2736 = vmul.f32 %v2712, 1.442695
      %v2737 = vpow.pop %v2736
      %v2738 = vmul.f32 %v2713, 1.442695
      %v2739 = vpow.pop %v2738
      %v2740 = vmul.f32 %v2714, 1.442695
      %v2741 = vpow.pop %v2740
      %v2742 = vmul.f32 %v2715, 1.442695
      %v2743 = vpow.pop %v2742
      %v2744 = vmul.f32 %v2716, 1.442695
      %v2745 = vpow.pop %v2744
      %v2746 = vmul.f32 %v2717, 1.442695
      %v2747 = vpow.pop %v2746
      %v2748 = vmul.f32 %v2718, 1.442695
      %v2749 = vpow.pop %v2748
      %v2750 = vmul.f32 %v2719, 1.442695
      %v2751 = vpow.pop %v2750
      %v2752 = vpack.c.bf16 %v2723, %v2721
      %v2753 = vpack.c.bf16 %v2727, %v2725
      %v2754 = vpack.c.bf16 %v2731, %v2729
      %v2755 = vpack.c.bf16 %v2735, %v2733
      %v2756 = vpack.c.bf16 %v2739, %v2737
      %v2757 = vpack.c.bf16 %v2743, %v2741
      %v2758 = vpack.c.bf16 %v2747, %v2745
      %v2759 = vpack.c.bf16 %v2751, %v2749
      %2760 = vmatprep.subr.bf16.mxu0 0
      %2761 = vmatpush1.bf16.xpose.msra.mxu0 %v2752
      %2762 = vmatprep.subr.bf16.mxu0 0
      %2763 = vmatpush1.bf16.xpose.msra.mxu0 %v2753
      %2764 = vmatprep.subr.bf16.mxu0 0
      %2765 = vmatpush1.bf16.xpose.msra.mxu0 %v2754
      %2766 = vmatprep.subr.bf16.mxu0 0
      %2767 = vmatpush1.bf16.xpose.msra.mxu0 %v2755
      %2768 = vmatprep.subr.bf16.mxu0 0
      %2769 = vmatpush1.bf16.xpose.msra.mxu0 %v2756
      %2770 = vmatprep.subr.bf16.mxu0 0
      %2771 = vmatpush1.bf16.xpose.msra.mxu0 %v2757
      %2772 = vmatprep.subr.bf16.mxu0 0
      %2773 = vmatpush1.bf16.xpose.msra.mxu0 %v2758
      %2774 = vmatprep.subr.bf16.mxu0 0
      %2775 = vmatpush1.bf16.xpose.msra.mxu0 %v2759
      %2776 = vmatprep.subr.bf16.mxu0 0
      %2777 = vmatpush1.bf16.xpose.msra.mxu0 0
      %2778 = vmatprep.subr.bf16.mxu0 0
      %2779 = vmatpush1.bf16.xpose.msra.mxu0 0
      %2780 = vmatprep.subr.bf16.mxu0 0
      %2781 = vmatpush1.bf16.xpose.msra.mxu0 0
      %2782 = vmatprep.subr.bf16.mxu0 0
      %2783 = vmatpush1.bf16.xpose.msra.mxu0 0
      %2784 = vmatprep.subr.bf16.mxu0 0
      %2785 = vmatpush1.bf16.xpose.msra.mxu0 0
      %2786 = vmatprep.subr.bf16.mxu0 0
      %2787 = vmatpush1.bf16.xpose.msra.mxu0 0
      %2788 = vmatprep.subr.bf16.mxu0 0
      %2789 = vmatpush1.bf16.xpose.msra.mxu0 0
      %2790 = vmatprep.subr.bf16.mxu0 0
      %2791 = vmatpush1.bf16.xpose.msra.mxu0 0
      %2792 = vmatprep.mubr.bf16.mxu0 0
      %2793 = vmatmul.mubr.bf16.gmra.mrb[0].mxu0 %v1895
      %v2794 = vpop.f32.mrb[0].mxu0
      %v2795 = vadd.f32 0.0, %v2794
      %v2796 = vpop.f32.mrb[0].mxu0
      %v2797 = vpop.f32.mrb[0].mxu0
      %v2798 = vpop.f32.mrb[0].mxu0
      %2799 = vdwg.mxu0
      %s2800 = scalar_lea.vmem %s327, 6
      %2801 = vst [vmem:[%s2800] sm:$0x3] %v2795
      %s2802 = smul.u32 4, %s18
      %p2803 = scmp.lt.s32.totalorder %s2802, 7
      %s2804 = scalar_select %p2803, %s2802, 7
      %s2805 = smul.addr %s2804, 2
      %s2806 = scalar_lea.vmem %s7, %s2805
      // Predicated region
      $region49: #{_forward_impl.1} parent=47 // pred_check
        %p2807 = pneg %p198
      $region50: #{_forward_impl.1} parent=47 // pred_check_branch
        %2809 = sbr.rel (%p2807) target = $region52
      $region51: #{_forward_impl.1} parent=47 // pred_region
        %s2810 = smul.u32 4, %s18
      $region52: #{_forward_impl.1} parent=47 // pred_fallthru
        _
    $region48: #{_forward_impl.1} parent=5 // pred_fallthru
      _
    %p2811 = scmp.le.s32.totalorder 2, %s13
    // Predicated region
    $region53: #{_forward_impl.1} parent=5 // pred_check
      %p2812 = pneg %p2811
    $region54: #{_forward_impl.1} parent=5 // pred_check_branch
      %2814 = sbr.rel (%p2812) target = $region56
    $region55: #{_forward_impl.1} parent=5 // pred_region
      %s2815 = ssub.s32 %s13, 2
      // Predicated region
      $region57: #{_forward_impl.1} parent=55 // pred_check
        %p2816 = pneg %p204
      $region58: #{_forward_impl.1} parent=55 // pred_check_branch
        %2818 = sbr.rel (%p2816) target = $region60
      $region59: #{_forward_impl.1} parent=55 // pred_region
        %s2819 = smul.u32 4, %s19
        %p2820 = scmp.lt.s32.totalorder %s2819, 7
        %s2821 = scalar_select %p2820, %s2819, 7
        %s2822 = smul.addr %s2821, 2
        %s2823 = scalar_lea.vmem %s7, %s2822
      $region60: #{_forward_impl.1} parent=55 // pred_fallthru
        _
    $region56: #{_forward_impl.1} parent=5 // pred_fallthru
      _
  $region6: #{_forward_impl.1} parent=0 // loop_footer
    %s17 = sadd.s32 1, %s13
  $region7: #{_forward_impl.1} parent=0 // loop_footer_branch
    %12 = sbr.rel target = $region3
  $region8: #{_forward_impl.1} parent=0 // loop_exit
    _

</llo_original>
